<compile_context>
chip_gen: v7x
topology: tpu7x:2x2x1
jax: 0.10.0
libtpu: 0.0.40
codegen_flags: <defaults>
</compile_context>

<pallas_src>
from functools import partial

import jax
import jax.numpy as jnp
from jax.experimental import pallas as pl
from jax.experimental.pallas import tpu as pltpu


# --------------------------------------------------------------------------------------
# The single fused kernel
# --------------------------------------------------------------------------------------
def _fused_attn_win_kernel(x_ref, wc_ref, be_ref, rpb_ref, w2_ref, wpo_ref, bf_ref,
                           o_ref, *, wb, win, heads, head_dim, compute_dtype,
                           approx_recip):
    N = win * win
    C = heads * head_dim
    T = wb * N
    cd = compute_dtype

    # (1, wb*win, win, C) NHWC block -> (T, C) tokens; row r = w*N + i*win + j, i.e.
    # exactly the PyTorch window_partition order (partition/reverse live in the index_map).
    x2d = x_ref[0].reshape(T, C)
    xcd = x2d.astype(cd)

    # Fused linear prologue: qkv 1x1 conv -> +modulator -> q|k|v Linear
    #   == x @ w_comb + bias_eff[window position]           (wrapper pre-folded)
    qkv = jnp.dot(xcd, wc_ref[...], preferred_element_type=jnp.float32)       # (T, 3C)
    qkv = qkv.reshape(wb, N, 3 * C) + be_ref[...]         # broadcast over windows
    q3 = qkv[..., :C]
    k3 = qkv[..., C:2 * C]
    v3 = qkv[..., 2 * C:]

    # Head-major batch g = h*wb + w: one batched matmul over all (head, window) pairs.
    # (Concat in f32 — proven lowering — then cast the operands for the MXU.)
    qg = jnp.concatenate([q3[..., h * head_dim:(h + 1) * head_dim]
                          for h in range(heads)], axis=0).astype(cd)
    kg = jnp.concatenate([k3[..., h * head_dim:(h + 1) * head_dim]
                          for h in range(heads)], axis=0).astype(cd)
    vg = jnp.concatenate([v3[..., h * head_dim:(h + 1) * head_dim]
                          for h in range(heads)], axis=0).astype(cd)

    scores = jnp.einsum('gnd,gmd->gnm', qg, kg,
                        preferred_element_type=jnp.float32)                   # (h*wb, N, N)
    # Relative position bias: broadcast (heads, N, N) in-kernel — no wb-tiled copy.
    scores = scores.reshape(heads, wb, N, N) + rpb_ref[...][:, None]
    m = jnp.max(scores, axis=-1, keepdims=True)
    p = jnp.exp(scores - m)
    denom = jnp.sum(p, axis=-1, keepdims=True)
    p = p.reshape(heads * wb, N, N)
    denom = denom.reshape(heads * wb, N, 1)
    if approx_recip:
        p = p * pl.reciprocal(denom, approx=True)          # divide on the EUP
    else:
        p = p / denom
    p = p.astype(cd)

    ctx = jnp.einsum('gnm,gmd->gnd', p, vg,
                     preferred_element_type=jnp.float32)                      # (h*wb, N, hd)
    # Heads back onto the channel axis -> (wb, N, C) -> (T, C)
    ctx = jnp.concatenate([ctx[h * wb:(h + 1) * wb] for h in range(heads)], axis=-1)
    ctx2d = ctx.reshape(T, C).astype(cd)

    # Fused linear epilogue: proj -> +residual -> project_out, refolded as
    #   (ctx @ Wp + bp + x) @ Wo + bo == ctx @ (Wp Wo) + x @ Wo + (bp Wo + bo)
    out = (jnp.dot(ctx2d, w2_ref[...], preferred_element_type=jnp.float32)
           + jnp.dot(xcd, wpo_ref[...], preferred_element_type=jnp.float32)
           + bf_ref[...])

    o_ref[0] = out.reshape(wb * win, win, C).astype(o_ref.dtype)


# --------------------------------------------------------------------------------------
# Block / VMEM sizing helpers
# --------------------------------------------------------------------------------------
def _pick_wb(batch, num_win_h, num_win_w, N, C, heads):
    """Windows per grid step: largest divisor of num_win_h whose f32 working set
    (qkv slab + scores + ctx) stays <= ~512 KiB AND that still leaves >= 2 grid
    steps (so both v7x TensorCores get work)."""
    best = 1
    for cand in range(1, num_win_h + 1):
        if num_win_h % cand:
            continue
        T = cand * N
        work = (T * 3 * C + 2 * cand * heads * N * N + 2 * T * C) * 4
        steps = batch * (num_win_h // cand) * num_win_w
        if work <= 512 * 1024 and (steps >= 2 or cand == 1):
            best = cand
    return best


def _vmem_limit_bytes(wb, win, C, N, heads, io_itemsize, w_itemsize):
    T = wb * N
    blk = wb * win * win * C * io_itemsize
    blocks = 4 * blk                                            # x + out, double-buffered
    blocks += 2 * ((3 * C * C + 2 * C * C + C) * w_itemsize     # weight blocks
                   + (N * 3 * C + heads * N * N) * 4)           # f32 bias / rpb blocks
    work = (3 * T * 3 * C + 3 * T * C + 3 * wb * heads * N * N + 2 * T * C) * 4
    est = 2 * (blocks + work)                                   # 2x head-room
    return int(min(max(est, 16 * 2 ** 20), 64 * 2 ** 20))       # valid on v7x (64 MiB)


def fused_window_attention(x_nhwc, w_comb, bias_eff, rpb, w2, wpo, b_fin,
                           num_heads, head_dim, win, *, compute_dtype,
                           approx_recip=True, out_dtype=None):
    B, H, W, C = x_nhwc.shape
    N = win * win
    out_dtype = out_dtype if out_dtype is not None else x_nhwc.dtype
    wb = _pick_wb(B, H // win, W // win, N, C, num_heads)
    grid = (B, H // (wb * win), W // win)
    vmem = _vmem_limit_bytes(wb, win, C, N, num_heads,
                             jnp.dtype(x_nhwc.dtype).itemsize,
                             jnp.dtype(compute_dtype).itemsize)
    kern = partial(_fused_attn_win_kernel, wb=wb, win=win, heads=num_heads,
                   head_dim=head_dim, compute_dtype=compute_dtype,
                   approx_recip=approx_recip)
    return pl.pallas_call(
        kern,
        out_shape=jax.ShapeDtypeStruct((B, H, W, C), out_dtype),
        grid_spec=pltpu.PrefetchScalarGridSpec(
            num_scalar_prefetch=0,
            grid=grid,
            in_specs=[
                pl.BlockSpec((1, wb * win, win, C), lambda b, i, j: (b, i, j, 0)),
                pl.BlockSpec((C, 3 * C), lambda b, i, j: (0, 0)),
                pl.BlockSpec((N, 3 * C), lambda b, i, j: (0, 0)),
                pl.BlockSpec((num_heads, N, N), lambda b, i, j: (0, 0, 0)),
                pl.BlockSpec((C, C), lambda b, i, j: (0, 0)),
                pl.BlockSpec((C, C), lambda b, i, j: (0, 0)),
                pl.BlockSpec((1, C), lambda b, i, j: (0, 0)),
            ],
            out_specs=pl.BlockSpec((1, wb * win, win, C), lambda b, i, j: (b, i, j, 0)),
        ),
        compiler_params=pltpu.CompilerParams(
            dimension_semantics=("parallel", "parallel", "parallel"),
            vmem_limit_bytes=vmem),
    )(x_nhwc,
      w_comb.astype(compute_dtype),
      bias_eff.astype(jnp.float32),
      rpb.astype(jnp.float32),
      w2.astype(compute_dtype),
      wpo.astype(compute_dtype),
      b_fin.reshape(1, C).astype(jnp.float32))


# --------------------------------------------------------------------------------------
# Public forward: NCHW in / NCHW out, matching the PyTorch module exactly
# --------------------------------------------------------------------------------------
def relative_position_bias(table, win, num_heads):
    coords = jnp.stack(jnp.meshgrid(jnp.arange(win), jnp.arange(win), indexing="ij"))
    coords_flatten = coords.reshape(2, -1)                     # (2, N)
    rel = coords_flatten[:, :, None] - coords_flatten[:, None, :]
    rel = rel.transpose(1, 2, 0)                               # (N, N, 2)
    rel = rel.at[:, :, 0].add(win - 1)
    rel = rel.at[:, :, 1].add(win - 1)
    rel = rel.at[:, :, 0].multiply(2 * win - 1)
    index = rel.sum(-1)                                        # (N, N)
    N = win * win
    bias = table[index.reshape(-1)].reshape(N, N, num_heads)
    return bias.transpose(2, 0, 1)                             # (heads, N, N)


def attention_win_forward(x, params, win_size, num_heads, compute_dtype=None,
                          approx_recip=True):
    """x: NCHW (b, c, h, w) -> NCHW output.  compute_dtype=jnp.bfloat16 enables the
    bf16 MXU path (v6e/v7x); f32 accumulation/softmax and f32 block I/O are kept."""
    b, c, h, w = x.shape
    assert h % win_size == 0 and w % win_size == 0 and c % num_heads == 0
    head_dim = c // num_heads
    scale = head_dim ** (-0.5)
    f32 = jnp.float32
    cd = compute_dtype if compute_dtype is not None else x.dtype

    # Pre-fold all linear stages once (tiny weight-sized matmuls, done in f32).
    w_fused = jnp.concatenate([params["wq"].astype(f32) * scale,
                               params["wkv"].astype(f32)], axis=1)            # (C, 3C)
    b_fused = jnp.concatenate([params["bq"].astype(f32) * scale,
                               params["bkv"].astype(f32)], axis=0)            # (3C,)
    w_comb = params["qkv_w"].astype(f32) @ w_fused                            # (C, 3C)
    bias_eff = ((params["qkv_b"].astype(f32)[None, :]
                 + params["modulator"].astype(f32)) @ w_fused
                + b_fused[None, :])                                           # (N, 3C)
    w2 = params["wproj"].astype(f32) @ params["po_w"].astype(f32)             # (C, C)
    b_fin = (params["bproj"].astype(f32) @ params["po_w"].astype(f32)
             + params["po_b"].astype(f32))                                    # (C,)
    rpb = relative_position_bias(params["rpb_table"].astype(f32), win_size, num_heads)

    x_nhwc = jnp.transpose(x, (0, 2, 3, 1))
    out_nhwc = fused_window_attention(
        x_nhwc, w_comb, bias_eff, rpb, w2, params["po_w"].astype(f32), b_fin,
        num_heads, head_dim, win_size,
        compute_dtype=cd, approx_recip=approx_recip, out_dtype=x.dtype)
    return jnp.transpose(out_nhwc, (0, 3, 1, 2))                              # NCHW


# --------------------------------------------------------------------------------------
# Pure-JAX reference (mirrors the PyTorch ops, unfused) for the sanity check
# --------------------------------------------------------------------------------------
def window_partition(x, win):
    B, H, W, C = x.shape
    x = x.reshape(B, H // win, win, W // win, win, C)
    return x.transpose(0, 1, 3, 2, 4, 5).reshape(-1, win, win, C)


def window_reverse(windows, win, H, W):
    B = windows.shape[0] // ((H * W) // (win * win))
    x = windows.reshape(B, H // win, W // win, win, win, -1)
    return x.transpose(0, 1, 3, 2, 4, 5).reshape(B, H, W, -1)


def reference_forward(x, params, win_size, num_heads):
    b, c, h, w = x.shape
    sc = jnp.transpose(x, (0, 2, 3, 1))
    xq = jnp.transpose(x, (0, 2, 3, 1)).reshape(-1, c) @ params["qkv_w"] + params["qkv_b"]
    xq = xq.reshape(b, h, w, c)
    xw = window_partition(xq, win_size).reshape(-1, win_size * win_size, c)
    xw = xw + params["modulator"][None]
    head_dim = c // num_heads
    scale = head_dim ** (-0.5)
    q = xw @ params["wq"] + params["bq"]
    kv = xw @ params["wkv"] + params["bkv"]
    k, v = kv[..., :c], kv[..., c:]
    B_, N, _ = q.shape
    qh = q.reshape(B_, N, num_heads, head_dim).transpose(0, 2, 1, 3)
    kh = k.reshape(B_, N, num_heads, head_dim).transpose(0, 2, 1, 3)
    vh = v.reshape(B_, N, num_heads, head_dim).transpose(0, 2, 1, 3)
    attn = (qh * scale) @ jnp.swapaxes(kh, -2, -1)
    rpb = relative_position_bias(params["rpb_table"], win_size, num_heads)
    attn = jax.nn.softmax(attn + rpb[None], axis=-1)
    o = (attn @ vh).transpose(0, 2, 1, 3).reshape(B_, N, c)
    o = o @ params["wproj"] + params["bproj"]
    o = window_reverse(o.reshape(-1, win_size, win_size, c), win_size, h, w)
    y = o + sc
    out = y.reshape(-1, c) @ params["po_w"] + params["po_b"]
    return jnp.transpose(out.reshape(b, h, w, c), (0, 3, 1, 2))


# --------------------------------------------------------------------------------------
if __name__ == "__main__":
    # small deterministic config
    b, c, h, w = 2, 32, 16, 16
    num_heads = 4
    win_size = 8
    N = win_size * win_size

    key = jax.random.PRNGKey(0)
    ks = jax.random.split(key, 16)
    f32 = jnp.float32
    params = {
        "qkv_w":  0.05 * jax.random.normal(ks[0], (c, c), f32),
        "qkv_b":  0.05 * jax.random.normal(ks[1], (c,), f32),
        "po_w":   0.05 * jax.random.normal(ks[2], (c, c), f32),
        "po_b":   0.05 * jax.random.normal(ks[3], (c,), f32),
        "modulator": 0.05 * jax.random.normal(ks[4], (N, c), f32),
        "wq":     0.05 * jax.random.normal(ks[5], (c, c), f32),
        "bq":     0.05 * jax.random.normal(ks[6], (c,), f32),
        "wkv":    0.05 * jax.random.normal(ks[7], (c, 2 * c), f32),
        "bkv":    0.05 * jax.random.normal(ks[8], (2 * c,), f32),
        "wproj":  0.05 * jax.random.normal(ks[9], (c, c), f32),
        "bproj":  0.05 * jax.random.normal(ks[10], (c,), f32),
        "rpb_table": 0.02 * jax.random.normal(
            ks[11], ((2 * win_size - 1) * (2 * win_size - 1), num_heads), f32),
    }

    x = jax.random.normal(ks[12], (b, c, h, w), f32)

    # f32 path: strict check against the unfused pure-JAX reference.
    out = jax.block_until_ready(attention_win_forward(x, params, win_size, num_heads))
    ref = jax.block_until_ready(reference_forward(x, params, win_size, num_heads))
    assert out.shape == (b, c, h, w)
    err = float(jnp.abs(out - ref).max())
    assert jnp.allclose(out, ref, rtol=1e-3, atol=1e-3), err

    # bf16 MXU path (v6e/v7x feedback): same kernel, operands cast inside; loose check.
    out_bf16 = jax.block_until_ready(
        attention_win_forward(x, params, win_size, num_heads,
                              compute_dtype=jnp.bfloat16))
    err_bf16 = float(jnp.abs(out_bf16 - ref).max())
    assert jnp.allclose(out_bf16, ref, rtol=5e-2, atol=5e-2), err_bf16

    print("KERNEL_OK")
</pallas_src>

<mosaic_0001>
module attributes {stable_mosaic.version = 11 : i64} {
  func.func @_fused_attn_win_kernel(%arg0: i32, %arg1: i32, %arg2: i32, %arg3: memref<1x16x8x32xf32, #tpu.memory_space<vmem>>, %arg4: memref<32x96xf32, #tpu.memory_space<vmem>>, %arg5: memref<64x96xf32, #tpu.memory_space<vmem>>, %arg6: memref<4x64x64xf32, #tpu.memory_space<vmem>>, %arg7: memref<32x32xf32, #tpu.memory_space<vmem>>, %arg8: memref<32x32xf32, #tpu.memory_space<vmem>>, %arg9: memref<1x32xf32, #tpu.memory_space<vmem>>, %arg10: memref<1x16x8x32xf32, #tpu.memory_space<vmem>>) attributes {dimension_semantics = [#tpu.dimension_semantics<parallel>, #tpu.dimension_semantics<parallel>, #tpu.dimension_semantics<parallel>], iteration_bounds = array<i64: 2, 1, 2>, scalar_prefetch = 0 : i64, scratch_operands = 0 : i64, tpu.core_type = #tpu.core_type<tc>, window_params = [{transform_indices = @transform_0, window_bounds = array<i64: 1, 16, 8, 32>}, {pipeline_mode = #tpu.pipeline_mode<synchronous>, transform_indices = @transform_1, window_bounds = array<i64: 32, 96>}, {pipeline_mode = #tpu.pipeline_mode<synchronous>, transform_indices = @transform_2, window_bounds = array<i64: 64, 96>}, {pipeline_mode = #tpu.pipeline_mode<synchronous>, transform_indices = @transform_3, window_bounds = array<i64: 4, 64, 64>}, {pipeline_mode = #tpu.pipeline_mode<synchronous>, transform_indices = @transform_4, window_bounds = array<i64: 32, 32>}, {pipeline_mode = #tpu.pipeline_mode<synchronous>, transform_indices = @transform_5, window_bounds = array<i64: 32, 32>}, {pipeline_mode = #tpu.pipeline_mode<synchronous>, transform_indices = @transform_6, window_bounds = array<i64: 1, 32>}, {transform_indices = @transform_7, window_bounds = array<i64: 1, 16, 8, 32>}]} {
    %c0 = arith.constant 0 : index
    %c0_0 = arith.constant 0 : index
    %c0_1 = arith.constant 0 : index
    %c0_2 = arith.constant 0 : index
    %0 = vector.load %arg3[%c0, %c0_0, %c0_1, %c0_2] : memref<1x16x8x32xf32, #tpu.memory_space<vmem>>, vector<1x16x8x32xf32>
    %1 = vector.shape_cast %0 : vector<1x16x8x32xf32> to vector<16x8x32xf32>
    %2 = vector.shape_cast %1 : vector<16x8x32xf32> to vector<128x32xf32>
    %c0_3 = arith.constant 0 : index
    %c0_4 = arith.constant 0 : index
    %3 = vector.load %arg4[%c0_3, %c0_4] : memref<32x96xf32, #tpu.memory_space<vmem>>, vector<32x96xf32>
    %cst = arith.constant dense<0.000000e+00> : vector<128x96xf32>
    %4 = tpu.matmul %2, %3, %cst {dimension_numbers = #tpu.dot_dimension_numbers<[1], [0], [0], [1], [0, 0, 1, 1], [], []>} : vector<128x32xf32>, vector<32x96xf32>, vector<128x96xf32> -> vector<128x96xf32>
    %5 = vector.shape_cast %4 : vector<128x96xf32> to vector<2x64x96xf32>
    %c0_5 = arith.constant 0 : index
    %c0_6 = arith.constant 0 : index
    %6 = vector.load %arg5[%c0_5, %c0_6] : memref<64x96xf32, #tpu.memory_space<vmem>>, vector<64x96xf32>
    %7 = vector.shape_cast %6 : vector<64x96xf32> to vector<1x64x96xf32>
    %8 = vector.broadcast %7 : vector<1x64x96xf32> to vector<2x64x96xf32>
    %9 = arith.addf %5, %8 : vector<2x64x96xf32>
    %10 = vector.extract_strided_slice %9 {offsets = [0, 0, 0], sizes = [2, 64, 32], strides = [1, 1, 1]} : vector<2x64x96xf32> to vector<2x64x32xf32>
    %11 = vector.extract_strided_slice %9 {offsets = [0, 0, 32], sizes = [2, 64, 32], strides = [1, 1, 1]} : vector<2x64x96xf32> to vector<2x64x32xf32>
    %12 = vector.extract_strided_slice %9 {offsets = [0, 0, 64], sizes = [2, 64, 32], strides = [1, 1, 1]} : vector<2x64x96xf32> to vector<2x64x32xf32>
    %13 = vector.extract_strided_slice %10 {offsets = [0, 0, 0], sizes = [2, 64, 8], strides = [1, 1, 1]} : vector<2x64x32xf32> to vector<2x64x8xf32>
    %14 = vector.extract_strided_slice %10 {offsets = [0, 0, 8], sizes = [2, 64, 8], strides = [1, 1, 1]} : vector<2x64x32xf32> to vector<2x64x8xf32>
    %15 = vector.extract_strided_slice %10 {offsets = [0, 0, 16], sizes = [2, 64, 8], strides = [1, 1, 1]} : vector<2x64x32xf32> to vector<2x64x8xf32>
    %16 = vector.extract_strided_slice %10 {offsets = [0, 0, 24], sizes = [2, 64, 8], strides = [1, 1, 1]} : vector<2x64x32xf32> to vector<2x64x8xf32>
    %17 = tpu.concatenate %13, %14, %15, %16 in 0 : vector<2x64x8xf32>, vector<2x64x8xf32>, vector<2x64x8xf32>, vector<2x64x8xf32> -> vector<8x64x8xf32>
    %18 = vector.extract_strided_slice %11 {offsets = [0, 0, 0], sizes = [2, 64, 8], strides = [1, 1, 1]} : vector<2x64x32xf32> to vector<2x64x8xf32>
    %19 = vector.extract_strided_slice %11 {offsets = [0, 0, 8], sizes = [2, 64, 8], strides = [1, 1, 1]} : vector<2x64x32xf32> to vector<2x64x8xf32>
    %20 = vector.extract_strided_slice %11 {offsets = [0, 0, 16], sizes = [2, 64, 8], strides = [1, 1, 1]} : vector<2x64x32xf32> to vector<2x64x8xf32>
    %21 = vector.extract_strided_slice %11 {offsets = [0, 0, 24], sizes = [2, 64, 8], strides = [1, 1, 1]} : vector<2x64x32xf32> to vector<2x64x8xf32>
    %22 = tpu.concatenate %18, %19, %20, %21 in 0 : vector<2x64x8xf32>, vector<2x64x8xf32>, vector<2x64x8xf32>, vector<2x64x8xf32> -> vector<8x64x8xf32>
    %23 = vector.extract_strided_slice %12 {offsets = [0, 0, 0], sizes = [2, 64, 8], strides = [1, 1, 1]} : vector<2x64x32xf32> to vector<2x64x8xf32>
    %24 = vector.extract_strided_slice %12 {offsets = [0, 0, 8], sizes = [2, 64, 8], strides = [1, 1, 1]} : vector<2x64x32xf32> to vector<2x64x8xf32>
    %25 = vector.extract_strided_slice %12 {offsets = [0, 0, 16], sizes = [2, 64, 8], strides = [1, 1, 1]} : vector<2x64x32xf32> to vector<2x64x8xf32>
    %26 = vector.extract_strided_slice %12 {offsets = [0, 0, 24], sizes = [2, 64, 8], strides = [1, 1, 1]} : vector<2x64x32xf32> to vector<2x64x8xf32>
    %27 = tpu.concatenate %23, %24, %25, %26 in 0 : vector<2x64x8xf32>, vector<2x64x8xf32>, vector<2x64x8xf32>, vector<2x64x8xf32> -> vector<8x64x8xf32>
    "tpu.trace_start"() <{level = 10 : i32, message = "gnd,gmd->gnm"}> : () -> ()
    %cst_7 = arith.constant dense<0.000000e+00> : vector<8x64x64xf32>
    %28 = tpu.matmul %17, %22, %cst_7 {dimension_numbers = #tpu.dot_dimension_numbers<[2], [2], [1], [1], [0, 0, 0, 1, 1, 1], [0], [0]>} : vector<8x64x8xf32>, vector<8x64x8xf32>, vector<8x64x64xf32> -> vector<8x64x64xf32>
    "tpu.trace_stop"() : () -> ()
    %29 = vector.shape_cast %28 : vector<8x64x64xf32> to vector<4x2x64x64xf32>
    %c0_8 = arith.constant 0 : index
    %c0_9 = arith.constant 0 : index
    %c0_10 = arith.constant 0 : index
    %30 = vector.load %arg6[%c0_8, %c0_9, %c0_10] : memref<4x64x64xf32, #tpu.memory_space<vmem>>, vector<4x64x64xf32>
    %31 = vector.shape_cast %30 : vector<4x64x64xf32> to vector<4x1x64x64xf32>
    %32 = vector.broadcast %31 : vector<4x1x64x64xf32> to vector<4x2x64x64xf32>
    %33 = arith.addf %29, %32 : vector<4x2x64x64xf32>
    %cst_11 = arith.constant dense<0xFF800000> : vector<4x2x64xf32>
    %34 = vector.multi_reduction <maximumf>, %33, %cst_11 [3] : vector<4x2x64x64xf32> to vector<4x2x64xf32>
    %35 = vector.shape_cast %34 : vector<4x2x64xf32> to vector<4x2x64x1xf32>
    %36 = vector.broadcast %35 : vector<4x2x64x1xf32> to vector<4x2x64x64xf32>
    %37 = arith.subf %33, %36 : vector<4x2x64x64xf32>
    %38 = math.exp %37 : vector<4x2x64x64xf32>
    %cst_12 = arith.constant dense<0.000000e+00> : vector<4x2x64xf32>
    %39 = vector.multi_reduction <add>, %38, %cst_12 [3] : vector<4x2x64x64xf32> to vector<4x2x64xf32>
    %40 = vector.shape_cast %39 : vector<4x2x64xf32> to vector<4x2x64x1xf32>
    %41 = vector.shape_cast %38 : vector<4x2x64x64xf32> to vector<8x64x64xf32>
    %42 = vector.shape_cast %40 : vector<4x2x64x1xf32> to vector<8x64x1xf32>
    %43 = tpu.reciprocal %42 {approx = true} : vector<8x64x1xf32> -> vector<8x64x1xf32>
    %44 = vector.broadcast %43 : vector<8x64x1xf32> to vector<8x64x64xf32>
    %45 = arith.mulf %41, %44 : vector<8x64x64xf32>
    "tpu.trace_start"() <{level = 10 : i32, message = "gnm,gmd->gnd"}> : () -> ()
    %cst_13 = arith.constant dense<0.000000e+00> : vector<8x64x8xf32>
    %46 = tpu.matmul %45, %27, %cst_13 {dimension_numbers = #tpu.dot_dimension_numbers<[2], [1], [1], [2], [0, 0, 0, 1, 1, 2], [0], [0]>} : vector<8x64x64xf32>, vector<8x64x8xf32>, vector<8x64x8xf32> -> vector<8x64x8xf32>
    "tpu.trace_stop"() : () -> ()
    %47 = vector.extract_strided_slice %46 {offsets = [0, 0, 0], sizes = [2, 64, 8], strides = [1, 1, 1]} : vector<8x64x8xf32> to vector<2x64x8xf32>
    %48 = vector.extract_strided_slice %46 {offsets = [2, 0, 0], sizes = [2, 64, 8], strides = [1, 1, 1]} : vector<8x64x8xf32> to vector<2x64x8xf32>
    %49 = vector.extract_strided_slice %46 {offsets = [4, 0, 0], sizes = [2, 64, 8], strides = [1, 1, 1]} : vector<8x64x8xf32> to vector<2x64x8xf32>
    %50 = vector.extract_strided_slice %46 {offsets = [6, 0, 0], sizes = [2, 64, 8], strides = [1, 1, 1]} : vector<8x64x8xf32> to vector<2x64x8xf32>
    %51 = tpu.concatenate %47, %48, %49, %50 in 2 : vector<2x64x8xf32>, vector<2x64x8xf32>, vector<2x64x8xf32>, vector<2x64x8xf32> -> vector<2x64x32xf32>
    %52 = vector.shape_cast %51 : vector<2x64x32xf32> to vector<128x32xf32>
    %c0_14 = arith.constant 0 : index
    %c0_15 = arith.constant 0 : index
    %53 = vector.load %arg7[%c0_14, %c0_15] : memref<32x32xf32, #tpu.memory_space<vmem>>, vector<32x32xf32>
    %cst_16 = arith.constant dense<0.000000e+00> : vector<128x32xf32>
    %54 = tpu.matmul %52, %53, %cst_16 {dimension_numbers = #tpu.dot_dimension_numbers<[1], [0], [0], [1], [0, 0, 1, 1], [], []>} : vector<128x32xf32>, vector<32x32xf32>, vector<128x32xf32> -> vector<128x32xf32>
    %c0_17 = arith.constant 0 : index
    %c0_18 = arith.constant 0 : index
    %55 = vector.load %arg8[%c0_17, %c0_18] : memref<32x32xf32, #tpu.memory_space<vmem>>, vector<32x32xf32>
    %cst_19 = arith.constant dense<0.000000e+00> : vector<128x32xf32>
    %56 = tpu.matmul %2, %55, %cst_19 {dimension_numbers = #tpu.dot_dimension_numbers<[1], [0], [0], [1], [0, 0, 1, 1], [], []>} : vector<128x32xf32>, vector<32x32xf32>, vector<128x32xf32> -> vector<128x32xf32>
    %57 = arith.addf %54, %56 : vector<128x32xf32>
    %c0_20 = arith.constant 0 : index
    %c0_21 = arith.constant 0 : index
    %58 = vector.load %arg9[%c0_20, %c0_21] : memref<1x32xf32, #tpu.memory_space<vmem>>, vector<1x32xf32>
    %59 = vector.broadcast %58 : vector<1x32xf32> to vector<128x32xf32>
    %60 = arith.addf %57, %59 : vector<128x32xf32>
    %61 = vector.shape_cast %60 : vector<128x32xf32> to vector<16x8x32xf32>
    %c0_22 = arith.constant 0 : index
    %c0_23 = arith.constant 0 : index
    %c0_24 = arith.constant 0 : index
    %c0_25 = arith.constant 0 : index
    %62 = vector.load %arg10[%c0_22, %c0_23, %c0_24, %c0_25] : memref<1x16x8x32xf32, #tpu.memory_space<vmem>>, vector<1x16x8x32xf32>
    %63 = vector.shape_cast %62 : vector<1x16x8x32xf32> to vector<16x8x32xf32>
    %64 = vector.shape_cast %61 : vector<16x8x32xf32> to vector<1x16x8x32xf32>
    tpu.vector_store %arg10[%c0_22, %c0_23, %c0_24, %c0_25], %64 {strides = array<i32>} : memref<1x16x8x32xf32, #tpu.memory_space<vmem>>, vector<1x16x8x32xf32>,
    return
  }
  func.func @transform_0(%arg0: i32, %arg1: i32, %arg2: i32) -> (i32, i32, i32, i32) {
    %c0_i32 = arith.constant 0 : i32
    %c0_i32_0 = arith.constant 0 : i32
    return %arg0, %arg1, %arg2, %c0_i32 : i32, i32, i32, i32
  }
  func.func @transform_1(%arg0: i32, %arg1: i32, %arg2: i32) -> (i32, i32) {
    %c0_i32 = arith.constant 0 : i32
    %c0_i32_0 = arith.constant 0 : i32
    %c0_i32_1 = arith.constant 0 : i32
    return %c0_i32, %c0_i32_0 : i32, i32
  }
  func.func @transform_2(%arg0: i32, %arg1: i32, %arg2: i32) -> (i32, i32) {
    %c0_i32 = arith.constant 0 : i32
    %c0_i32_0 = arith.constant 0 : i32
    %c0_i32_1 = arith.constant 0 : i32
    return %c0_i32, %c0_i32_0 : i32, i32
  }
  func.func @transform_3(%arg0: i32, %arg1: i32, %arg2: i32) -> (i32, i32, i32) {
    %c0_i32 = arith.constant 0 : i32
    %c0_i32_0 = arith.constant 0 : i32
    %c0_i32_1 = arith.constant 0 : i32
    %c0_i32_2 = arith.constant 0 : i32
    return %c0_i32, %c0_i32_0, %c0_i32_1 : i32, i32, i32
  }
  func.func @transform_4(%arg0: i32, %arg1: i32, %arg2: i32) -> (i32, i32) {
    %c0_i32 = arith.constant 0 : i32
    %c0_i32_0 = arith.constant 0 : i32
    %c0_i32_1 = arith.constant 0 : i32
    return %c0_i32, %c0_i32_0 : i32, i32
  }
  func.func @transform_5(%arg0: i32, %arg1: i32, %arg2: i32) -> (i32, i32) {
    %c0_i32 = arith.constant 0 : i32
    %c0_i32_0 = arith.constant 0 : i32
    %c0_i32_1 = arith.constant 0 : i32
    return %c0_i32, %c0_i32_0 : i32, i32
  }
  func.func @transform_6(%arg0: i32, %arg1: i32, %arg2: i32) -> (i32, i32) {
    %c0_i32 = arith.constant 0 : i32
    %c0_i32_0 = arith.constant 0 : i32
    %c0_i32_1 = arith.constant 0 : i32
    return %c0_i32, %c0_i32_0 : i32, i32
  }
  func.func @transform_7(%arg0: i32, %arg1: i32, %arg2: i32) -> (i32, i32, i32, i32) {
    %c0_i32 = arith.constant 0 : i32
    %c0_i32_0 = arith.constant 0 : i32
    return %arg0, %arg1, %arg2, %c0_i32 : i32, i32, i32, i32
  }
}

</mosaic_0001>

<llo_original>
// kernel: tpu_custom_call.1
$region0: #{tpu_custom_call.1}
  #allocation0 [shape = 'u32[]', space=smem, size = 0x4, offset = 0x4, fixed_abs, tag = 'smem constant byte address 0x4 - core index']
  #allocation1 [shape = 'u32[144,128]{1,0:T(1,128)}', space=vmem, size = 0x12000, scoped, tag = 'internal scratch']
  %s0 = inlined_call_operand.hbm [shape: f32[2,16,16,32], index: 0, kind: input, shape index: {}]
  %s1 = inlined_call_operand.hbm [shape: f32[32,96], index: 1, kind: input, shape index: {}]
  %s2 = inlined_call_operand.hbm [shape: f32[64,96], index: 2, kind: input, shape index: {}]
  %s3 = inlined_call_operand.hbm [shape: f32[4,64,64], index: 3, kind: input, shape index: {}]
  %s4 = inlined_call_operand.hbm [shape: f32[32,32], index: 4, kind: input, shape index: {}]
  %s5 = inlined_call_operand.hbm [shape: f32[32,32], index: 5, kind: input, shape index: {}]
  %s6 = inlined_call_operand.vmem [shape: f32[1,32], index: 6, kind: input, shape index: {}]
  %s7 = inlined_call_operand.hbm [shape: f32[2,16,16,32], index: 7, kind: output, shape index: {}]
  %s8 = sld [smem:[#allocation0]]
  $region85: #{tpu_custom_call.1} parent=0
    _
  %s10 = ssub.s32 1, %s8
  %s11 = scalar_select 0, %s10, %s8
  $region1: #{tpu_custom_call.1} parent=0
    #allocation2 [shape = 'u8[131072]{0}', space=vmem, size = 0x20000, scoped, tag = 'input window, operand 0']
    #allocation3 [shape = 's32[2]{0}', space=sflag, size = 0x8, scoped, tag = 'scoped memory for tpu_custom_call.1']
    #allocation4 [shape = 's32[2]{0}', space=sflag, size = 0x8, scoped, tag = 'scoped memory for tpu_custom_call.1']
    #allocation5 [shape = 'u8[16384]{0}', space=vmem, size = 0x4000, scoped, tag = 'input window, operand 1, single buffered']
    #allocation6 [shape = 's32[1]{0}', space=sflag, size = 0x4, scoped, tag = 'scoped memory for tpu_custom_call.1']
    #allocation7 [shape = 'u8[32768]{0}', space=vmem, size = 0x8000, scoped, tag = 'input window, operand 2, single buffered']
    #allocation8 [shape = 'u8[131072]{0}', space=vmem, size = 0x20000, scoped, tag = 'input window, operand 3, single buffered']
    #allocation9 [shape = 's32[1]{0}', space=sflag, size = 0x4, scoped, tag = 'scoped memory for tpu_custom_call.1']
    #allocation10 [shape = 'u8[16384]{0}', space=vmem, size = 0x4000, scoped, tag = 'input window, operand 4, single buffered']
    #allocation11 [shape = 'u8[16384]{0}', space=vmem, size = 0x4000, scoped, tag = 'input window, operand 5, single buffered']
    #allocation12 [shape = 's32[1]{0}', space=sflag, size = 0x4, scoped, tag = 'scoped memory for tpu_custom_call.1']
    #allocation13 [shape = 'u8[131072]{0}', space=vmem, size = 0x20000, scoped, tag = 'output window, operand 0']
    %12 = vsyncpa [#allocation3], 0
    %s13 = scalar_lea.sflag [#allocation3], 1
    %14 = vsyncpa %s13, 0
    %15 = vsyncpa [#allocation6], 0
    %16 = vsyncpa [#allocation9], 0
    %17 = vsyncpa [#allocation12], 0
    %18 = vsyncpa [#allocation4], 0
    %s19 = scalar_lea.sflag [#allocation4], 1
    %20 = vsyncpa %s19, 0
    loop: start=0, step=1, limit=6
    $region2: #{tpu_custom_call.1} parent=1 // loop_pre_header
      _
    $region3: #{tpu_custom_call.1} parent=1 // loop_header
      %s22 = sphi 0, %s26
      %p23 = scmp.ge.s32.totalorder %s22, 6
      %s29 = sphi 0, %s48
      %s30 = sphi 0, %s44
      %s31 = sphi 0, %s40
      %s32 = sphi 0, %s29
      %s33 = sphi 0, %s30
      %s34 = sphi 0, %s31
      %s35 = sphi 0, %s32
      %s36 = sphi 0, %s33
      %s37 = sphi 0, %s34
      %s55 = sphi 0, %s57
      %s58 = sphi 0, %s55
      %s59 = sphi 0, %s58
      %s75 = sphi 0, %s59
      %s79 = sphi 0, %s79
      %s81 = sphi 0, %s79
      %s82 = sphi 0, %s81
      %s96 = sphi 0, %s82
      %s100 = sphi 0, %s100
      %s102 = sphi 0, %s100
      %s103 = sphi 0, %s102
      %s117 = sphi 0, %s103
      %s121 = sphi 0, %s121
      %s123 = sphi 0, %s121
      %s124 = sphi 0, %s123
      %s138 = sphi 0, %s124
      %s142 = sphi 0, %s142
      %s144 = sphi 0, %s142
      %s145 = sphi 0, %s144
      %s159 = sphi 0, %s145
      %s163 = sphi 0, %s163
      %s165 = sphi 0, %s163
      %s166 = sphi 0, %s165
      %s180 = sphi 0, %s166
      %s184 = sphi 0, %s184
      %s186 = sphi 0, %s184
      %s187 = sphi 0, %s186
      %s201 = sphi 0, %s187
      %s211 = sphi 0, %s213
      %s214 = sphi 0, %s211
      %s215 = sphi 0, %s214
      %s231 = sphi 0, %s215
    $region4: #{tpu_custom_call.1} parent=1 // loop_header_branch
      %25 = sbr.rel (%p23) target = $region8
    $region5: #{tpu_custom_call.1} parent=1 // loop_body
      %s27 = ssub.s32 %s22, 1
      %s28 = ssub.s32 %s22, 2
      %s38 = sadd.s32 1, %s31
      %p39 = scmp.ge.s32.totalorder %s38, 2
      %s40 = scalar_select %p39, 0, %s38
      %s41 = sadd.s32 1, %s30
      %s42 = scalar_select %p39, %s41, %s30
      %p43 = scmp.ge.s32.totalorder %s42, 1
      %s44 = scalar_select %p43, 0, %s42
      %s45 = sadd.s32 1, %s29
      %s46 = scalar_select %p43, %s45, %s29
      %p47 = scmp.ge.s32.totalorder %s46, 2
      %s48 = scalar_select %p47, 0, %s46
      %s49 = ssub.s32 %s29, %s48
      %s50 = ssub.s32 %s30, %s44
      %s51 = sor.u32 %s49, %s50
      %s52 = ssub.s32 %s31, %s40
      %s53 = sor.u32 %s51, %s52
      %p54 = scmp.eq.s32.totalorder %s53, 0
      %s56 = sadd.s32 %s55, 1
      %s57 = scalar_select %p54, %s55, %s56
      %p60 = pneg %p54
      %p61 = scmp.eq.s32.totalorder %s22, 3
      %p62 = por %p60, %p61
      %p63 = scmp.ne.s32.totalorder %s55, %s58
      %p64 = scmp.eq.s32.totalorder %s22, 0
      %p65 = por %p63, %p64
      %p66 = scmp.ne.s32.totalorder %s55, %s58
      %p67 = scmp.eq.s32.totalorder %s27, 3
      %p68 = por %p66, %p67
      %p69 = scmp.ne.s32.totalorder %s58, %s59
      %p70 = scmp.eq.s32.totalorder %s27, 0
      %p71 = por %p69, %p70
      %p72 = scmp.ne.s32.totalorder %s58, %s59
      %p73 = scmp.eq.s32.totalorder %s28, 3
      %p74 = por %p72, %p73
      %p76 = scmp.ne.s32.totalorder %s59, %s75
      %p77 = scmp.eq.s32.totalorder %s28, 0
      %p78 = por %p76, %p77
      %s80 = sadd.s32 %s79, 1
      %p83 = scmp.eq.s32.totalorder %s22, 3
      %p84 = scmp.ne.s32.totalorder %s79, %s81
      %p85 = scmp.eq.s32.totalorder %s22, 0
      %p86 = por %p84, %p85
      %p87 = scmp.ne.s32.totalorder %s79, %s81
      %p88 = scmp.eq.s32.totalorder %s27, 3
      %p89 = por %p87, %p88
      %p90 = scmp.ne.s32.totalorder %s81, %s82
      %p91 = scmp.eq.s32.totalorder %s27, 0
      %p92 = por %p90, %p91
      %p93 = scmp.ne.s32.totalorder %s81, %s82
      %p94 = scmp.eq.s32.totalorder %s28, 3
      %p95 = por %p93, %p94
      %p97 = scmp.ne.s32.totalorder %s82, %s96
      %p98 = scmp.eq.s32.totalorder %s28, 0
      %p99 = por %p97, %p98
      %s101 = sadd.s32 %s100, 1
      %p104 = scmp.eq.s32.totalorder %s22, 3
      %p105 = scmp.ne.s32.totalorder %s100, %s102
      %p106 = scmp.eq.s32.totalorder %s22, 0
      %p107 = por %p105, %p106
      %p108 = scmp.ne.s32.totalorder %s100, %s102
      %p109 = scmp.eq.s32.totalorder %s27, 3
      %p110 = por %p108, %p109
      %p111 = scmp.ne.s32.totalorder %s102, %s103
      %p112 = scmp.eq.s32.totalorder %s27, 0
      %p113 = por %p111, %p112
      %p114 = scmp.ne.s32.totalorder %s102, %s103
      %p115 = scmp.eq.s32.totalorder %s28, 3
      %p116 = por %p114, %p115
      %p118 = scmp.ne.s32.totalorder %s103, %s117
      %p119 = scmp.eq.s32.totalorder %s28, 0
      %p120 = por %p118, %p119
      %s122 = sadd.s32 %s121, 1
      %p125 = scmp.eq.s32.totalorder %s22, 3
      %p126 = scmp.ne.s32.totalorder %s121, %s123
      %p127 = scmp.eq.s32.totalorder %s22, 0
      %p128 = por %p126, %p127
      %p129 = scmp.ne.s32.totalorder %s121, %s123
      %p130 = scmp.eq.s32.totalorder %s27, 3
      %p131 = por %p129, %p130
      %p132 = scmp.ne.s32.totalorder %s123, %s124
      %p133 = scmp.eq.s32.totalorder %s27, 0
      %p134 = por %p132, %p133
      %p135 = scmp.ne.s32.totalorder %s123, %s124
      %p136 = scmp.eq.s32.totalorder %s28, 3
      %p137 = por %p135, %p136
      %p139 = scmp.ne.s32.totalorder %s124, %s138
      %p140 = scmp.eq.s32.totalorder %s28, 0
      %p141 = por %p139, %p140
      %s143 = sadd.s32 %s142, 1
      %p146 = scmp.eq.s32.totalorder %s22, 3
      %p147 = scmp.ne.s32.totalorder %s142, %s144
      %p148 = scmp.eq.s32.totalorder %s22, 0
      %p149 = por %p147, %p148
      %p150 = scmp.ne.s32.totalorder %s142, %s144
      %p151 = scmp.eq.s32.totalorder %s27, 3
      %p152 = por %p150, %p151
      %p153 = scmp.ne.s32.totalorder %s144, %s145
      %p154 = scmp.eq.s32.totalorder %s27, 0
      %p155 = por %p153, %p154
      %p156 = scmp.ne.s32.totalorder %s144, %s145
      %p157 = scmp.eq.s32.totalorder %s28, 3
      %p158 = por %p156, %p157
      %p160 = scmp.ne.s32.totalorder %s145, %s159
      %p161 = scmp.eq.s32.totalorder %s28, 0
      %p162 = por %p160, %p161
      %s164 = sadd.s32 %s163, 1
      %p167 = scmp.eq.s32.totalorder %s22, 3
      %p168 = scmp.ne.s32.totalorder %s163, %s165
      %p169 = scmp.eq.s32.totalorder %s22, 0
      %p170 = por %p168, %p169
      %p171 = scmp.ne.s32.totalorder %s163, %s165
      %p172 = scmp.eq.s32.totalorder %s27, 3
      %p173 = por %p171, %p172
      %p174 = scmp.ne.s32.totalorder %s165, %s166
      %p175 = scmp.eq.s32.totalorder %s27, 0
      %p176 = por %p174, %p175
      %p177 = scmp.ne.s32.totalorder %s165, %s166
      %p178 = scmp.eq.s32.totalorder %s28, 3
      %p179 = por %p177, %p178
      %p181 = scmp.ne.s32.totalorder %s166, %s180
      %p182 = scmp.eq.s32.totalorder %s28, 0
      %p183 = por %p181, %p182
      %s185 = sadd.s32 %s184, 1
      %p188 = scmp.eq.s32.totalorder %s22, 3
      %p189 = scmp.ne.s32.totalorder %s184, %s186
      %p190 = scmp.eq.s32.totalorder %s22, 0
      %p191 = por %p189, %p190
      %p192 = scmp.ne.s32.totalorder %s184, %s186
      %p193 = scmp.eq.s32.totalorder %s27, 3
      %p194 = por %p192, %p193
      %p195 = scmp.ne.s32.totalorder %s186, %s187
      %p196 = scmp.eq.s32.totalorder %s27, 0
      %p197 = por %p195, %p196
      %p198 = scmp.ne.s32.totalorder %s186, %s187
      %p199 = scmp.eq.s32.totalorder %s28, 3
      %p200 = por %p198, %p199
      %p202 = scmp.ne.s32.totalorder %s187, %s201
      %p203 = scmp.eq.s32.totalorder %s28, 0
      %p204 = por %p202, %p203
      %s205 = ssub.s32 %s29, %s48
      %s206 = ssub.s32 %s30, %s44
      %s207 = sor.u32 %s205, %s206
      %s208 = ssub.s32 %s31, %s40
      %s209 = sor.u32 %s207, %s208
      %p210 = scmp.eq.s32.totalorder %s209, 0
      %s212 = sadd.s32 %s211, 1
      %s213 = scalar_select %p210, %s211, %s212
      %p216 = pneg %p210
      %p217 = scmp.eq.s32.totalorder %s22, 3
      %p218 = por %p216, %p217
      %p219 = scmp.ne.s32.totalorder %s211, %s214
      %p220 = scmp.eq.s32.totalorder %s22, 0
      %p221 = por %p219, %p220
      %p222 = scmp.ne.s32.totalorder %s211, %s214
      %p223 = scmp.eq.s32.totalorder %s27, 3
      %p224 = por %p222, %p223
      %p225 = scmp.ne.s32.totalorder %s214, %s215
      %p226 = scmp.eq.s32.totalorder %s27, 0
      %p227 = por %p225, %p226
      %p228 = scmp.ne.s32.totalorder %s214, %s215
      %p229 = scmp.eq.s32.totalorder %s28, 3
      %p230 = por %p228, %p229
      %p232 = scmp.ne.s32.totalorder %s215, %s231
      %p233 = scmp.eq.s32.totalorder %s28, 0
      %p234 = por %p232, %p233
      %p235 = scmp.le.s32.totalorder 1, %s22
      %p236 = scmp.lt.s32.totalorder %s22, 5
      %p237 = pnand %p235, %p236
      %p238 = pneg %p237
      // Predicated region
      $region9: #{tpu_custom_call.1} parent=5 // pred_check
        _
      $region10: #{tpu_custom_call.1} parent=5 // pred_check_branch
        %240 = sbr.rel (%p237) target = $region12
      $region11: #{tpu_custom_call.1} parent=5 // pred_region
        %s241 = ssub.s32 %s22, 1
        // Predicated region
        $region13: #{tpu_custom_call.1} parent=11 // pred_check
          %p242 = pneg %p92
        $region14: #{tpu_custom_call.1} parent=11 // pred_check_branch
          %244 = sbr.rel (%p242) target = $region16
        $region15: #{tpu_custom_call.1} parent=11 // pred_region
          %s246 = ssub.s32 512, 512
          %247 = vsyncadd [#allocation6], %s246
          %s248 = sshll.u32 [#allocation5], 4
          %s249 = int_to_ptr.vmem [resolvable:$true] %s248
          %254 = dma.hbm_to_vmem [thread:$0]  %s1, 512, %s249, [#allocation6], 128, 128, 8
        $region16: #{tpu_custom_call.1} parent=11 // pred_fallthru
          _
        // Predicated region
        $region17: #{tpu_custom_call.1} parent=11 // pred_check
          %p255 = pneg %p113
        $region18: #{tpu_custom_call.1} parent=11 // pred_check_branch
          %257 = sbr.rel (%p255) target = $region20
        $region19: #{tpu_custom_call.1} parent=11 // pred_region
          %s259 = ssub.s32 1024, 1024
          %260 = vsyncadd [#allocation6], %s259
          %s261 = sshll.u32 [#allocation7], 4
          %s262 = int_to_ptr.vmem [resolvable:$true] %s261
          %267 = dma.hbm_to_vmem [thread:$0]  %s2, 1024, %s262, [#allocation6], 128, 128, 8
        $region20: #{tpu_custom_call.1} parent=11 // pred_fallthru
          _
        // Predicated region
        $region21: #{tpu_custom_call.1} parent=11 // pred_check
          %p268 = pneg %p134
        $region22: #{tpu_custom_call.1} parent=11 // pred_check_branch
          %270 = sbr.rel (%p268) target = $region24
        $region23: #{tpu_custom_call.1} parent=11 // pred_region
          %s272 = ssub.s32 4096, 4096
          %273 = vsyncadd [#allocation9], %s272
          %s274 = sshll.u32 [#allocation8], 4
          %s275 = int_to_ptr.vmem [resolvable:$true] %s274
          %280 = dma.hbm_to_vmem [thread:$0]  %s3, 4096, %s275, [#allocation9], 128, 128, 8
        $region24: #{tpu_custom_call.1} parent=11 // pred_fallthru
          _
        // Predicated region
        $region25: #{tpu_custom_call.1} parent=11 // pred_check
          %p281 = pneg %p155
        $region26: #{tpu_custom_call.1} parent=11 // pred_check_branch
          %283 = sbr.rel (%p281) target = $region28
        $region27: #{tpu_custom_call.1} parent=11 // pred_region
          %s285 = ssub.s32 512, 512
          %286 = vsyncadd [#allocation9], %s285
          %s287 = sshll.u32 [#allocation10], 4
          %s288 = int_to_ptr.vmem [resolvable:$true] %s287
          %293 = dma.hbm_to_vmem [thread:$0]  %s4, 512, %s288, [#allocation9], 128, 128, 8
        $region28: #{tpu_custom_call.1} parent=11 // pred_fallthru
          _
        // Predicated region
        $region29: #{tpu_custom_call.1} parent=11 // pred_check
          %p294 = pneg %p176
        $region30: #{tpu_custom_call.1} parent=11 // pred_check_branch
          %296 = sbr.rel (%p294) target = $region32
        $region31: #{tpu_custom_call.1} parent=11 // pred_region
          %s298 = ssub.s32 512, 512
          %299 = vsyncadd [#allocation12], %s298
          %s300 = sshll.u32 [#allocation11], 4
          %s301 = int_to_ptr.vmem [resolvable:$true] %s300
          %306 = dma.hbm_to_vmem [thread:$0]  %s5, 512, %s301, [#allocation12], 128, 128, 8
        $region32: #{tpu_custom_call.1} parent=11 // pred_fallthru
          _
        // Predicated region
        $region33: #{tpu_custom_call.1} parent=11 // pred_check
          %p307 = pneg %p197
        $region34: #{tpu_custom_call.1} parent=11 // pred_check_branch
          %309 = sbr.rel (%p307) target = $region36
        $region35: #{tpu_custom_call.1} parent=11 // pred_region
          _
        $region36: #{tpu_custom_call.1} parent=11 // pred_fallthru
          _
      $region12: #{tpu_custom_call.1} parent=5 // pred_fallthru
        _
      %p310 = scmp.lt.s32.totalorder %s22, 4
      // Predicated region
      $region37: #{tpu_custom_call.1} parent=5 // pred_check
        %p311 = pneg %p310
      $region38: #{tpu_custom_call.1} parent=5 // pred_check_branch
        %313 = sbr.rel (%p311) target = $region40
      $region39: #{tpu_custom_call.1} parent=5 // pred_region
        // Predicated region
        $region41: #{tpu_custom_call.1} parent=39 // pred_check
          %p314 = pneg %p65
        $region42: #{tpu_custom_call.1} parent=39 // pred_check_branch
          %316 = sbr.rel (%p314) target = $region44
        $region43: #{tpu_custom_call.1} parent=39 // pred_region
          %s317 = sand.u32 %s55, 1
          %s318 = scalar_lea.sflag [#allocation3], %s317
          %s319 = sand.u32 %s55, 1
          %s320 = smul.addr %s319, 128
          %s321 = scalar_lea.vmem [#allocation2], %s320
          %s322 = smul.u32 16, %s30
          %s324 = ssub.s32 2048, 2048
          %325 = vsyncadd %s318, %s324
          %s326 = smul.addr %s322, 2
          %s327 = sadd.s32 %s31, %s326
          %s328 = smul.addr %s29, 32
          %s329 = sadd.s32 %s327, %s328
          %s330 = smul.addr %s329, 128
          %s331 = scalar_lea.hbm %s0, %s330
          %s332 = sshll.u32 %s321, 4
          %s333 = int_to_ptr.vmem [resolvable:$true] %s332
          %338 = dma.hbm_to_vmem [thread:$0]  %s331, 2048, %s333, %s318, 256, 128, 8
        $region44: #{tpu_custom_call.1} parent=39 // pred_fallthru
          _
      $region40: #{tpu_custom_call.1} parent=5 // pred_fallthru
        _
      %p339 = scmp.le.s32.totalorder 1, %s22
      %p340 = scmp.lt.s32.totalorder %s22, 5
      %p341 = pnand %p339, %p340
      %p342 = pneg %p341
      // Predicated region
      $region45: #{tpu_custom_call.1} parent=5 // pred_check
        _
      $region46: #{tpu_custom_call.1} parent=5 // pred_check_branch
        %344 = sbr.rel (%p341) target = $region48
      $region47: #{tpu_custom_call.1} parent=5 // pred_region
        %s345 = ssub.s32 %s22, 1
        %s346 = sand.u32 %s58, 1
        %s347 = scalar_lea.sflag [#allocation3], %s346
        %s348 = sand.u32 %s58, 1
        %s349 = smul.addr %s348, 128
        %s350 = scalar_lea.vmem [#allocation2], %s349
        // Predicated region
        $region49: #{tpu_custom_call.1} parent=47 // pred_check
          %p351 = pneg %p71
        $region50: #{tpu_custom_call.1} parent=47 // pred_check_branch
          %353 = sbr.rel (%p351) target = $region52
        $region51: #{tpu_custom_call.1} parent=47 // pred_region
          %354 = dma.done %s347, 2048
        $region52: #{tpu_custom_call.1} parent=47 // pred_fallthru
          _
        // Predicated region
        $region53: #{tpu_custom_call.1} parent=47 // pred_check
          %p355 = pneg %p92
        $region54: #{tpu_custom_call.1} parent=47 // pred_check_branch
          %357 = sbr.rel (%p355) target = $region56
        $region55: #{tpu_custom_call.1} parent=47 // pred_region
          %358 = dma.done [#allocation6], 512
        $region56: #{tpu_custom_call.1} parent=47 // pred_fallthru
          _
        // Predicated region
        $region57: #{tpu_custom_call.1} parent=47 // pred_check
          %p359 = pneg %p113
        $region58: #{tpu_custom_call.1} parent=47 // pred_check_branch
          %361 = sbr.rel (%p359) target = $region60
        $region59: #{tpu_custom_call.1} parent=47 // pred_region
          %362 = dma.done [#allocation6], 1024
        $region60: #{tpu_custom_call.1} parent=47 // pred_fallthru
          _
        // Predicated region
        $region61: #{tpu_custom_call.1} parent=47 // pred_check
          %p363 = pneg %p134
        $region62: #{tpu_custom_call.1} parent=47 // pred_check_branch
          %365 = sbr.rel (%p363) target = $region64
        $region63: #{tpu_custom_call.1} parent=47 // pred_region
          %366 = dma.done [#allocation9], 4096
        $region64: #{tpu_custom_call.1} parent=47 // pred_fallthru
          _
        // Predicated region
        $region65: #{tpu_custom_call.1} parent=47 // pred_check
          %p367 = pneg %p155
        $region66: #{tpu_custom_call.1} parent=47 // pred_check_branch
          %369 = sbr.rel (%p367) target = $region68
        $region67: #{tpu_custom_call.1} parent=47 // pred_region
          %370 = dma.done [#allocation9], 512
        $region68: #{tpu_custom_call.1} parent=47 // pred_fallthru
          _
        // Predicated region
        $region69: #{tpu_custom_call.1} parent=47 // pred_check
          %p371 = pneg %p176
        $region70: #{tpu_custom_call.1} parent=47 // pred_check_branch
          %373 = sbr.rel (%p371) target = $region72
        $region71: #{tpu_custom_call.1} parent=47 // pred_region
          %374 = dma.done [#allocation12], 512
        $region72: #{tpu_custom_call.1} parent=47 // pred_fallthru
          _
        %s375 = sand.u32 %s58, 1
        %s376 = scalar_lea.sflag [#allocation3], %s375
        %s377 = sand.u32 %s58, 1
        %s378 = smul.addr %s377, 128
        %s379 = scalar_lea.vmem [#allocation2], %s378
        %p380 = pneg %p71
        %p381 = pneg %p68
        %p382 = pneg %p92
        %p383 = pneg %p89
        %p384 = pneg %p113
        %p385 = pneg %p110
        %p386 = pneg %p134
        %p387 = pneg %p131
        %p388 = pneg %p155
        %p389 = pneg %p152
        %p390 = pneg %p176
        %p391 = pneg %p173
        %p392 = pneg %p197
        %p393 = pneg %p194
        %p394 = pneg %p227
        %p395 = pneg %p224
        %s396 = sand.u32 %s214, 1
        %s397 = scalar_lea.sflag [#allocation4], %s396
        %s398 = sand.u32 %s214, 1
        %s399 = smul.addr %s398, 128
        %s400 = scalar_lea.vmem [#allocation13], %s399
        %s401 = smul.u32 16, %s33
        %s402 = smul.u32 16, %s33
        %v403 = vld [vmem:[%s350] sm:$0xff]
        %v404 = vld [vmem:[%s350 + $0x8] sm:$0xff]
        %v405 = vld [vmem:[%s350 + $0x10] sm:$0xff]
        %v406 = vld [vmem:[%s350 + $0x18] sm:$0xff]
        %v407 = vld [vmem:[%s350 + $0x20] sm:$0xff]
        %v408 = vld [vmem:[%s350 + $0x28] sm:$0xff]
        %v409 = vld [vmem:[%s350 + $0x30] sm:$0xff]
        %v410 = vld [vmem:[%s350 + $0x38] sm:$0xff]
        %v411 = vld [vmem:[%s350 + $0x40] sm:$0xff]
        %v412 = vld [vmem:[%s350 + $0x48] sm:$0xff]
        %v413 = vld [vmem:[%s350 + $0x50] sm:$0xff]
        %v414 = vld [vmem:[%s350 + $0x58] sm:$0xff]
        %v415 = vld [vmem:[%s350 + $0x60] sm:$0xff]
        %v416 = vld [vmem:[%s350 + $0x68] sm:$0xff]
        %v417 = vld [vmem:[%s350 + $0x70] sm:$0xff]
        %v418 = vld [vmem:[%s350 + $0x78] sm:$0xff]
        %v419 = vld [vmem:[#allocation5] sm:$0xff]
        %v420 = vld [vmem:[#allocation5 + $0x8] sm:$0xff]
        %v421 = vld [vmem:[#allocation5 + $0x10] sm:$0xff]
        %v422 = vld [vmem:[#allocation5 + $0x18] sm:$0xff]
        %vm423 = vcmask 261120
        %v425 = vsel %vm423, %v403, 0
        %v428 = vsel %vm423, %v404, 0
        %v431 = vsel %vm423, %v405, 0
        %v434 = vsel %vm423, %v406, 0
        %v437 = vsel %vm423, %v407, 0
        %v440 = vsel %vm423, %v408, 0
        %v443 = vsel %vm423, %v409, 0
        %v446 = vsel %vm423, %v410, 0
        %v449 = vsel %vm423, %v411, 0
        %v452 = vsel %vm423, %v412, 0
        %v455 = vsel %vm423, %v413, 0
        %v458 = vsel %vm423, %v414, 0
        %v461 = vsel %vm423, %v415, 0
        %v464 = vsel %vm423, %v416, 0
        %v467 = vsel %vm423, %v417, 0
        %v470 = vsel %vm423, %v418, 0
        %472 = vmatprep.subr.mxu0 0.0
        %473 = vmatpush1.msra.mxu0 %v419
        %474 = vmatprep.subr.mxu0 0.0
        %475 = vmatpush1.msra.mxu0 %v420
        %476 = vmatprep.subr.mxu0 0.0
        %477 = vmatpush1.msra.mxu0 %v421
        %478 = vmatprep.subr.mxu0 0.0
        %479 = vmatpush1.msra.mxu0 %v422
        %480 = vmatprep.subr.mxu0 0.0
        %481 = vmatpush1.msra.mxu0 0.0
        %482 = vmatprep.subr.mxu0 0.0
        %483 = vmatpush1.msra.mxu0 0.0
        %484 = vmatprep.subr.mxu0 0.0
        %485 = vmatpush1.msra.mxu0 0.0
        %486 = vmatprep.subr.mxu0 0.0
        %487 = vmatpush1.msra.mxu0 0.0
        %488 = vmatprep.subr.mxu0 0.0
        %489 = vmatpush1.msra.mxu0 0.0
        %490 = vmatprep.subr.mxu0 0.0
        %491 = vmatpush1.msra.mxu0 0.0
        %492 = vmatprep.subr.mxu0 0.0
        %493 = vmatpush1.msra.mxu0 0.0
        %494 = vmatprep.subr.mxu0 0.0
        %495 = vmatpush1.msra.mxu0 0.0
        %496 = vmatprep.subr.mxu0 0.0
        %497 = vmatpush1.msra.mxu0 0.0
        %498 = vmatprep.subr.mxu0 0.0
        %499 = vmatpush1.msra.mxu0 0.0
        %500 = vmatprep.subr.mxu0 0.0
        %501 = vmatpush1.msra.mxu0 0.0
        %502 = vmatprep.subr.mxu0 0.0
        %503 = vmatpush1.msra.mxu0 0.0
        %504 = vmatprep.subr.mxu0 0.0
        %505 = vmatpush1.msra.mxu0 0.0
        %506 = vmatprep.subr.mxu0 0.0
        %507 = vmatpush1.msra.mxu0 0.0
        %508 = vmatprep.subr.mxu0 0.0
        %509 = vmatpush1.msra.mxu0 0.0
        %510 = vmatprep.subr.mxu0 0.0
        %511 = vmatpush1.msra.mxu0 0.0
        %512 = vmatprep.subr.mxu0 0.0
        %513 = vmatpush1.msra.mxu0 0.0
        %514 = vmatprep.subr.mxu0 0.0
        %515 = vmatpush1.msra.mxu0 0.0
        %516 = vmatprep.subr.mxu0 0.0
        %517 = vmatpush1.msra.mxu0 0.0
        %518 = vmatprep.subr.mxu0 0.0
        %519 = vmatpush1.msra.mxu0 0.0
        %520 = vmatprep.subr.mxu0 0.0
        %521 = vmatpush1.msra.mxu0 0.0
        %522 = vmatprep.subr.mxu0 0.0
        %523 = vmatpush1.msra.mxu0 0.0
        %524 = vmatprep.subr.mxu0 0.0
        %525 = vmatpush1.msra.mxu0 0.0
        %526 = vmatprep.subr.mxu0 0.0
        %527 = vmatpush1.msra.mxu0 0.0
        %528 = vmatprep.subr.mxu0 0.0
        %529 = vmatpush1.msra.mxu0 0.0
        %530 = vmatprep.subr.mxu0 0.0
        %531 = vmatpush1.msra.mxu0 0.0
        %532 = vmatprep.subr.mxu0 0.0
        %533 = vmatpush1.msra.mxu0 0.0
        %534 = vmatprep.subr.mxu0 0.0
        %535 = vmatpush1.msra.mxu0 0.0
        %536 = vmatprep.mubr.f32.mxu0 0.0
        %537 = vmatmul.mubr.f32.gmra.mrb[0].mxu0 %v425
        %v538 = vpop.f32.mrb[0].mxu0
        %v539 = vadd.f32 0.0, %v538
        %v540 = vpop.f32.mrb[0].mxu0
        %541 = vmatprep.mubr.f32.mxu0 0.0
        %542 = vmatmul.mubr.f32.gmra.mrb[0].mxu0 %v428
        %v543 = vpop.f32.mrb[0].mxu0
        %v544 = vadd.f32 0.0, %v543
        %v545 = vpop.f32.mrb[0].mxu0
        %546 = vmatprep.mubr.f32.mxu0 0.0
        %547 = vmatmul.mubr.f32.gmra.mrb[0].mxu0 %v431
        %v548 = vpop.f32.mrb[0].mxu0
        %v549 = vadd.f32 0.0, %v548
        %v550 = vpop.f32.mrb[0].mxu0
        %551 = vmatprep.mubr.f32.mxu0 0.0
        %552 = vmatmul.mubr.f32.gmra.mrb[0].mxu0 %v434
        %v553 = vpop.f32.mrb[0].mxu0
        %v554 = vadd.f32 0.0, %v553
        %v555 = vpop.f32.mrb[0].mxu0
        %556 = vmatprep.mubr.f32.mxu0 0.0
        %557 = vmatmul.mubr.f32.gmra.mrb[0].mxu0 %v437
        %v558 = vpop.f32.mrb[0].mxu0
        %v559 = vadd.f32 0.0, %v558
        %v560 = vpop.f32.mrb[0].mxu0
        %561 = vmatprep.mubr.f32.mxu0 0.0
        %562 = vmatmul.mubr.f32.gmra.mrb[0].mxu0 %v440
        %v563 = vpop.f32.mrb[0].mxu0
        %v564 = vadd.f32 0.0, %v563
        %v565 = vpop.f32.mrb[0].mxu0
        %566 = vmatprep.mubr.f32.mxu0 0.0
        %567 = vmatmul.mubr.f32.gmra.mrb[0].mxu0 %v443
        %v568 = vpop.f32.mrb[0].mxu0
        %v569 = vadd.f32 0.0, %v568
        %v570 = vpop.f32.mrb[0].mxu0
        %571 = vmatprep.mubr.f32.mxu0 0.0
        %572 = vmatmul.mubr.f32.gmra.mrb[0].mxu0 %v446
        %v573 = vpop.f32.mrb[0].mxu0
        %v574 = vadd.f32 0.0, %v573
        %v575 = vpop.f32.mrb[0].mxu0
        %576 = vmatprep.mubr.f32.mxu0 0.0
        %577 = vmatmul.mubr.f32.gmra.mrb[0].mxu0 %v449
        %v578 = vpop.f32.mrb[0].mxu0
        %v579 = vadd.f32 0.0, %v578
        %v580 = vpop.f32.mrb[0].mxu0
        %581 = vmatprep.mubr.f32.mxu0 0.0
        %582 = vmatmul.mubr.f32.gmra.mrb[0].mxu0 %v452
        %v583 = vpop.f32.mrb[0].mxu0
        %v584 = vadd.f32 0.0, %v583
        %v585 = vpop.f32.mrb[0].mxu0
        %586 = vmatprep.mubr.f32.mxu0 0.0
        %587 = vmatmul.mubr.f32.gmra.mrb[0].mxu0 %v455
        %v588 = vpop.f32.mrb[0].mxu0
        %v589 = vadd.f32 0.0, %v588
        %v590 = vpop.f32.mrb[0].mxu0
        %591 = vmatprep.mubr.f32.mxu0 0.0
        %592 = vmatmul.mubr.f32.gmra.mrb[0].mxu0 %v458
        %v593 = vpop.f32.mrb[0].mxu0
        %v594 = vadd.f32 0.0, %v593
        %v595 = vpop.f32.mrb[0].mxu0
        %596 = vmatprep.mubr.f32.mxu0 0.0
        %597 = vmatmul.mubr.f32.gmra.mrb[0].mxu0 %v461
        %v598 = vpop.f32.mrb[0].mxu0
        %v599 = vadd.f32 0.0, %v598
        %v600 = vpop.f32.mrb[0].mxu0
        %601 = vmatprep.mubr.f32.mxu0 0.0
        %602 = vmatmul.mubr.f32.gmra.mrb[0].mxu0 %v464
        %v603 = vpop.f32.mrb[0].mxu0
        %v604 = vadd.f32 0.0, %v603
        %v605 = vpop.f32.mrb[0].mxu0
        %606 = vmatprep.mubr.f32.mxu0 0.0
        %607 = vmatmul.mubr.f32.gmra.mrb[0].mxu0 %v467
        %v608 = vpop.f32.mrb[0].mxu0
        %v609 = vadd.f32 0.0, %v608
        %v610 = vpop.f32.mrb[0].mxu0
        %611 = vmatprep.mubr.f32.mxu0 0.0
        %612 = vmatmul.mubr.f32.gmra.mrb[0].mxu0 %v470
        %v613 = vpop.f32.mrb[0].mxu0
        %v614 = vadd.f32 0.0, %v613
        %v615 = vpop.f32.mrb[0].mxu0
        %616 = vdwg.mxu0
        %v617 = vld [vmem:[#allocation7] sm:$0xff]
        %v618 = vld [vmem:[#allocation7 + $0x8] sm:$0xff]
        %v619 = vld [vmem:[#allocation7 + $0x10] sm:$0xff]
        %v620 = vld [vmem:[#allocation7 + $0x18] sm:$0xff]
        %v621 = vld [vmem:[#allocation7 + $0x20] sm:$0xff]
        %v622 = vld [vmem:[#allocation7 + $0x28] sm:$0xff]
        %v623 = vld [vmem:[#allocation7 + $0x30] sm:$0xff]
        %v624 = vld [vmem:[#allocation7 + $0x38] sm:$0xff]
        %v625 = vadd.f32 %v539, %v617
        %v626 = vadd.f32 %v544, %v618
        %v627 = vadd.f32 %v549, %v619
        %v628 = vadd.f32 %v554, %v620
        %v629 = vadd.f32 %v559, %v621
        %v630 = vadd.f32 %v564, %v622
        %v631 = vadd.f32 %v569, %v623
        %v632 = vadd.f32 %v574, %v624
        %v633 = vadd.f32 %v579, %v617
        %v634 = vadd.f32 %v584, %v618
        %v635 = vadd.f32 %v589, %v619
        %v636 = vadd.f32 %v594, %v620
        %v637 = vadd.f32 %v599, %v621
        %v638 = vadd.f32 %v604, %v622
        %v639 = vadd.f32 %v609, %v623
        %v640 = vadd.f32 %v614, %v624
        %657 = vrot.lane.b32.xlu0 %v625, 120
        %v658 = vpop.permute.xlu0 %657
        %659 = vrot.lane.b32.xlu0 %v626, 120
        %v660 = vpop.permute.xlu0 %659
        %661 = vrot.lane.b32.xlu0 %v627, 120
        %v662 = vpop.permute.xlu0 %661
        %663 = vrot.lane.b32.xlu0 %v628, 120
        %v664 = vpop.permute.xlu0 %663
        %665 = vrot.lane.b32.xlu0 %v629, 120
        %v666 = vpop.permute.xlu0 %665
        %667 = vrot.lane.b32.xlu0 %v630, 120
        %v668 = vpop.permute.xlu0 %667
        %669 = vrot.lane.b32.xlu0 %v631, 120
        %v670 = vpop.permute.xlu0 %669
        %671 = vrot.lane.b32.xlu0 %v632, 120
        %v672 = vpop.permute.xlu0 %671
        %673 = vrot.lane.b32.xlu0 %v633, 120
        %v674 = vpop.permute.xlu0 %673
        %675 = vrot.lane.b32.xlu0 %v634, 120
        %v676 = vpop.permute.xlu0 %675
        %677 = vrot.lane.b32.xlu0 %v635, 120
        %v678 = vpop.permute.xlu0 %677
        %679 = vrot.lane.b32.xlu0 %v636, 120
        %v680 = vpop.permute.xlu0 %679
        %681 = vrot.lane.b32.xlu0 %v637, 120
        %v682 = vpop.permute.xlu0 %681
        %683 = vrot.lane.b32.xlu0 %v638, 120
        %v684 = vpop.permute.xlu0 %683
        %685 = vrot.lane.b32.xlu0 %v639, 120
        %v686 = vpop.permute.xlu0 %685
        %687 = vrot.lane.b32.xlu0 %v640, 120
        %v688 = vpop.permute.xlu0 %687
        %689 = vrot.lane.b32.xlu0 %v625, 112
        %v690 = vpop.permute.xlu0 %689
        %691 = vrot.lane.b32.xlu0 %v626, 112
        %v692 = vpop.permute.xlu0 %691
        %693 = vrot.lane.b32.xlu0 %v627, 112
        %v694 = vpop.permute.xlu0 %693
        %695 = vrot.lane.b32.xlu0 %v628, 112
        %v696 = vpop.permute.xlu0 %695
        %697 = vrot.lane.b32.xlu0 %v629, 112
        %v698 = vpop.permute.xlu0 %697
        %699 = vrot.lane.b32.xlu0 %v630, 112
        %v700 = vpop.permute.xlu0 %699
        %701 = vrot.lane.b32.xlu0 %v631, 112
        %v702 = vpop.permute.xlu0 %701
        %703 = vrot.lane.b32.xlu0 %v632, 112
        %v704 = vpop.permute.xlu0 %703
        %705 = vrot.lane.b32.xlu0 %v633, 112
        %v706 = vpop.permute.xlu0 %705
        %707 = vrot.lane.b32.xlu0 %v634, 112
        %v708 = vpop.permute.xlu0 %707
        %709 = vrot.lane.b32.xlu0 %v635, 112
        %v710 = vpop.permute.xlu0 %709
        %711 = vrot.lane.b32.xlu0 %v636, 112
        %v712 = vpop.permute.xlu0 %711
        %713 = vrot.lane.b32.xlu0 %v637, 112
        %v714 = vpop.permute.xlu0 %713
        %715 = vrot.lane.b32.xlu0 %v638, 112
        %v716 = vpop.permute.xlu0 %715
        %717 = vrot.lane.b32.xlu0 %v639, 112
        %v718 = vpop.permute.xlu0 %717
        %719 = vrot.lane.b32.xlu0 %v640, 112
        %v720 = vpop.permute.xlu0 %719
        %721 = vrot.lane.b32.xlu0 %v625, 104
        %v722 = vpop.permute.xlu0 %721
        %723 = vrot.lane.b32.xlu0 %v626, 104
        %v724 = vpop.permute.xlu0 %723
        %725 = vrot.lane.b32.xlu0 %v627, 104
        %v726 = vpop.permute.xlu0 %725
        %727 = vrot.lane.b32.xlu0 %v628, 104
        %v728 = vpop.permute.xlu0 %727
        %729 = vrot.lane.b32.xlu0 %v629, 104
        %v730 = vpop.permute.xlu0 %729
        %731 = vrot.lane.b32.xlu0 %v630, 104
        %v732 = vpop.permute.xlu0 %731
        %733 = vrot.lane.b32.xlu0 %v631, 104
        %v734 = vpop.permute.xlu0 %733
        %735 = vrot.lane.b32.xlu0 %v632, 104
        %v736 = vpop.permute.xlu0 %735
        %737 = vrot.lane.b32.xlu0 %v633, 104
        %v738 = vpop.permute.xlu0 %737
        %739 = vrot.lane.b32.xlu0 %v634, 104
        %v740 = vpop.permute.xlu0 %739
        %741 = vrot.lane.b32.xlu0 %v635, 104
        %v742 = vpop.permute.xlu0 %741
        %743 = vrot.lane.b32.xlu0 %v636, 104
        %v744 = vpop.permute.xlu0 %743
        %745 = vrot.lane.b32.xlu0 %v637, 104
        %v746 = vpop.permute.xlu0 %745
        %747 = vrot.lane.b32.xlu0 %v638, 104
        %v748 = vpop.permute.xlu0 %747
        %749 = vrot.lane.b32.xlu0 %v639, 104
        %v750 = vpop.permute.xlu0 %749
        %751 = vrot.lane.b32.xlu0 %v640, 104
        %v752 = vpop.permute.xlu0 %751
        %753 = vrot.lane.b32.xlu0 %v625, 96
        %v754 = vpop.permute.xlu0 %753
        %755 = vrot.lane.b32.xlu0 %v626, 96
        %v756 = vpop.permute.xlu0 %755
        %757 = vrot.lane.b32.xlu0 %v627, 96
        %v758 = vpop.permute.xlu0 %757
        %759 = vrot.lane.b32.xlu0 %v628, 96
        %v760 = vpop.permute.xlu0 %759
        %761 = vrot.lane.b32.xlu0 %v629, 96
        %v762 = vpop.permute.xlu0 %761
        %763 = vrot.lane.b32.xlu0 %v630, 96
        %v764 = vpop.permute.xlu0 %763
        %765 = vrot.lane.b32.xlu0 %v631, 96
        %v766 = vpop.permute.xlu0 %765
        %767 = vrot.lane.b32.xlu0 %v632, 96
        %v768 = vpop.permute.xlu0 %767
        %vm769 = vcmask 64512
        %v770 = vsel %vm769, %v625, 0
        %v772 = vsel %vm769, %v626, 0
        %v774 = vsel %vm769, %v627, 0
        %v776 = vsel %vm769, %v628, 0
        %v778 = vsel %vm769, %v629, 0
        %v780 = vsel %vm769, %v630, 0
        %v782 = vsel %vm769, %v631, 0
        %v784 = vsel %vm769, %v632, 0
        %v786 = vsel %vm769, %v754, 0
        %v788 = vsel %vm769, %v756, 0
        %v790 = vsel %vm769, %v758, 0
        %v792 = vsel %vm769, %v760, 0
        %v794 = vsel %vm769, %v762, 0
        %v796 = vsel %vm769, %v764, 0
        %v798 = vsel %vm769, %v766, 0
        %v800 = vsel %vm769, %v768, 0
        %802 = vmatprep.subr.mxu0 0.0
        %803 = vmatpush1.xpose.msra.mxu0 %v786
        %804 = vmatprep.subr.mxu0 0.0
        %805 = vmatpush1.xpose.msra.mxu0 %v788
        %806 = vmatprep.subr.mxu0 0.0
        %807 = vmatpush1.xpose.msra.mxu0 %v790
        %808 = vmatprep.subr.mxu0 0.0
        %809 = vmatpush1.xpose.msra.mxu0 %v792
        %810 = vmatprep.subr.mxu0 0.0
        %811 = vmatpush1.xpose.msra.mxu0 %v794
        %812 = vmatprep.subr.mxu0 0.0
        %813 = vmatpush1.xpose.msra.mxu0 %v796
        %814 = vmatprep.subr.mxu0 0.0
        %815 = vmatpush1.xpose.msra.mxu0 %v798
        %816 = vmatprep.subr.mxu0 0.0
        %817 = vmatpush1.xpose.msra.mxu0 %v800
        %818 = vmatprep.subr.mxu0 0.0
        %819 = vmatpush1.xpose.msra.mxu0 0.0
        %820 = vmatprep.subr.mxu0 0.0
        %821 = vmatpush1.xpose.msra.mxu0 0.0
        %822 = vmatprep.subr.mxu0 0.0
        %823 = vmatpush1.xpose.msra.mxu0 0.0
        %824 = vmatprep.subr.mxu0 0.0
        %825 = vmatpush1.xpose.msra.mxu0 0.0
        %826 = vmatprep.subr.mxu0 0.0
        %827 = vmatpush1.xpose.msra.mxu0 0.0
        %828 = vmatprep.subr.mxu0 0.0
        %829 = vmatpush1.xpose.msra.mxu0 0.0
        %830 = vmatprep.subr.mxu0 0.0
        %831 = vmatpush1.xpose.msra.mxu0 0.0
        %832 = vmatprep.subr.mxu0 0.0
        %833 = vmatpush1.xpose.msra.mxu0 0.0
        %834 = vmatprep.subr.mxu0 0.0
        %835 = vmatpush1.xpose.msra.mxu0 0.0
        %836 = vmatprep.subr.mxu0 0.0
        %837 = vmatpush1.xpose.msra.mxu0 0.0
        %838 = vmatprep.subr.mxu0 0.0
        %839 = vmatpush1.xpose.msra.mxu0 0.0
        %840 = vmatprep.subr.mxu0 0.0
        %841 = vmatpush1.xpose.msra.mxu0 0.0
        %842 = vmatprep.subr.mxu0 0.0
        %843 = vmatpush1.xpose.msra.mxu0 0.0
        %844 = vmatprep.subr.mxu0 0.0
        %845 = vmatpush1.xpose.msra.mxu0 0.0
        %846 = vmatprep.subr.mxu0 0.0
        %847 = vmatpush1.xpose.msra.mxu0 0.0
        %848 = vmatprep.subr.mxu0 0.0
        %849 = vmatpush1.xpose.msra.mxu0 0.0
        %850 = vmatprep.subr.mxu0 0.0
        %851 = vmatpush1.xpose.msra.mxu0 0.0
        %852 = vmatprep.subr.mxu0 0.0
        %853 = vmatpush1.xpose.msra.mxu0 0.0
        %854 = vmatprep.subr.mxu0 0.0
        %855 = vmatpush1.xpose.msra.mxu0 0.0
        %856 = vmatprep.subr.mxu0 0.0
        %857 = vmatpush1.xpose.msra.mxu0 0.0
        %858 = vmatprep.subr.mxu0 0.0
        %859 = vmatpush1.xpose.msra.mxu0 0.0
        %860 = vmatprep.subr.mxu0 0.0
        %861 = vmatpush1.xpose.msra.mxu0 0.0
        %862 = vmatprep.subr.mxu0 0.0
        %863 = vmatpush1.xpose.msra.mxu0 0.0
        %864 = vmatprep.subr.mxu0 0.0
        %865 = vmatpush1.xpose.msra.mxu0 0.0
        %866 = vmatprep.mubr.f32.mxu0 0.0
        %867 = vmatmul.mubr.f32.gmra.mrb[0].mxu0 %v770
        %v868 = vpop.f32.mrb[0].mxu0
        %v869 = vadd.f32 0.0, %v868
        %v870 = vpop.f32.mrb[0].mxu0
        %871 = vmatprep.mubr.f32.mxu0 0.0
        %872 = vmatmul.mubr.f32.gmra.mrb[0].mxu0 %v772
        %v873 = vpop.f32.mrb[0].mxu0
        %v874 = vadd.f32 0.0, %v873
        %v875 = vpop.f32.mrb[0].mxu0
        %876 = vmatprep.mubr.f32.mxu0 0.0
        %877 = vmatmul.mubr.f32.gmra.mrb[0].mxu0 %v774
        %v878 = vpop.f32.mrb[0].mxu0
        %v879 = vadd.f32 0.0, %v878
        %v880 = vpop.f32.mrb[0].mxu0
        %881 = vmatprep.mubr.f32.mxu0 0.0
        %882 = vmatmul.mubr.f32.gmra.mrb[0].mxu0 %v776
        %v883 = vpop.f32.mrb[0].mxu0
        %v884 = vadd.f32 0.0, %v883
        %v885 = vpop.f32.mrb[0].mxu0
        %886 = vmatprep.mubr.f32.mxu0 0.0
        %887 = vmatmul.mubr.f32.gmra.mrb[0].mxu0 %v778
        %v888 = vpop.f32.mrb[0].mxu0
        %v889 = vadd.f32 0.0, %v888
        %v890 = vpop.f32.mrb[0].mxu0
        %891 = vmatprep.mubr.f32.mxu0 0.0
        %892 = vmatmul.mubr.f32.gmra.mrb[0].mxu0 %v780
        %v893 = vpop.f32.mrb[0].mxu0
        %v894 = vadd.f32 0.0, %v893
        %v895 = vpop.f32.mrb[0].mxu0
        %896 = vmatprep.mubr.f32.mxu0 0.0
        %897 = vmatmul.mubr.f32.gmra.mrb[0].mxu0 %v782
        %v898 = vpop.f32.mrb[0].mxu0
        %v899 = vadd.f32 0.0, %v898
        %v900 = vpop.f32.mrb[0].mxu0
        %901 = vmatprep.mubr.f32.mxu0 0.0
        %902 = vmatmul.mubr.f32.gmra.mrb[0].mxu0 %v784
        %v903 = vpop.f32.mrb[0].mxu0
        %v904 = vadd.f32 0.0, %v903
        %v905 = vpop.f32.mrb[0].mxu0
        %906 = vdwg.mxu0
        %907 = vrot.lane.b32.xlu0 %v633, 96
        %v908 = vpop.permute.xlu0 %907
        %909 = vrot.lane.b32.xlu0 %v634, 96
        %v910 = vpop.permute.xlu0 %909
        %911 = vrot.lane.b32.xlu0 %v635, 96
        %v912 = vpop.permute.xlu0 %911
        %913 = vrot.lane.b32.xlu0 %v636, 96
        %v914 = vpop.permute.xlu0 %913
        %915 = vrot.lane.b32.xlu0 %v637, 96
        %v916 = vpop.permute.xlu0 %915
        %917 = vrot.lane.b32.xlu0 %v638, 96
        %v918 = vpop.permute.xlu0 %917
        %919 = vrot.lane.b32.xlu0 %v639, 96
        %v920 = vpop.permute.xlu0 %919
        %921 = vrot.lane.b32.xlu0 %v640, 96
        %v922 = vpop.permute.xlu0 %921
        %v923 = vsel %vm769, %v633, 0
        %v925 = vsel %vm769, %v634, 0
        %v927 = vsel %vm769, %v635, 0
        %v929 = vsel %vm769, %v636, 0
        %v931 = vsel %vm769, %v637, 0
        %v933 = vsel %vm769, %v638, 0
        %v935 = vsel %vm769, %v639, 0
        %v937 = vsel %vm769, %v640, 0
        %v939 = vsel %vm769, %v908, 0
        %v941 = vsel %vm769, %v910, 0
        %v943 = vsel %vm769, %v912, 0
        %v945 = vsel %vm769, %v914, 0
        %v947 = vsel %vm769, %v916, 0
        %v949 = vsel %vm769, %v918, 0
        %v951 = vsel %vm769, %v920, 0
        %v953 = vsel %vm769, %v922, 0
        %955 = vmatprep.subr.mxu0 0.0
        %956 = vmatpush1.xpose.msra.mxu0 %v939
        %957 = vmatprep.subr.mxu0 0.0
        %958 = vmatpush1.xpose.msra.mxu0 %v941
        %959 = vmatprep.subr.mxu0 0.0
        %960 = vmatpush1.xpose.msra.mxu0 %v943
        %961 = vmatprep.subr.mxu0 0.0
        %962 = vmatpush1.xpose.msra.mxu0 %v945
        %963 = vmatprep.subr.mxu0 0.0
        %964 = vmatpush1.xpose.msra.mxu0 %v947
        %965 = vmatprep.subr.mxu0 0.0
        %966 = vmatpush1.xpose.msra.mxu0 %v949
        %967 = vmatprep.subr.mxu0 0.0
        %968 = vmatpush1.xpose.msra.mxu0 %v951
        %969 = vmatprep.subr.mxu0 0.0
        %970 = vmatpush1.xpose.msra.mxu0 %v953
        %971 = vmatprep.subr.mxu0 0.0
        %972 = vmatpush1.xpose.msra.mxu0 0.0
        %973 = vmatprep.subr.mxu0 0.0
        %974 = vmatpush1.xpose.msra.mxu0 0.0
        %975 = vmatprep.subr.mxu0 0.0
        %976 = vmatpush1.xpose.msra.mxu0 0.0
        %977 = vmatprep.subr.mxu0 0.0
        %978 = vmatpush1.xpose.msra.mxu0 0.0
        %979 = vmatprep.subr.mxu0 0.0
        %980 = vmatpush1.xpose.msra.mxu0 0.0
        %981 = vmatprep.subr.mxu0 0.0
        %982 = vmatpush1.xpose.msra.mxu0 0.0
        %983 = vmatprep.subr.mxu0 0.0
        %984 = vmatpush1.xpose.msra.mxu0 0.0
        %985 = vmatprep.subr.mxu0 0.0
        %986 = vmatpush1.xpose.msra.mxu0 0.0
        %987 = vmatprep.subr.mxu0 0.0
        %988 = vmatpush1.xpose.msra.mxu0 0.0
        %989 = vmatprep.subr.mxu0 0.0
        %990 = vmatpush1.xpose.msra.mxu0 0.0
        %991 = vmatprep.subr.mxu0 0.0
        %992 = vmatpush1.xpose.msra.mxu0 0.0
        %993 = vmatprep.subr.mxu0 0.0
        %994 = vmatpush1.xpose.msra.mxu0 0.0
        %995 = vmatprep.subr.mxu0 0.0
        %996 = vmatpush1.xpose.msra.mxu0 0.0
        %997 = vmatprep.subr.mxu0 0.0
        %998 = vmatpush1.xpose.msra.mxu0 0.0
        %999 = vmatprep.subr.mxu0 0.0
        %1000 = vmatpush1.xpose.msra.mxu0 0.0
        %1001 = vmatprep.subr.mxu0 0.0
        %1002 = vmatpush1.xpose.msra.mxu0 0.0
        %1003 = vmatprep.subr.mxu0 0.0
        %1004 = vmatpush1.xpose.msra.mxu0 0.0
        %1005 = vmatprep.subr.mxu0 0.0
        %1006 = vmatpush1.xpose.msra.mxu0 0.0
        %1007 = vmatprep.subr.mxu0 0.0
        %1008 = vmatpush1.xpose.msra.mxu0 0.0
        %1009 = vmatprep.subr.mxu0 0.0
        %1010 = vmatpush1.xpose.msra.mxu0 0.0
        %1011 = vmatprep.subr.mxu0 0.0
        %1012 = vmatpush1.xpose.msra.mxu0 0.0
        %1013 = vmatprep.subr.mxu0 0.0
        %1014 = vmatpush1.xpose.msra.mxu0 0.0
        %1015 = vmatprep.subr.mxu0 0.0
        %1016 = vmatpush1.xpose.msra.mxu0 0.0
        %1017 = vmatprep.subr.mxu0 0.0
        %1018 = vmatpush1.xpose.msra.mxu0 0.0
        %1019 = vmatprep.mubr.f32.mxu0 0.0
        %1020 = vmatmul.mubr.f32.gmra.mrb[0].mxu0 %v923
        %v1021 = vpop.f32.mrb[0].mxu0
        %v1022 = vadd.f32 0.0, %v1021
        %v1023 = vpop.f32.mrb[0].mxu0
        %1024 = vmatprep.mubr.f32.mxu0 0.0
        %1025 = vmatmul.mubr.f32.gmra.mrb[0].mxu0 %v925
        %v1026 = vpop.f32.mrb[0].mxu0
        %v1027 = vadd.f32 0.0, %v1026
        %v1028 = vpop.f32.mrb[0].mxu0
        %1029 = vmatprep.mubr.f32.mxu0 0.0
        %1030 = vmatmul.mubr.f32.gmra.mrb[0].mxu0 %v927
        %v1031 = vpop.f32.mrb[0].mxu0
        %v1032 = vadd.f32 0.0, %v1031
        %v1033 = vpop.f32.mrb[0].mxu0
        %1034 = vmatprep.mubr.f32.mxu0 0.0
        %1035 = vmatmul.mubr.f32.gmra.mrb[0].mxu0 %v929
        %v1036 = vpop.f32.mrb[0].mxu0
        %v1037 = vadd.f32 0.0, %v1036
        %v1038 = vpop.f32.mrb[0].mxu0
        %1039 = vmatprep.mubr.f32.mxu0 0.0
        %1040 = vmatmul.mubr.f32.gmra.mrb[0].mxu0 %v931
        %v1041 = vpop.f32.mrb[0].mxu0
        %v1042 = vadd.f32 0.0, %v1041
        %v1043 = vpop.f32.mrb[0].mxu0
        %1044 = vmatprep.mubr.f32.mxu0 0.0
        %1045 = vmatmul.mubr.f32.gmra.mrb[0].mxu0 %v933
        %v1046 = vpop.f32.mrb[0].mxu0
        %v1047 = vadd.f32 0.0, %v1046
        %v1048 = vpop.f32.mrb[0].mxu0
        %1049 = vmatprep.mubr.f32.mxu0 0.0
        %1050 = vmatmul.mubr.f32.gmra.mrb[0].mxu0 %v935
        %v1051 = vpop.f32.mrb[0].mxu0
        %v1052 = vadd.f32 0.0, %v1051
        %v1053 = vpop.f32.mrb[0].mxu0
        %1054 = vmatprep.mubr.f32.mxu0 0.0
        %1055 = vmatmul.mubr.f32.gmra.mrb[0].mxu0 %v937
        %v1056 = vpop.f32.mrb[0].mxu0
        %v1057 = vadd.f32 0.0, %v1056
        %v1058 = vpop.f32.mrb[0].mxu0
        %1059 = vdwg.mxu0
        %1060 = vrot.lane.b32.xlu0 %v658, 96
        %v1061 = vpop.permute.xlu0 %1060
        %1062 = vrot.lane.b32.xlu0 %v660, 96
        %v1063 = vpop.permute.xlu0 %1062
        %1064 = vrot.lane.b32.xlu0 %v662, 96
        %v1065 = vpop.permute.xlu0 %1064
        %1066 = vrot.lane.b32.xlu0 %v664, 96
        %v1067 = vpop.permute.xlu0 %1066
        %1068 = vrot.lane.b32.xlu0 %v666, 96
        %v1069 = vpop.permute.xlu0 %1068
        %1070 = vrot.lane.b32.xlu0 %v668, 96
        %v1071 = vpop.permute.xlu0 %1070
        %1072 = vrot.lane.b32.xlu0 %v670, 96
        %v1073 = vpop.permute.xlu0 %1072
        %1074 = vrot.lane.b32.xlu0 %v672, 96
        %v1075 = vpop.permute.xlu0 %1074
        %v1076 = vsel %vm769, %v658, 0
        %v1078 = vsel %vm769, %v660, 0
        %v1080 = vsel %vm769, %v662, 0
        %v1082 = vsel %vm769, %v664, 0
        %v1084 = vsel %vm769, %v666, 0
        %v1086 = vsel %vm769, %v668, 0
        %v1088 = vsel %vm769, %v670, 0
        %v1090 = vsel %vm769, %v672, 0
        %v1092 = vsel %vm769, %v1061, 0
        %v1094 = vsel %vm769, %v1063, 0
        %v1096 = vsel %vm769, %v1065, 0
        %v1098 = vsel %vm769, %v1067, 0
        %v1100 = vsel %vm769, %v1069, 0
        %v1102 = vsel %vm769, %v1071, 0
        %v1104 = vsel %vm769, %v1073, 0
        %v1106 = vsel %vm769, %v1075, 0
        %1108 = vmatprep.subr.mxu0 0.0
        %1109 = vmatpush1.xpose.msra.mxu0 %v1092
        %1110 = vmatprep.subr.mxu0 0.0
        %1111 = vmatpush1.xpose.msra.mxu0 %v1094
        %1112 = vmatprep.subr.mxu0 0.0
        %1113 = vmatpush1.xpose.msra.mxu0 %v1096
        %1114 = vmatprep.subr.mxu0 0.0
        %1115 = vmatpush1.xpose.msra.mxu0 %v1098
        %1116 = vmatprep.subr.mxu0 0.0
        %1117 = vmatpush1.xpose.msra.mxu0 %v1100
        %1118 = vmatprep.subr.mxu0 0.0
        %1119 = vmatpush1.xpose.msra.mxu0 %v1102
        %1120 = vmatprep.subr.mxu0 0.0
        %1121 = vmatpush1.xpose.msra.mxu0 %v1104
        %1122 = vmatprep.subr.mxu0 0.0
        %1123 = vmatpush1.xpose.msra.mxu0 %v1106
        %1124 = vmatprep.subr.mxu0 0.0
        %1125 = vmatpush1.xpose.msra.mxu0 0.0
        %1126 = vmatprep.subr.mxu0 0.0
        %1127 = vmatpush1.xpose.msra.mxu0 0.0
        %1128 = vmatprep.subr.mxu0 0.0
        %1129 = vmatpush1.xpose.msra.mxu0 0.0
        %1130 = vmatprep.subr.mxu0 0.0
        %1131 = vmatpush1.xpose.msra.mxu0 0.0
        %1132 = vmatprep.subr.mxu0 0.0
        %1133 = vmatpush1.xpose.msra.mxu0 0.0
        %1134 = vmatprep.subr.mxu0 0.0
        %1135 = vmatpush1.xpose.msra.mxu0 0.0
        %1136 = vmatprep.subr.mxu0 0.0
        %1137 = vmatpush1.xpose.msra.mxu0 0.0
        %1138 = vmatprep.subr.mxu0 0.0
        %1139 = vmatpush1.xpose.msra.mxu0 0.0
        %1140 = vmatprep.subr.mxu0 0.0
        %1141 = vmatpush1.xpose.msra.mxu0 0.0
        %1142 = vmatprep.subr.mxu0 0.0
        %1143 = vmatpush1.xpose.msra.mxu0 0.0
        %1144 = vmatprep.subr.mxu0 0.0
        %1145 = vmatpush1.xpose.msra.mxu0 0.0
        %1146 = vmatprep.subr.mxu0 0.0
        %1147 = vmatpush1.xpose.msra.mxu0 0.0
        %1148 = vmatprep.subr.mxu0 0.0
        %1149 = vmatpush1.xpose.msra.mxu0 0.0
        %1150 = vmatprep.subr.mxu0 0.0
        %1151 = vmatpush1.xpose.msra.mxu0 0.0
        %1152 = vmatprep.subr.mxu0 0.0
        %1153 = vmatpush1.xpose.msra.mxu0 0.0
        %1154 = vmatprep.subr.mxu0 0.0
        %1155 = vmatpush1.xpose.msra.mxu0 0.0
        %1156 = vmatprep.subr.mxu0 0.0
        %1157 = vmatpush1.xpose.msra.mxu0 0.0
        %1158 = vmatprep.subr.mxu0 0.0
        %1159 = vmatpush1.xpose.msra.mxu0 0.0
        %1160 = vmatprep.subr.mxu0 0.0
        %1161 = vmatpush1.xpose.msra.mxu0 0.0
        %1162 = vmatprep.subr.mxu0 0.0
        %1163 = vmatpush1.xpose.msra.mxu0 0.0
        %1164 = vmatprep.subr.mxu0 0.0
        %1165 = vmatpush1.xpose.msra.mxu0 0.0
        %1166 = vmatprep.subr.mxu0 0.0
        %1167 = vmatpush1.xpose.msra.mxu0 0.0
        %1168 = vmatprep.subr.mxu0 0.0
        %1169 = vmatpush1.xpose.msra.mxu0 0.0
        %1170 = vmatprep.subr.mxu0 0.0
        %1171 = vmatpush1.xpose.msra.mxu0 0.0
        %1172 = vmatprep.mubr.f32.mxu0 0.0
        %1173 = vmatmul.mubr.f32.gmra.mrb[0].mxu0 %v1076
        %v1174 = vpop.f32.mrb[0].mxu0
        %v1175 = vadd.f32 0.0, %v1174
        %v1176 = vpop.f32.mrb[0].mxu0
        %1177 = vmatprep.mubr.f32.mxu0 0.0
        %1178 = vmatmul.mubr.f32.gmra.mrb[0].mxu0 %v1078
        %v1179 = vpop.f32.mrb[0].mxu0
        %v1180 = vadd.f32 0.0, %v1179
        %v1181 = vpop.f32.mrb[0].mxu0
        %1182 = vmatprep.mubr.f32.mxu0 0.0
        %1183 = vmatmul.mubr.f32.gmra.mrb[0].mxu0 %v1080
        %v1184 = vpop.f32.mrb[0].mxu0
        %v1185 = vadd.f32 0.0, %v1184
        %v1186 = vpop.f32.mrb[0].mxu0
        %1187 = vmatprep.mubr.f32.mxu0 0.0
        %1188 = vmatmul.mubr.f32.gmra.mrb[0].mxu0 %v1082
        %v1189 = vpop.f32.mrb[0].mxu0
        %v1190 = vadd.f32 0.0, %v1189
        %v1191 = vpop.f32.mrb[0].mxu0
        %1192 = vmatprep.mubr.f32.mxu0 0.0
        %1193 = vmatmul.mubr.f32.gmra.mrb[0].mxu0 %v1084
        %v1194 = vpop.f32.mrb[0].mxu0
        %v1195 = vadd.f32 0.0, %v1194
        %v1196 = vpop.f32.mrb[0].mxu0
        %1197 = vmatprep.mubr.f32.mxu0 0.0
        %1198 = vmatmul.mubr.f32.gmra.mrb[0].mxu0 %v1086
        %v1199 = vpop.f32.mrb[0].mxu0
        %v1200 = vadd.f32 0.0, %v1199
        %v1201 = vpop.f32.mrb[0].mxu0
        %1202 = vmatprep.mubr.f32.mxu0 0.0
        %1203 = vmatmul.mubr.f32.gmra.mrb[0].mxu0 %v1088
        %v1204 = vpop.f32.mrb[0].mxu0
        %v1205 = vadd.f32 0.0, %v1204
        %v1206 = vpop.f32.mrb[0].mxu0
        %1207 = vmatprep.mubr.f32.mxu0 0.0
        %1208 = vmatmul.mubr.f32.gmra.mrb[0].mxu0 %v1090
        %v1209 = vpop.f32.mrb[0].mxu0
        %v1210 = vadd.f32 0.0, %v1209
        %v1211 = vpop.f32.mrb[0].mxu0
        %1212 = vdwg.mxu0
        %1213 = vrot.lane.b32.xlu0 %v674, 96
        %v1214 = vpop.permute.xlu0 %1213
        %1215 = vrot.lane.b32.xlu0 %v676, 96
        %v1216 = vpop.permute.xlu0 %1215
        %1217 = vrot.lane.b32.xlu0 %v678, 96
        %v1218 = vpop.permute.xlu0 %1217
        %1219 = vrot.lane.b32.xlu0 %v680, 96
        %v1220 = vpop.permute.xlu0 %1219
        %1221 = vrot.lane.b32.xlu0 %v682, 96
        %v1222 = vpop.permute.xlu0 %1221
        %1223 = vrot.lane.b32.xlu0 %v684, 96
        %v1224 = vpop.permute.xlu0 %1223
        %1225 = vrot.lane.b32.xlu0 %v686, 96
        %v1226 = vpop.permute.xlu0 %1225
        %1227 = vrot.lane.b32.xlu0 %v688, 96
        %v1228 = vpop.permute.xlu0 %1227
        %v1229 = vsel %vm769, %v674, 0
        %v1231 = vsel %vm769, %v676, 0
        %v1233 = vsel %vm769, %v678, 0
        %v1235 = vsel %vm769, %v680, 0
        %v1237 = vsel %vm769, %v682, 0
        %v1239 = vsel %vm769, %v684, 0
        %v1241 = vsel %vm769, %v686, 0
        %v1243 = vsel %vm769, %v688, 0
        %v1245 = vsel %vm769, %v1214, 0
        %v1247 = vsel %vm769, %v1216, 0
        %v1249 = vsel %vm769, %v1218, 0
        %v1251 = vsel %vm769, %v1220, 0
        %v1253 = vsel %vm769, %v1222, 0
        %v1255 = vsel %vm769, %v1224, 0
        %v1257 = vsel %vm769, %v1226, 0
        %v1259 = vsel %vm769, %v1228, 0
        %1261 = vmatprep.subr.mxu0 0.0
        %1262 = vmatpush1.xpose.msra.mxu0 %v1245
        %1263 = vmatprep.subr.mxu0 0.0
        %1264 = vmatpush1.xpose.msra.mxu0 %v1247
        %1265 = vmatprep.subr.mxu0 0.0
        %1266 = vmatpush1.xpose.msra.mxu0 %v1249
        %1267 = vmatprep.subr.mxu0 0.0
        %1268 = vmatpush1.xpose.msra.mxu0 %v1251
        %1269 = vmatprep.subr.mxu0 0.0
        %1270 = vmatpush1.xpose.msra.mxu0 %v1253
        %1271 = vmatprep.subr.mxu0 0.0
        %1272 = vmatpush1.xpose.msra.mxu0 %v1255
        %1273 = vmatprep.subr.mxu0 0.0
        %1274 = vmatpush1.xpose.msra.mxu0 %v1257
        %1275 = vmatprep.subr.mxu0 0.0
        %1276 = vmatpush1.xpose.msra.mxu0 %v1259
        %1277 = vmatprep.subr.mxu0 0.0
        %1278 = vmatpush1.xpose.msra.mxu0 0.0
        %1279 = vmatprep.subr.mxu0 0.0
        %1280 = vmatpush1.xpose.msra.mxu0 0.0
        %1281 = vmatprep.subr.mxu0 0.0
        %1282 = vmatpush1.xpose.msra.mxu0 0.0
        %1283 = vmatprep.subr.mxu0 0.0
        %1284 = vmatpush1.xpose.msra.mxu0 0.0
        %1285 = vmatprep.subr.mxu0 0.0
        %1286 = vmatpush1.xpose.msra.mxu0 0.0
        %1287 = vmatprep.subr.mxu0 0.0
        %1288 = vmatpush1.xpose.msra.mxu0 0.0
        %1289 = vmatprep.subr.mxu0 0.0
        %1290 = vmatpush1.xpose.msra.mxu0 0.0
        %1291 = vmatprep.subr.mxu0 0.0
        %1292 = vmatpush1.xpose.msra.mxu0 0.0
        %1293 = vmatprep.subr.mxu0 0.0
        %1294 = vmatpush1.xpose.msra.mxu0 0.0
        %1295 = vmatprep.subr.mxu0 0.0
        %1296 = vmatpush1.xpose.msra.mxu0 0.0
        %1297 = vmatprep.subr.mxu0 0.0
        %1298 = vmatpush1.xpose.msra.mxu0 0.0
        %1299 = vmatprep.subr.mxu0 0.0
        %1300 = vmatpush1.xpose.msra.mxu0 0.0
        %1301 = vmatprep.subr.mxu0 0.0
        %1302 = vmatpush1.xpose.msra.mxu0 0.0
        %1303 = vmatprep.subr.mxu0 0.0
        %1304 = vmatpush1.xpose.msra.mxu0 0.0
        %1305 = vmatprep.subr.mxu0 0.0
        %1306 = vmatpush1.xpose.msra.mxu0 0.0
        %1307 = vmatprep.subr.mxu0 0.0
        %1308 = vmatpush1.xpose.msra.mxu0 0.0
        %1309 = vmatprep.subr.mxu0 0.0
        %1310 = vmatpush1.xpose.msra.mxu0 0.0
        %1311 = vmatprep.subr.mxu0 0.0
        %1312 = vmatpush1.xpose.msra.mxu0 0.0
        %1313 = vmatprep.subr.mxu0 0.0
        %1314 = vmatpush1.xpose.msra.mxu0 0.0
        %1315 = vmatprep.subr.mxu0 0.0
        %1316 = vmatpush1.xpose.msra.mxu0 0.0
        %1317 = vmatprep.subr.mxu0 0.0
        %1318 = vmatpush1.xpose.msra.mxu0 0.0
        %1319 = vmatprep.subr.mxu0 0.0
        %1320 = vmatpush1.xpose.msra.mxu0 0.0
        %1321 = vmatprep.subr.mxu0 0.0
        %1322 = vmatpush1.xpose.msra.mxu0 0.0
        %1323 = vmatprep.subr.mxu0 0.0
        %1324 = vmatpush1.xpose.msra.mxu0 0.0
        %1325 = vmatprep.mubr.f32.mxu0 0.0
        %1326 = vmatmul.mubr.f32.gmra.mrb[0].mxu0 %v1229
        %v1327 = vpop.f32.mrb[0].mxu0
        %v1328 = vadd.f32 0.0, %v1327
        %v1329 = vpop.f32.mrb[0].mxu0
        %1330 = vmatprep.mubr.f32.mxu0 0.0
        %1331 = vmatmul.mubr.f32.gmra.mrb[0].mxu0 %v1231
        %v1332 = vpop.f32.mrb[0].mxu0
        %v1333 = vadd.f32 0.0, %v1332
        %v1334 = vpop.f32.mrb[0].mxu0
        %1335 = vmatprep.mubr.f32.mxu0 0.0
        %1336 = vmatmul.mubr.f32.gmra.mrb[0].mxu0 %v1233
        %v1337 = vpop.f32.mrb[0].mxu0
        %v1338 = vadd.f32 0.0, %v1337
        %v1339 = vpop.f32.mrb[0].mxu0
        %1340 = vmatprep.mubr.f32.mxu0 0.0
        %1341 = vmatmul.mubr.f32.gmra.mrb[0].mxu0 %v1235
        %v1342 = vpop.f32.mrb[0].mxu0
        %v1343 = vadd.f32 0.0, %v1342
        %v1344 = vpop.f32.mrb[0].mxu0
        %1345 = vmatprep.mubr.f32.mxu0 0.0
        %1346 = vmatmul.mubr.f32.gmra.mrb[0].mxu0 %v1237
        %v1347 = vpop.f32.mrb[0].mxu0
        %v1348 = vadd.f32 0.0, %v1347
        %v1349 = vpop.f32.mrb[0].mxu0
        %1350 = vmatprep.mubr.f32.mxu0 0.0
        %1351 = vmatmul.mubr.f32.gmra.mrb[0].mxu0 %v1239
        %v1352 = vpop.f32.mrb[0].mxu0
        %v1353 = vadd.f32 0.0, %v1352
        %v1354 = vpop.f32.mrb[0].mxu0
        %1355 = vmatprep.mubr.f32.mxu0 0.0
        %1356 = vmatmul.mubr.f32.gmra.mrb[0].mxu0 %v1241
        %v1357 = vpop.f32.mrb[0].mxu0
        %v1358 = vadd.f32 0.0, %v1357
        %v1359 = vpop.f32.mrb[0].mxu0
        %1360 = vmatprep.mubr.f32.mxu0 0.0
        %1361 = vmatmul.mubr.f32.gmra.mrb[0].mxu0 %v1243
        %v1362 = vpop.f32.mrb[0].mxu0
        %v1363 = vadd.f32 0.0, %v1362
        %v1364 = vpop.f32.mrb[0].mxu0
        %1365 = vdwg.mxu0
        %1366 = vrot.lane.b32.xlu0 %v690, 96
        %v1367 = vpop.permute.xlu0 %1366
        %1368 = vrot.lane.b32.xlu0 %v692, 96
        %v1369 = vpop.permute.xlu0 %1368
        %1370 = vrot.lane.b32.xlu0 %v694, 96
        %v1371 = vpop.permute.xlu0 %1370
        %1372 = vrot.lane.b32.xlu0 %v696, 96
        %v1373 = vpop.permute.xlu0 %1372
        %1374 = vrot.lane.b32.xlu0 %v698, 96
        %v1375 = vpop.permute.xlu0 %1374
        %1376 = vrot.lane.b32.xlu0 %v700, 96
        %v1377 = vpop.permute.xlu0 %1376
        %1378 = vrot.lane.b32.xlu0 %v702, 96
        %v1379 = vpop.permute.xlu0 %1378
        %1380 = vrot.lane.b32.xlu0 %v704, 96
        %v1381 = vpop.permute.xlu0 %1380
        %v1382 = vsel %vm769, %v690, 0
        %v1384 = vsel %vm769, %v692, 0
        %v1386 = vsel %vm769, %v694, 0
        %v1388 = vsel %vm769, %v696, 0
        %v1390 = vsel %vm769, %v698, 0
        %v1392 = vsel %vm769, %v700, 0
        %v1394 = vsel %vm769, %v702, 0
        %v1396 = vsel %vm769, %v704, 0
        %v1398 = vsel %vm769, %v1367, 0
        %v1400 = vsel %vm769, %v1369, 0
        %v1402 = vsel %vm769, %v1371, 0
        %v1404 = vsel %vm769, %v1373, 0
        %v1406 = vsel %vm769, %v1375, 0
        %v1408 = vsel %vm769, %v1377, 0
        %v1410 = vsel %vm769, %v1379, 0
        %v1412 = vsel %vm769, %v1381, 0
        %1414 = vmatprep.subr.mxu0 0.0
        %1415 = vmatpush1.xpose.msra.mxu0 %v1398
        %1416 = vmatprep.subr.mxu0 0.0
        %1417 = vmatpush1.xpose.msra.mxu0 %v1400
        %1418 = vmatprep.subr.mxu0 0.0
        %1419 = vmatpush1.xpose.msra.mxu0 %v1402
        %1420 = vmatprep.subr.mxu0 0.0
        %1421 = vmatpush1.xpose.msra.mxu0 %v1404
        %1422 = vmatprep.subr.mxu0 0.0
        %1423 = vmatpush1.xpose.msra.mxu0 %v1406
        %1424 = vmatprep.subr.mxu0 0.0
        %1425 = vmatpush1.xpose.msra.mxu0 %v1408
        %1426 = vmatprep.subr.mxu0 0.0
        %1427 = vmatpush1.xpose.msra.mxu0 %v1410
        %1428 = vmatprep.subr.mxu0 0.0
        %1429 = vmatpush1.xpose.msra.mxu0 %v1412
        %1430 = vmatprep.subr.mxu0 0.0
        %1431 = vmatpush1.xpose.msra.mxu0 0.0
        %1432 = vmatprep.subr.mxu0 0.0
        %1433 = vmatpush1.xpose.msra.mxu0 0.0
        %1434 = vmatprep.subr.mxu0 0.0
        %1435 = vmatpush1.xpose.msra.mxu0 0.0
        %1436 = vmatprep.subr.mxu0 0.0
        %1437 = vmatpush1.xpose.msra.mxu0 0.0
        %1438 = vmatprep.subr.mxu0 0.0
        %1439 = vmatpush1.xpose.msra.mxu0 0.0
        %1440 = vmatprep.subr.mxu0 0.0
        %1441 = vmatpush1.xpose.msra.mxu0 0.0
        %1442 = vmatprep.subr.mxu0 0.0
        %1443 = vmatpush1.xpose.msra.mxu0 0.0
        %1444 = vmatprep.subr.mxu0 0.0
        %1445 = vmatpush1.xpose.msra.mxu0 0.0
        %1446 = vmatprep.subr.mxu0 0.0
        %1447 = vmatpush1.xpose.msra.mxu0 0.0
        %1448 = vmatprep.subr.mxu0 0.0
        %1449 = vmatpush1.xpose.msra.mxu0 0.0
        %1450 = vmatprep.subr.mxu0 0.0
        %1451 = vmatpush1.xpose.msra.mxu0 0.0
        %1452 = vmatprep.subr.mxu0 0.0
        %1453 = vmatpush1.xpose.msra.mxu0 0.0
        %1454 = vmatprep.subr.mxu0 0.0
        %1455 = vmatpush1.xpose.msra.mxu0 0.0
        %1456 = vmatprep.subr.mxu0 0.0
        %1457 = vmatpush1.xpose.msra.mxu0 0.0
        %1458 = vmatprep.subr.mxu0 0.0
        %1459 = vmatpush1.xpose.msra.mxu0 0.0
        %1460 = vmatprep.subr.mxu0 0.0
        %1461 = vmatpush1.xpose.msra.mxu0 0.0
        %1462 = vmatprep.subr.mxu0 0.0
        %1463 = vmatpush1.xpose.msra.mxu0 0.0
        %1464 = vmatprep.subr.mxu0 0.0
        %1465 = vmatpush1.xpose.msra.mxu0 0.0
        %1466 = vmatprep.subr.mxu0 0.0
        %1467 = vmatpush1.xpose.msra.mxu0 0.0
        %1468 = vmatprep.subr.mxu0 0.0
        %1469 = vmatpush1.xpose.msra.mxu0 0.0
        %1470 = vmatprep.subr.mxu0 0.0
        %1471 = vmatpush1.xpose.msra.mxu0 0.0
        %1472 = vmatprep.subr.mxu0 0.0
        %1473 = vmatpush1.xpose.msra.mxu0 0.0
        %1474 = vmatprep.subr.mxu0 0.0
        %1475 = vmatpush1.xpose.msra.mxu0 0.0
        %1476 = vmatprep.subr.mxu0 0.0
        %1477 = vmatpush1.xpose.msra.mxu0 0.0
        %1478 = vmatprep.mubr.f32.mxu0 0.0
        %1479 = vmatmul.mubr.f32.gmra.mrb[0].mxu0 %v1382
        %v1480 = vpop.f32.mrb[0].mxu0
        %v1481 = vadd.f32 0.0, %v1480
        %v1482 = vpop.f32.mrb[0].mxu0
        %1483 = vmatprep.mubr.f32.mxu0 0.0
        %1484 = vmatmul.mubr.f32.gmra.mrb[0].mxu0 %v1384
        %v1485 = vpop.f32.mrb[0].mxu0
        %v1486 = vadd.f32 0.0, %v1485
        %v1487 = vpop.f32.mrb[0].mxu0
        %1488 = vmatprep.mubr.f32.mxu0 0.0
        %1489 = vmatmul.mubr.f32.gmra.mrb[0].mxu0 %v1386
        %v1490 = vpop.f32.mrb[0].mxu0
        %v1491 = vadd.f32 0.0, %v1490
        %v1492 = vpop.f32.mrb[0].mxu0
        %1493 = vmatprep.mubr.f32.mxu0 0.0
        %1494 = vmatmul.mubr.f32.gmra.mrb[0].mxu0 %v1388
        %v1495 = vpop.f32.mrb[0].mxu0
        %v1496 = vadd.f32 0.0, %v1495
        %v1497 = vpop.f32.mrb[0].mxu0
        %1498 = vmatprep.mubr.f32.mxu0 0.0
        %1499 = vmatmul.mubr.f32.gmra.mrb[0].mxu0 %v1390
        %v1500 = vpop.f32.mrb[0].mxu0
        %v1501 = vadd.f32 0.0, %v1500
        %v1502 = vpop.f32.mrb[0].mxu0
        %1503 = vmatprep.mubr.f32.mxu0 0.0
        %1504 = vmatmul.mubr.f32.gmra.mrb[0].mxu0 %v1392
        %v1505 = vpop.f32.mrb[0].mxu0
        %v1506 = vadd.f32 0.0, %v1505
        %v1507 = vpop.f32.mrb[0].mxu0
        %1508 = vmatprep.mubr.f32.mxu0 0.0
        %1509 = vmatmul.mubr.f32.gmra.mrb[0].mxu0 %v1394
        %v1510 = vpop.f32.mrb[0].mxu0
        %v1511 = vadd.f32 0.0, %v1510
        %v1512 = vpop.f32.mrb[0].mxu0
        %1513 = vmatprep.mubr.f32.mxu0 0.0
        %1514 = vmatmul.mubr.f32.gmra.mrb[0].mxu0 %v1396
        %v1515 = vpop.f32.mrb[0].mxu0
        %v1516 = vadd.f32 0.0, %v1515
        %v1517 = vpop.f32.mrb[0].mxu0
        %1518 = vdwg.mxu0
        %1519 = vrot.lane.b32.xlu0 %v706, 96
        %v1520 = vpop.permute.xlu0 %1519
        %1521 = vrot.lane.b32.xlu0 %v708, 96
        %v1522 = vpop.permute.xlu0 %1521
        %1523 = vrot.lane.b32.xlu0 %v710, 96
        %v1524 = vpop.permute.xlu0 %1523
        %1525 = vrot.lane.b32.xlu0 %v712, 96
        %v1526 = vpop.permute.xlu0 %1525
        %1527 = vrot.lane.b32.xlu0 %v714, 96
        %v1528 = vpop.permute.xlu0 %1527
        %1529 = vrot.lane.b32.xlu0 %v716, 96
        %v1530 = vpop.permute.xlu0 %1529
        %1531 = vrot.lane.b32.xlu0 %v718, 96
        %v1532 = vpop.permute.xlu0 %1531
        %1533 = vrot.lane.b32.xlu0 %v720, 96
        %v1534 = vpop.permute.xlu0 %1533
        %v1535 = vsel %vm769, %v706, 0
        %v1537 = vsel %vm769, %v708, 0
        %v1539 = vsel %vm769, %v710, 0
        %v1541 = vsel %vm769, %v712, 0
        %v1543 = vsel %vm769, %v714, 0
        %v1545 = vsel %vm769, %v716, 0
        %v1547 = vsel %vm769, %v718, 0
        %v1549 = vsel %vm769, %v720, 0
        %v1551 = vsel %vm769, %v1520, 0
        %v1553 = vsel %vm769, %v1522, 0
        %v1555 = vsel %vm769, %v1524, 0
        %v1557 = vsel %vm769, %v1526, 0
        %v1559 = vsel %vm769, %v1528, 0
        %v1561 = vsel %vm769, %v1530, 0
        %v1563 = vsel %vm769, %v1532, 0
        %v1565 = vsel %vm769, %v1534, 0
        %1567 = vmatprep.subr.mxu0 0.0
        %1568 = vmatpush1.xpose.msra.mxu0 %v1551
        %1569 = vmatprep.subr.mxu0 0.0
        %1570 = vmatpush1.xpose.msra.mxu0 %v1553
        %1571 = vmatprep.subr.mxu0 0.0
        %1572 = vmatpush1.xpose.msra.mxu0 %v1555
        %1573 = vmatprep.subr.mxu0 0.0
        %1574 = vmatpush1.xpose.msra.mxu0 %v1557
        %1575 = vmatprep.subr.mxu0 0.0
        %1576 = vmatpush1.xpose.msra.mxu0 %v1559
        %1577 = vmatprep.subr.mxu0 0.0
        %1578 = vmatpush1.xpose.msra.mxu0 %v1561
        %1579 = vmatprep.subr.mxu0 0.0
        %1580 = vmatpush1.xpose.msra.mxu0 %v1563
        %1581 = vmatprep.subr.mxu0 0.0
        %1582 = vmatpush1.xpose.msra.mxu0 %v1565
        %1583 = vmatprep.subr.mxu0 0.0
        %1584 = vmatpush1.xpose.msra.mxu0 0.0
        %1585 = vmatprep.subr.mxu0 0.0
        %1586 = vmatpush1.xpose.msra.mxu0 0.0
        %1587 = vmatprep.subr.mxu0 0.0
        %1588 = vmatpush1.xpose.msra.mxu0 0.0
        %1589 = vmatprep.subr.mxu0 0.0
        %1590 = vmatpush1.xpose.msra.mxu0 0.0
        %1591 = vmatprep.subr.mxu0 0.0
        %1592 = vmatpush1.xpose.msra.mxu0 0.0
        %1593 = vmatprep.subr.mxu0 0.0
        %1594 = vmatpush1.xpose.msra.mxu0 0.0
        %1595 = vmatprep.subr.mxu0 0.0
        %1596 = vmatpush1.xpose.msra.mxu0 0.0
        %1597 = vmatprep.subr.mxu0 0.0
        %1598 = vmatpush1.xpose.msra.mxu0 0.0
        %1599 = vmatprep.subr.mxu0 0.0
        %1600 = vmatpush1.xpose.msra.mxu0 0.0
        %1601 = vmatprep.subr.mxu0 0.0
        %1602 = vmatpush1.xpose.msra.mxu0 0.0
        %1603 = vmatprep.subr.mxu0 0.0
        %1604 = vmatpush1.xpose.msra.mxu0 0.0
        %1605 = vmatprep.subr.mxu0 0.0
        %1606 = vmatpush1.xpose.msra.mxu0 0.0
        %1607 = vmatprep.subr.mxu0 0.0
        %1608 = vmatpush1.xpose.msra.mxu0 0.0
        %1609 = vmatprep.subr.mxu0 0.0
        %1610 = vmatpush1.xpose.msra.mxu0 0.0
        %1611 = vmatprep.subr.mxu0 0.0
        %1612 = vmatpush1.xpose.msra.mxu0 0.0
        %1613 = vmatprep.subr.mxu0 0.0
        %1614 = vmatpush1.xpose.msra.mxu0 0.0
        %1615 = vmatprep.subr.mxu0 0.0
        %1616 = vmatpush1.xpose.msra.mxu0 0.0
        %1617 = vmatprep.subr.mxu0 0.0
        %1618 = vmatpush1.xpose.msra.mxu0 0.0
        %1619 = vmatprep.subr.mxu0 0.0
        %1620 = vmatpush1.xpose.msra.mxu0 0.0
        %1621 = vmatprep.subr.mxu0 0.0
        %1622 = vmatpush1.xpose.msra.mxu0 0.0
        %1623 = vmatprep.subr.mxu0 0.0
        %1624 = vmatpush1.xpose.msra.mxu0 0.0
        %1625 = vmatprep.subr.mxu0 0.0
        %1626 = vmatpush1.xpose.msra.mxu0 0.0
        %1627 = vmatprep.subr.mxu0 0.0
        %1628 = vmatpush1.xpose.msra.mxu0 0.0
        %1629 = vmatprep.subr.mxu0 0.0
        %1630 = vmatpush1.xpose.msra.mxu0 0.0
        %1631 = vmatprep.mubr.f32.mxu0 0.0
        %1632 = vmatmul.mubr.f32.gmra.mrb[0].mxu0 %v1535
        %v1633 = vpop.f32.mrb[0].mxu0
        %v1634 = vadd.f32 0.0, %v1633
        %v1635 = vpop.f32.mrb[0].mxu0
        %1636 = vmatprep.mubr.f32.mxu0 0.0
        %1637 = vmatmul.mubr.f32.gmra.mrb[0].mxu0 %v1537
        %v1638 = vpop.f32.mrb[0].mxu0
        %v1639 = vadd.f32 0.0, %v1638
        %v1640 = vpop.f32.mrb[0].mxu0
        %1641 = vmatprep.mubr.f32.mxu0 0.0
        %1642 = vmatmul.mubr.f32.gmra.mrb[0].mxu0 %v1539
        %v1643 = vpop.f32.mrb[0].mxu0
        %v1644 = vadd.f32 0.0, %v1643
        %v1645 = vpop.f32.mrb[0].mxu0
        %1646 = vmatprep.mubr.f32.mxu0 0.0
        %1647 = vmatmul.mubr.f32.gmra.mrb[0].mxu0 %v1541
        %v1648 = vpop.f32.mrb[0].mxu0
        %v1649 = vadd.f32 0.0, %v1648
        %v1650 = vpop.f32.mrb[0].mxu0
        %1651 = vmatprep.mubr.f32.mxu0 0.0
        %1652 = vmatmul.mubr.f32.gmra.mrb[0].mxu0 %v1543
        %v1653 = vpop.f32.mrb[0].mxu0
        %v1654 = vadd.f32 0.0, %v1653
        %v1655 = vpop.f32.mrb[0].mxu0
        %1656 = vmatprep.mubr.f32.mxu0 0.0
        %1657 = vmatmul.mubr.f32.gmra.mrb[0].mxu0 %v1545
        %v1658 = vpop.f32.mrb[0].mxu0
        %v1659 = vadd.f32 0.0, %v1658
        %v1660 = vpop.f32.mrb[0].mxu0
        %1661 = vmatprep.mubr.f32.mxu0 0.0
        %1662 = vmatmul.mubr.f32.gmra.mrb[0].mxu0 %v1547
        %v1663 = vpop.f32.mrb[0].mxu0
        %v1664 = vadd.f32 0.0, %v1663
        %v1665 = vpop.f32.mrb[0].mxu0
        %1666 = vmatprep.mubr.f32.mxu0 0.0
        %1667 = vmatmul.mubr.f32.gmra.mrb[0].mxu0 %v1549
        %v1668 = vpop.f32.mrb[0].mxu0
        %v1669 = vadd.f32 0.0, %v1668
        %v1670 = vpop.f32.mrb[0].mxu0
        %1671 = vdwg.mxu0
        %1672 = vrot.lane.b32.xlu0 %v722, 96
        %v1673 = vpop.permute.xlu0 %1672
        %1674 = vrot.lane.b32.xlu0 %v724, 96
        %v1675 = vpop.permute.xlu0 %1674
        %1676 = vrot.lane.b32.xlu0 %v726, 96
        %v1677 = vpop.permute.xlu0 %1676
        %1678 = vrot.lane.b32.xlu0 %v728, 96
        %v1679 = vpop.permute.xlu0 %1678
        %1680 = vrot.lane.b32.xlu0 %v730, 96
        %v1681 = vpop.permute.xlu0 %1680
        %1682 = vrot.lane.b32.xlu0 %v732, 96
        %v1683 = vpop.permute.xlu0 %1682
        %1684 = vrot.lane.b32.xlu0 %v734, 96
        %v1685 = vpop.permute.xlu0 %1684
        %1686 = vrot.lane.b32.xlu0 %v736, 96
        %v1687 = vpop.permute.xlu0 %1686
        %v1688 = vsel %vm769, %v722, 0
        %v1690 = vsel %vm769, %v724, 0
        %v1692 = vsel %vm769, %v726, 0
        %v1694 = vsel %vm769, %v728, 0
        %v1696 = vsel %vm769, %v730, 0
        %v1698 = vsel %vm769, %v732, 0
        %v1700 = vsel %vm769, %v734, 0
        %v1702 = vsel %vm769, %v736, 0
        %v1704 = vsel %vm769, %v1673, 0
        %v1706 = vsel %vm769, %v1675, 0
        %v1708 = vsel %vm769, %v1677, 0
        %v1710 = vsel %vm769, %v1679, 0
        %v1712 = vsel %vm769, %v1681, 0
        %v1714 = vsel %vm769, %v1683, 0
        %v1716 = vsel %vm769, %v1685, 0
        %v1718 = vsel %vm769, %v1687, 0
        %1720 = vmatprep.subr.mxu0 0.0
        %1721 = vmatpush1.xpose.msra.mxu0 %v1704
        %1722 = vmatprep.subr.mxu0 0.0
        %1723 = vmatpush1.xpose.msra.mxu0 %v1706
        %1724 = vmatprep.subr.mxu0 0.0
        %1725 = vmatpush1.xpose.msra.mxu0 %v1708
        %1726 = vmatprep.subr.mxu0 0.0
        %1727 = vmatpush1.xpose.msra.mxu0 %v1710
        %1728 = vmatprep.subr.mxu0 0.0
        %1729 = vmatpush1.xpose.msra.mxu0 %v1712
        %1730 = vmatprep.subr.mxu0 0.0
        %1731 = vmatpush1.xpose.msra.mxu0 %v1714
        %1732 = vmatprep.subr.mxu0 0.0
        %1733 = vmatpush1.xpose.msra.mxu0 %v1716
        %1734 = vmatprep.subr.mxu0 0.0
        %1735 = vmatpush1.xpose.msra.mxu0 %v1718
        %1736 = vmatprep.subr.mxu0 0.0
        %1737 = vmatpush1.xpose.msra.mxu0 0.0
        %1738 = vmatprep.subr.mxu0 0.0
        %1739 = vmatpush1.xpose.msra.mxu0 0.0
        %1740 = vmatprep.subr.mxu0 0.0
        %1741 = vmatpush1.xpose.msra.mxu0 0.0
        %1742 = vmatprep.subr.mxu0 0.0
        %1743 = vmatpush1.xpose.msra.mxu0 0.0
        %1744 = vmatprep.subr.mxu0 0.0
        %1745 = vmatpush1.xpose.msra.mxu0 0.0
        %1746 = vmatprep.subr.mxu0 0.0
        %1747 = vmatpush1.xpose.msra.mxu0 0.0
        %1748 = vmatprep.subr.mxu0 0.0
        %1749 = vmatpush1.xpose.msra.mxu0 0.0
        %1750 = vmatprep.subr.mxu0 0.0
        %1751 = vmatpush1.xpose.msra.mxu0 0.0
        %1752 = vmatprep.subr.mxu0 0.0
        %1753 = vmatpush1.xpose.msra.mxu0 0.0
        %1754 = vmatprep.subr.mxu0 0.0
        %1755 = vmatpush1.xpose.msra.mxu0 0.0
        %1756 = vmatprep.subr.mxu0 0.0
        %1757 = vmatpush1.xpose.msra.mxu0 0.0
        %1758 = vmatprep.subr.mxu0 0.0
        %1759 = vmatpush1.xpose.msra.mxu0 0.0
        %1760 = vmatprep.subr.mxu0 0.0
        %1761 = vmatpush1.xpose.msra.mxu0 0.0
        %1762 = vmatprep.subr.mxu0 0.0
        %1763 = vmatpush1.xpose.msra.mxu0 0.0
        %1764 = vmatprep.subr.mxu0 0.0
        %1765 = vmatpush1.xpose.msra.mxu0 0.0
        %1766 = vmatprep.subr.mxu0 0.0
        %1767 = vmatpush1.xpose.msra.mxu0 0.0
        %1768 = vmatprep.subr.mxu0 0.0
        %1769 = vmatpush1.xpose.msra.mxu0 0.0
        %1770 = vmatprep.subr.mxu0 0.0
        %1771 = vmatpush1.xpose.msra.mxu0 0.0
        %1772 = vmatprep.subr.mxu0 0.0
        %1773 = vmatpush1.xpose.msra.mxu0 0.0
        %1774 = vmatprep.subr.mxu0 0.0
        %1775 = vmatpush1.xpose.msra.mxu0 0.0
        %1776 = vmatprep.subr.mxu0 0.0
        %1777 = vmatpush1.xpose.msra.mxu0 0.0
        %1778 = vmatprep.subr.mxu0 0.0
        %1779 = vmatpush1.xpose.msra.mxu0 0.0
        %1780 = vmatprep.subr.mxu0 0.0
        %1781 = vmatpush1.xpose.msra.mxu0 0.0
        %1782 = vmatprep.subr.mxu0 0.0
        %1783 = vmatpush1.xpose.msra.mxu0 0.0
        %1784 = vmatprep.mubr.f32.mxu0 0.0
        %1785 = vmatmul.mubr.f32.gmra.mrb[0].mxu0 %v1688
        %v1786 = vpop.f32.mrb[0].mxu0
        %v1787 = vadd.f32 0.0, %v1786
        %v1788 = vpop.f32.mrb[0].mxu0
        %1789 = vmatprep.mubr.f32.mxu0 0.0
        %1790 = vmatmul.mubr.f32.gmra.mrb[0].mxu0 %v1690
        %v1791 = vpop.f32.mrb[0].mxu0
        %v1792 = vadd.f32 0.0, %v1791
        %v1793 = vpop.f32.mrb[0].mxu0
        %1794 = vmatprep.mubr.f32.mxu0 0.0
        %1795 = vmatmul.mubr.f32.gmra.mrb[0].mxu0 %v1692
        %v1796 = vpop.f32.mrb[0].mxu0
        %v1797 = vadd.f32 0.0, %v1796
        %v1798 = vpop.f32.mrb[0].mxu0
        %1799 = vmatprep.mubr.f32.mxu0 0.0
        %1800 = vmatmul.mubr.f32.gmra.mrb[0].mxu0 %v1694
        %v1801 = vpop.f32.mrb[0].mxu0
        %v1802 = vadd.f32 0.0, %v1801
        %v1803 = vpop.f32.mrb[0].mxu0
        %1804 = vmatprep.mubr.f32.mxu0 0.0
        %1805 = vmatmul.mubr.f32.gmra.mrb[0].mxu0 %v1696
        %v1806 = vpop.f32.mrb[0].mxu0
        %v1807 = vadd.f32 0.0, %v1806
        %v1808 = vpop.f32.mrb[0].mxu0
        %1809 = vmatprep.mubr.f32.mxu0 0.0
        %1810 = vmatmul.mubr.f32.gmra.mrb[0].mxu0 %v1698
        %v1811 = vpop.f32.mrb[0].mxu0
        %v1812 = vadd.f32 0.0, %v1811
        %v1813 = vpop.f32.mrb[0].mxu0
        %1814 = vmatprep.mubr.f32.mxu0 0.0
        %1815 = vmatmul.mubr.f32.gmra.mrb[0].mxu0 %v1700
        %v1816 = vpop.f32.mrb[0].mxu0
        %v1817 = vadd.f32 0.0, %v1816
        %v1818 = vpop.f32.mrb[0].mxu0
        %1819 = vmatprep.mubr.f32.mxu0 0.0
        %1820 = vmatmul.mubr.f32.gmra.mrb[0].mxu0 %v1702
        %v1821 = vpop.f32.mrb[0].mxu0
        %v1822 = vadd.f32 0.0, %v1821
        %v1823 = vpop.f32.mrb[0].mxu0
        %1824 = vdwg.mxu0
        %1825 = vrot.lane.b32.xlu0 %v738, 96
        %v1826 = vpop.permute.xlu0 %1825
        %1827 = vrot.lane.b32.xlu0 %v740, 96
        %v1828 = vpop.permute.xlu0 %1827
        %1829 = vrot.lane.b32.xlu0 %v742, 96
        %v1830 = vpop.permute.xlu0 %1829
        %1831 = vrot.lane.b32.xlu0 %v744, 96
        %v1832 = vpop.permute.xlu0 %1831
        %1833 = vrot.lane.b32.xlu0 %v746, 96
        %v1834 = vpop.permute.xlu0 %1833
        %1835 = vrot.lane.b32.xlu0 %v748, 96
        %v1836 = vpop.permute.xlu0 %1835
        %1837 = vrot.lane.b32.xlu0 %v750, 96
        %v1838 = vpop.permute.xlu0 %1837
        %1839 = vrot.lane.b32.xlu0 %v752, 96
        %v1840 = vpop.permute.xlu0 %1839
        %v1841 = vsel %vm769, %v738, 0
        %v1843 = vsel %vm769, %v740, 0
        %v1845 = vsel %vm769, %v742, 0
        %v1847 = vsel %vm769, %v744, 0
        %v1849 = vsel %vm769, %v746, 0
        %v1851 = vsel %vm769, %v748, 0
        %v1853 = vsel %vm769, %v750, 0
        %v1855 = vsel %vm769, %v752, 0
        %v1857 = vsel %vm769, %v1826, 0
        %v1859 = vsel %vm769, %v1828, 0
        %v1861 = vsel %vm769, %v1830, 0
        %v1863 = vsel %vm769, %v1832, 0
        %v1865 = vsel %vm769, %v1834, 0
        %v1867 = vsel %vm769, %v1836, 0
        %v1869 = vsel %vm769, %v1838, 0
        %v1871 = vsel %vm769, %v1840, 0
        %1873 = vmatprep.subr.mxu0 0.0
        %1874 = vmatpush1.xpose.msra.mxu0 %v1857
        %1875 = vmatprep.subr.mxu0 0.0
        %1876 = vmatpush1.xpose.msra.mxu0 %v1859
        %1877 = vmatprep.subr.mxu0 0.0
        %1878 = vmatpush1.xpose.msra.mxu0 %v1861
        %1879 = vmatprep.subr.mxu0 0.0
        %1880 = vmatpush1.xpose.msra.mxu0 %v1863
        %1881 = vmatprep.subr.mxu0 0.0
        %1882 = vmatpush1.xpose.msra.mxu0 %v1865
        %1883 = vmatprep.subr.mxu0 0.0
        %1884 = vmatpush1.xpose.msra.mxu0 %v1867
        %1885 = vmatprep.subr.mxu0 0.0
        %1886 = vmatpush1.xpose.msra.mxu0 %v1869
        %1887 = vmatprep.subr.mxu0 0.0
        %1888 = vmatpush1.xpose.msra.mxu0 %v1871
        %1889 = vmatprep.subr.mxu0 0.0
        %1890 = vmatpush1.xpose.msra.mxu0 0.0
        %1891 = vmatprep.subr.mxu0 0.0
        %1892 = vmatpush1.xpose.msra.mxu0 0.0
        %1893 = vmatprep.subr.mxu0 0.0
        %1894 = vmatpush1.xpose.msra.mxu0 0.0
        %1895 = vmatprep.subr.mxu0 0.0
        %1896 = vmatpush1.xpose.msra.mxu0 0.0
        %1897 = vmatprep.subr.mxu0 0.0
        %1898 = vmatpush1.xpose.msra.mxu0 0.0
        %1899 = vmatprep.subr.mxu0 0.0
        %1900 = vmatpush1.xpose.msra.mxu0 0.0
        %1901 = vmatprep.subr.mxu0 0.0
        %1902 = vmatpush1.xpose.msra.mxu0 0.0
        %1903 = vmatprep.subr.mxu0 0.0
        %1904 = vmatpush1.xpose.msra.mxu0 0.0
        %1905 = vmatprep.subr.mxu0 0.0
        %1906 = vmatpush1.xpose.msra.mxu0 0.0
        %1907 = vmatprep.subr.mxu0 0.0
        %1908 = vmatpush1.xpose.msra.mxu0 0.0
        %1909 = vmatprep.subr.mxu0 0.0
        %1910 = vmatpush1.xpose.msra.mxu0 0.0
        %1911 = vmatprep.subr.mxu0 0.0
        %1912 = vmatpush1.xpose.msra.mxu0 0.0
        %1913 = vmatprep.subr.mxu0 0.0
        %1914 = vmatpush1.xpose.msra.mxu0 0.0
        %1915 = vmatprep.subr.mxu0 0.0
        %1916 = vmatpush1.xpose.msra.mxu0 0.0
        %1917 = vmatprep.subr.mxu0 0.0
        %1918 = vmatpush1.xpose.msra.mxu0 0.0
        %1919 = vmatprep.subr.mxu0 0.0
        %1920 = vmatpush1.xpose.msra.mxu0 0.0
        %1921 = vmatprep.subr.mxu0 0.0
        %1922 = vmatpush1.xpose.msra.mxu0 0.0
        %1923 = vmatprep.subr.mxu0 0.0
        %1924 = vmatpush1.xpose.msra.mxu0 0.0
        %1925 = vmatprep.subr.mxu0 0.0
        %1926 = vmatpush1.xpose.msra.mxu0 0.0
        %1927 = vmatprep.subr.mxu0 0.0
        %1928 = vmatpush1.xpose.msra.mxu0 0.0
        %1929 = vmatprep.subr.mxu0 0.0
        %1930 = vmatpush1.xpose.msra.mxu0 0.0
        %1931 = vmatprep.subr.mxu0 0.0
        %1932 = vmatpush1.xpose.msra.mxu0 0.0
        %1933 = vmatprep.subr.mxu0 0.0
        %1934 = vmatpush1.xpose.msra.mxu0 0.0
        %1935 = vmatprep.subr.mxu0 0.0
        %1936 = vmatpush1.xpose.msra.mxu0 0.0
        %1937 = vmatprep.mubr.f32.mxu0 0.0
        %1938 = vmatmul.mubr.f32.gmra.mrb[0].mxu0 %v1841
        %v1939 = vpop.f32.mrb[0].mxu0
        %v1940 = vadd.f32 0.0, %v1939
        %v1941 = vpop.f32.mrb[0].mxu0
        %1942 = vmatprep.mubr.f32.mxu0 0.0
        %1943 = vmatmul.mubr.f32.gmra.mrb[0].mxu0 %v1843
        %v1944 = vpop.f32.mrb[0].mxu0
        %v1945 = vadd.f32 0.0, %v1944
        %v1946 = vpop.f32.mrb[0].mxu0
        %1947 = vmatprep.mubr.f32.mxu0 0.0
        %1948 = vmatmul.mubr.f32.gmra.mrb[0].mxu0 %v1845
        %v1949 = vpop.f32.mrb[0].mxu0
        %v1950 = vadd.f32 0.0, %v1949
        %v1951 = vpop.f32.mrb[0].mxu0
        %1952 = vmatprep.mubr.f32.mxu0 0.0
        %1953 = vmatmul.mubr.f32.gmra.mrb[0].mxu0 %v1847
        %v1954 = vpop.f32.mrb[0].mxu0
        %v1955 = vadd.f32 0.0, %v1954
        %v1956 = vpop.f32.mrb[0].mxu0
        %1957 = vmatprep.mubr.f32.mxu0 0.0
        %1958 = vmatmul.mubr.f32.gmra.mrb[0].mxu0 %v1849
        %v1959 = vpop.f32.mrb[0].mxu0
        %v1960 = vadd.f32 0.0, %v1959
        %v1961 = vpop.f32.mrb[0].mxu0
        %1962 = vmatprep.mubr.f32.mxu0 0.0
        %1963 = vmatmul.mubr.f32.gmra.mrb[0].mxu0 %v1851
        %v1964 = vpop.f32.mrb[0].mxu0
        %v1965 = vadd.f32 0.0, %v1964
        %v1966 = vpop.f32.mrb[0].mxu0
        %1967 = vmatprep.mubr.f32.mxu0 0.0
        %1968 = vmatmul.mubr.f32.gmra.mrb[0].mxu0 %v1853
        %v1969 = vpop.f32.mrb[0].mxu0
        %v1970 = vadd.f32 0.0, %v1969
        %v1971 = vpop.f32.mrb[0].mxu0
        %1972 = vmatprep.mubr.f32.mxu0 0.0
        %1973 = vmatmul.mubr.f32.gmra.mrb[0].mxu0 %v1855
        %v1974 = vpop.f32.mrb[0].mxu0
        %v1975 = vadd.f32 0.0, %v1974
        %v1976 = vpop.f32.mrb[0].mxu0
        %1977 = vdwg.mxu0
        %v1978 = vld [vmem:[#allocation8] sm:$0xff]
        %v1979 = vld [vmem:[#allocation8 + $0x8] sm:$0xff]
        %v1980 = vld [vmem:[#allocation8 + $0x10] sm:$0xff]
        %v1981 = vld [vmem:[#allocation8 + $0x18] sm:$0xff]
        %v1982 = vld [vmem:[#allocation8 + $0x20] sm:$0xff]
        %v1983 = vld [vmem:[#allocation8 + $0x28] sm:$0xff]
        %v1984 = vld [vmem:[#allocation8 + $0x30] sm:$0xff]
        %v1985 = vld [vmem:[#allocation8 + $0x38] sm:$0xff]
        %v1986 = vld [vmem:[#allocation8 + $0x40] sm:$0xff]
        %v1987 = vld [vmem:[#allocation8 + $0x48] sm:$0xff]
        %v1988 = vld [vmem:[#allocation8 + $0x50] sm:$0xff]
        %v1989 = vld [vmem:[#allocation8 + $0x58] sm:$0xff]
        %v1990 = vld [vmem:[#allocation8 + $0x60] sm:$0xff]
        %v1991 = vld [vmem:[#allocation8 + $0x68] sm:$0xff]
        %v1992 = vld [vmem:[#allocation8 + $0x70] sm:$0xff]
        %v1993 = vld [vmem:[#allocation8 + $0x78] sm:$0xff]
        %v1994 = vld [vmem:[#allocation8 + $0x80] sm:$0xff]
        %v1995 = vld [vmem:[#allocation8 + $0x88] sm:$0xff]
        %v1996 = vld [vmem:[#allocation8 + $0x90] sm:$0xff]
        %v1997 = vld [vmem:[#allocation8 + $0x98] sm:$0xff]
        %v1998 = vld [vmem:[#allocation8 + $0xa0] sm:$0xff]
        %v1999 = vld [vmem:[#allocation8 + $0xa8] sm:$0xff]
        %v2000 = vld [vmem:[#allocation8 + $0xb0] sm:$0xff]
        %v2001 = vld [vmem:[#allocation8 + $0xb8] sm:$0xff]
        %v2002 = vld [vmem:[#allocation8 + $0xc0] sm:$0xff]
        %v2003 = vld [vmem:[#allocation8 + $0xc8] sm:$0xff]
        %v2004 = vld [vmem:[#allocation8 + $0xd0] sm:$0xff]
        %v2005 = vld [vmem:[#allocation8 + $0xd8] sm:$0xff]
        %v2006 = vld [vmem:[#allocation8 + $0xe0] sm:$0xff]
        %v2007 = vld [vmem:[#allocation8 + $0xe8] sm:$0xff]
        %v2008 = vld [vmem:[#allocation8 + $0xf0] sm:$0xff]
        %v2009 = vld [vmem:[#allocation8 + $0xf8] sm:$0xff]
        %v2010 = vadd.f32 %v869, %v1978
        %v2011 = vadd.f32 %v874, %v1979
        %v2012 = vadd.f32 %v879, %v1980
        %v2013 = vadd.f32 %v884, %v1981
        %v2014 = vadd.f32 %v889, %v1982
        %v2015 = vadd.f32 %v894, %v1983
        %v2016 = vadd.f32 %v899, %v1984
        %v2017 = vadd.f32 %v904, %v1985
        %v2018 = vadd.f32 %v1022, %v1978
        %v2019 = vadd.f32 %v1027, %v1979
        %v2020 = vadd.f32 %v1032, %v1980
        %v2021 = vadd.f32 %v1037, %v1981
        %v2022 = vadd.f32 %v1042, %v1982
        %v2023 = vadd.f32 %v1047, %v1983
        %v2024 = vadd.f32 %v1052, %v1984
        %v2025 = vadd.f32 %v1057, %v1985
        %v2026 = vadd.f32 %v1175, %v1986
        %v2027 = vadd.f32 %v1180, %v1987
        %v2028 = vadd.f32 %v1185, %v1988
        %v2029 = vadd.f32 %v1190, %v1989
        %v2030 = vadd.f32 %v1195, %v1990
        %v2031 = vadd.f32 %v1200, %v1991
        %v2032 = vadd.f32 %v1205, %v1992
        %v2033 = vadd.f32 %v1210, %v1993
        %v2034 = vadd.f32 %v1328, %v1986
        %v2035 = vadd.f32 %v1333, %v1987
        %v2036 = vadd.f32 %v1338, %v1988
        %v2037 = vadd.f32 %v1343, %v1989
        %v2038 = vadd.f32 %v1348, %v1990
        %v2039 = vadd.f32 %v1353, %v1991
        %v2040 = vadd.f32 %v1358, %v1992
        %v2041 = vadd.f32 %v1363, %v1993
        %v2042 = vadd.f32 %v1481, %v1994
        %v2043 = vadd.f32 %v1486, %v1995
        %v2044 = vadd.f32 %v1491, %v1996
        %v2045 = vadd.f32 %v1496, %v1997
        %v2046 = vadd.f32 %v1501, %v1998
        %v2047 = vadd.f32 %v1506, %v1999
        %v2048 = vadd.f32 %v1511, %v2000
        %v2049 = vadd.f32 %v1516, %v2001
        %v2050 = vadd.f32 %v1634, %v1994
        %v2051 = vadd.f32 %v1639, %v1995
        %v2052 = vadd.f32 %v1644, %v1996
        %v2053 = vadd.f32 %v1649, %v1997
        %v2054 = vadd.f32 %v1654, %v1998
        %v2055 = vadd.f32 %v1659, %v1999
        %v2056 = vadd.f32 %v1664, %v2000
        %v2057 = vadd.f32 %v1669, %v2001
        %v2058 = vadd.f32 %v1787, %v2002
        %v2059 = vadd.f32 %v1792, %v2003
        %v2060 = vadd.f32 %v1797, %v2004
        %v2061 = vadd.f32 %v1802, %v2005
        %v2062 = vadd.f32 %v1807, %v2006
        %v2063 = vadd.f32 %v1812, %v2007
        %v2064 = vadd.f32 %v1817, %v2008
        %v2065 = vadd.f32 %v1822, %v2009
        %v2066 = vadd.f32 %v1940, %v2002
        %v2067 = vadd.f32 %v1945, %v2003
        %v2068 = vadd.f32 %v1950, %v2004
        %v2069 = vadd.f32 %v1955, %v2005
        %v2070 = vadd.f32 %v1960, %v2006
        %v2071 = vadd.f32 %v1965, %v2007
        %v2072 = vadd.f32 %v1970, %v2008
        %v2073 = vadd.f32 %v1975, %v2009
        %vm2074 = vcmask 523264
        %v2075 = vsel %vm2074, %v2010, -inf
        %2076 = vmax.xlane.f32.xlu0 %v2075
        %v2077 = vpop.xlane.xlu0 %2076
        %v2078 = vsel %vm2074, %v2011, -inf
        %2079 = vmax.xlane.f32.xlu0 %v2078
        %v2080 = vpop.xlane.xlu0 %2079
        %v2081 = vsel %vm2074, %v2012, -inf
        %2082 = vmax.xlane.f32.xlu0 %v2081
        %v2083 = vpop.xlane.xlu0 %2082
        %v2084 = vsel %vm2074, %v2013, -inf
        %2085 = vmax.xlane.f32.xlu0 %v2084
        %v2086 = vpop.xlane.xlu0 %2085
        %v2087 = vsel %vm2074, %v2014, -inf
        %2088 = vmax.xlane.f32.xlu0 %v2087
        %v2089 = vpop.xlane.xlu0 %2088
        %v2090 = vsel %vm2074, %v2015, -inf
        %2091 = vmax.xlane.f32.xlu0 %v2090
        %v2092 = vpop.xlane.xlu0 %2091
        %v2093 = vsel %vm2074, %v2016, -inf
        %2094 = vmax.xlane.f32.xlu0 %v2093
        %v2095 = vpop.xlane.xlu0 %2094
        %v2096 = vsel %vm2074, %v2017, -inf
        %2097 = vmax.xlane.f32.xlu0 %v2096
        %v2098 = vpop.xlane.xlu0 %2097
        %v2099 = vsel %vm2074, %v2018, -inf
        %2100 = vmax.xlane.f32.xlu0 %v2099
        %v2101 = vpop.xlane.xlu0 %2100
        %v2102 = vsel %vm2074, %v2019, -inf
        %2103 = vmax.xlane.f32.xlu0 %v2102
        %v2104 = vpop.xlane.xlu0 %2103
        %v2105 = vsel %vm2074, %v2020, -inf
        %2106 = vmax.xlane.f32.xlu0 %v2105
        %v2107 = vpop.xlane.xlu0 %2106
        %v2108 = vsel %vm2074, %v2021, -inf
        %2109 = vmax.xlane.f32.xlu0 %v2108
        %v2110 = vpop.xlane.xlu0 %2109
        %v2111 = vsel %vm2074, %v2022, -inf
        %2112 = vmax.xlane.f32.xlu0 %v2111
        %v2113 = vpop.xlane.xlu0 %2112
        %v2114 = vsel %vm2074, %v2023, -inf
        %2115 = vmax.xlane.f32.xlu0 %v2114
        %v2116 = vpop.xlane.xlu0 %2115
        %v2117 = vsel %vm2074, %v2024, -inf
        %2118 = vmax.xlane.f32.xlu0 %v2117
        %v2119 = vpop.xlane.xlu0 %2118
        %v2120 = vsel %vm2074, %v2025, -inf
        %2121 = vmax.xlane.f32.xlu0 %v2120
        %v2122 = vpop.xlane.xlu0 %2121
        %v2123 = vsel %vm2074, %v2026, -inf
        %2124 = vmax.xlane.f32.xlu0 %v2123
        %v2125 = vpop.xlane.xlu0 %2124
        %v2126 = vsel %vm2074, %v2027, -inf
        %2127 = vmax.xlane.f32.xlu0 %v2126
        %v2128 = vpop.xlane.xlu0 %2127
        %v2129 = vsel %vm2074, %v2028, -inf
        %2130 = vmax.xlane.f32.xlu0 %v2129
        %v2131 = vpop.xlane.xlu0 %2130
        %v2132 = vsel %vm2074, %v2029, -inf
        %2133 = vmax.xlane.f32.xlu0 %v2132
        %v2134 = vpop.xlane.xlu0 %2133
        %v2135 = vsel %vm2074, %v2030, -inf
        %2136 = vmax.xlane.f32.xlu0 %v2135
        %v2137 = vpop.xlane.xlu0 %2136
        %v2138 = vsel %vm2074, %v2031, -inf
        %2139 = vmax.xlane.f32.xlu0 %v2138
        %v2140 = vpop.xlane.xlu0 %2139
        %v2141 = vsel %vm2074, %v2032, -inf
        %2142 = vmax.xlane.f32.xlu0 %v2141
        %v2143 = vpop.xlane.xlu0 %2142
        %v2144 = vsel %vm2074, %v2033, -inf
        %2145 = vmax.xlane.f32.xlu0 %v2144
        %v2146 = vpop.xlane.xlu0 %2145
        %v2147 = vsel %vm2074, %v2034, -inf
        %2148 = vmax.xlane.f32.xlu0 %v2147
        %v2149 = vpop.xlane.xlu0 %2148
        %v2150 = vsel %vm2074, %v2035, -inf
        %2151 = vmax.xlane.f32.xlu0 %v2150
        %v2152 = vpop.xlane.xlu0 %2151
        %v2153 = vsel %vm2074, %v2036, -inf
        %2154 = vmax.xlane.f32.xlu0 %v2153
        %v2155 = vpop.xlane.xlu0 %2154
        %v2156 = vsel %vm2074, %v2037, -inf
        %2157 = vmax.xlane.f32.xlu0 %v2156
        %v2158 = vpop.xlane.xlu0 %2157
        %v2159 = vsel %vm2074, %v2038, -inf
        %2160 = vmax.xlane.f32.xlu0 %v2159
        %v2161 = vpop.xlane.xlu0 %2160
        %v2162 = vsel %vm2074, %v2039, -inf
        %2163 = vmax.xlane.f32.xlu0 %v2162
        %v2164 = vpop.xlane.xlu0 %2163
        %v2165 = vsel %vm2074, %v2040, -inf
        %2166 = vmax.xlane.f32.xlu0 %v2165
        %v2167 = vpop.xlane.xlu0 %2166
        %v2168 = vsel %vm2074, %v2041, -inf
        %2169 = vmax.xlane.f32.xlu0 %v2168
        %v2170 = vpop.xlane.xlu0 %2169
        %v2171 = vsel %vm2074, %v2042, -inf
        %2172 = vmax.xlane.f32.xlu0 %v2171
        %v2173 = vpop.xlane.xlu0 %2172
        %v2174 = vsel %vm2074, %v2043, -inf
        %2175 = vmax.xlane.f32.xlu0 %v2174
        %v2176 = vpop.xlane.xlu0 %2175
        %v2177 = vsel %vm2074, %v2044, -inf
        %2178 = vmax.xlane.f32.xlu0 %v2177
        %v2179 = vpop.xlane.xlu0 %2178
        %v2180 = vsel %vm2074, %v2045, -inf
        %2181 = vmax.xlane.f32.xlu0 %v2180
        %v2182 = vpop.xlane.xlu0 %2181
        %v2183 = vsel %vm2074, %v2046, -inf
        %2184 = vmax.xlane.f32.xlu0 %v2183
        %v2185 = vpop.xlane.xlu0 %2184
        %v2186 = vsel %vm2074, %v2047, -inf
        %2187 = vmax.xlane.f32.xlu0 %v2186
        %v2188 = vpop.xlane.xlu0 %2187
        %v2189 = vsel %vm2074, %v2048, -inf
        %2190 = vmax.xlane.f32.xlu0 %v2189
        %v2191 = vpop.xlane.xlu0 %2190
        %v2192 = vsel %vm2074, %v2049, -inf
        %2193 = vmax.xlane.f32.xlu0 %v2192
        %v2194 = vpop.xlane.xlu0 %2193
        %v2195 = vsel %vm2074, %v2050, -inf
        %2196 = vmax.xlane.f32.xlu0 %v2195
        %v2197 = vpop.xlane.xlu0 %2196
        %v2198 = vsel %vm2074, %v2051, -inf
        %2199 = vmax.xlane.f32.xlu0 %v2198
        %v2200 = vpop.xlane.xlu0 %2199
        %v2201 = vsel %vm2074, %v2052, -inf
        %2202 = vmax.xlane.f32.xlu0 %v2201
        %v2203 = vpop.xlane.xlu0 %2202
        %v2204 = vsel %vm2074, %v2053, -inf
        %2205 = vmax.xlane.f32.xlu0 %v2204
        %v2206 = vpop.xlane.xlu0 %2205
        %v2207 = vsel %vm2074, %v2054, -inf
        %2208 = vmax.xlane.f32.xlu0 %v2207
        %v2209 = vpop.xlane.xlu0 %2208
        %v2210 = vsel %vm2074, %v2055, -inf
        %2211 = vmax.xlane.f32.xlu0 %v2210
        %v2212 = vpop.xlane.xlu0 %2211
        %v2213 = vsel %vm2074, %v2056, -inf
        %2214 = vmax.xlane.f32.xlu0 %v2213
        %v2215 = vpop.xlane.xlu0 %2214
        %v2216 = vsel %vm2074, %v2057, -inf
        %2217 = vmax.xlane.f32.xlu0 %v2216
        %v2218 = vpop.xlane.xlu0 %2217
        %v2219 = vsel %vm2074, %v2058, -inf
        %2220 = vmax.xlane.f32.xlu0 %v2219
        %v2221 = vpop.xlane.xlu0 %2220
        %v2222 = vsel %vm2074, %v2059, -inf
        %2223 = vmax.xlane.f32.xlu0 %v2222
        %v2224 = vpop.xlane.xlu0 %2223
        %v2225 = vsel %vm2074, %v2060, -inf
        %2226 = vmax.xlane.f32.xlu0 %v2225
        %v2227 = vpop.xlane.xlu0 %2226
        %v2228 = vsel %vm2074, %v2061, -inf
        %2229 = vmax.xlane.f32.xlu0 %v2228
        %v2230 = vpop.xlane.xlu0 %2229
        %v2231 = vsel %vm2074, %v2062, -inf
        %2232 = vmax.xlane.f32.xlu0 %v2231
        %v2233 = vpop.xlane.xlu0 %2232
        %v2234 = vsel %vm2074, %v2063, -inf
        %2235 = vmax.xlane.f32.xlu0 %v2234
        %v2236 = vpop.xlane.xlu0 %2235
        %v2237 = vsel %vm2074, %v2064, -inf
        %2238 = vmax.xlane.f32.xlu0 %v2237
        %v2239 = vpop.xlane.xlu0 %2238
        %v2240 = vsel %vm2074, %v2065, -inf
        %2241 = vmax.xlane.f32.xlu0 %v2240
        %v2242 = vpop.xlane.xlu0 %2241
        %v2243 = vsel %vm2074, %v2066, -inf
        %2244 = vmax.xlane.f32.xlu0 %v2243
        %v2245 = vpop.xlane.xlu0 %2244
        %v2246 = vsel %vm2074, %v2067, -inf
        %2247 = vmax.xlane.f32.xlu0 %v2246
        %v2248 = vpop.xlane.xlu0 %2247
        %v2249 = vsel %vm2074, %v2068, -inf
        %2250 = vmax.xlane.f32.xlu0 %v2249
        %v2251 = vpop.xlane.xlu0 %2250
        %v2252 = vsel %vm2074, %v2069, -inf
        %2253 = vmax.xlane.f32.xlu0 %v2252
        %v2254 = vpop.xlane.xlu0 %2253
        %v2255 = vsel %vm2074, %v2070, -inf
        %2256 = vmax.xlane.f32.xlu0 %v2255
        %v2257 = vpop.xlane.xlu0 %2256
        %v2258 = vsel %vm2074, %v2071, -inf
        %2259 = vmax.xlane.f32.xlu0 %v2258
        %v2260 = vpop.xlane.xlu0 %2259
        %v2261 = vsel %vm2074, %v2072, -inf
        %2262 = vmax.xlane.f32.xlu0 %v2261
        %v2263 = vpop.xlane.xlu0 %2262
        %v2264 = vsel %vm2074, %v2073, -inf
        %2265 = vmax.xlane.f32.xlu0 %v2264
        %v2266 = vpop.xlane.xlu0 %2265
        %v2267 = vsub.f32 %v2010, %v2077
        %v2268 = vsub.f32 %v2011, %v2080
        %v2269 = vsub.f32 %v2012, %v2083
        %v2270 = vsub.f32 %v2013, %v2086
        %v2271 = vsub.f32 %v2014, %v2089
        %v2272 = vsub.f32 %v2015, %v2092
        %v2273 = vsub.f32 %v2016, %v2095
        %v2274 = vsub.f32 %v2017, %v2098
        %v2275 = vsub.f32 %v2018, %v2101
        %v2276 = vsub.f32 %v2019, %v2104
        %v2277 = vsub.f32 %v2020, %v2107
        %v2278 = vsub.f32 %v2021, %v2110
        %v2279 = vsub.f32 %v2022, %v2113
        %v2280 = vsub.f32 %v2023, %v2116
        %v2281 = vsub.f32 %v2024, %v2119
        %v2282 = vsub.f32 %v2025, %v2122
        %v2283 = vsub.f32 %v2026, %v2125
        %v2284 = vsub.f32 %v2027, %v2128
        %v2285 = vsub.f32 %v2028, %v2131
        %v2286 = vsub.f32 %v2029, %v2134
        %v2287 = vsub.f32 %v2030, %v2137
        %v2288 = vsub.f32 %v2031, %v2140
        %v2289 = vsub.f32 %v2032, %v2143
        %v2290 = vsub.f32 %v2033, %v2146
        %v2291 = vsub.f32 %v2034, %v2149
        %v2292 = vsub.f32 %v2035, %v2152
        %v2293 = vsub.f32 %v2036, %v2155
        %v2294 = vsub.f32 %v2037, %v2158
        %v2295 = vsub.f32 %v2038, %v2161
        %v2296 = vsub.f32 %v2039, %v2164
        %v2297 = vsub.f32 %v2040, %v2167
        %v2298 = vsub.f32 %v2041, %v2170
        %v2299 = vsub.f32 %v2042, %v2173
        %v2300 = vsub.f32 %v2043, %v2176
        %v2301 = vsub.f32 %v2044, %v2179
        %v2302 = vsub.f32 %v2045, %v2182
        %v2303 = vsub.f32 %v2046, %v2185
        %v2304 = vsub.f32 %v2047, %v2188
        %v2305 = vsub.f32 %v2048, %v2191
        %v2306 = vsub.f32 %v2049, %v2194
        %v2307 = vsub.f32 %v2050, %v2197
        %v2308 = vsub.f32 %v2051, %v2200
        %v2309 = vsub.f32 %v2052, %v2203
        %v2310 = vsub.f32 %v2053, %v2206
        %v2311 = vsub.f32 %v2054, %v2209
        %v2312 = vsub.f32 %v2055, %v2212
        %v2313 = vsub.f32 %v2056, %v2215
        %v2314 = vsub.f32 %v2057, %v2218
        %v2315 = vsub.f32 %v2058, %v2221
        %v2316 = vsub.f32 %v2059, %v2224
        %v2317 = vsub.f32 %v2060, %v2227
        %v2318 = vsub.f32 %v2061, %v2230
        %v2319 = vsub.f32 %v2062, %v2233
        %v2320 = vsub.f32 %v2063, %v2236
        %v2321 = vsub.f32 %v2064, %v2239
        %v2322 = vsub.f32 %v2065, %v2242
        %v2323 = vsub.f32 %v2066, %v2245
        %v2324 = vsub.f32 %v2067, %v2248
        %v2325 = vsub.f32 %v2068, %v2251
        %v2326 = vsub.f32 %v2069, %v2254
        %v2327 = vsub.f32 %v2070, %v2257
        %v2328 = vsub.f32 %v2071, %v2260
        %v2329 = vsub.f32 %v2072, %v2263
        %v2330 = vsub.f32 %v2073, %v2266
        %v2331 = vmul.f32 %v2267, 1.442695
        %v2332 = vpow.pop %v2331
        %v2333 = vmul.f32 %v2268, 1.442695
        %v2334 = vpow.pop %v2333
        %v2335 = vmul.f32 %v2269, 1.442695
        %v2336 = vpow.pop %v2335
        %v2337 = vmul.f32 %v2270, 1.442695
        %v2338 = vpow.pop %v2337
        %v2339 = vmul.f32 %v2271, 1.442695
        %v2340 = vpow.pop %v2339
        %v2341 = vmul.f32 %v2272, 1.442695
        %v2342 = vpow.pop %v2341
        %v2343 = vmul.f32 %v2273, 1.442695
        %v2344 = vpow.pop %v2343
        %v2345 = vmul.f32 %v2274, 1.442695
        %v2346 = vpow.pop %v2345
        %v2347 = vmul.f32 %v2275, 1.442695
        %v2348 = vpow.pop %v2347
        %v2349 = vmul.f32 %v2276, 1.442695
        %v2350 = vpow.pop %v2349
        %v2351 = vmul.f32 %v2277, 1.442695
        %v2352 = vpow.pop %v2351
        %v2353 = vmul.f32 %v2278, 1.442695
        %v2354 = vpow.pop %v2353
        %v2355 = vmul.f32 %v2279, 1.442695
        %v2356 = vpow.pop %v2355
        %v2357 = vmul.f32 %v2280, 1.442695
        %v2358 = vpow.pop %v2357
        %v2359 = vmul.f32 %v2281, 1.442695
        %v2360 = vpow.pop %v2359
        %v2361 = vmul.f32 %v2282, 1.442695
        %v2362 = vpow.pop %v2361
        %v2363 = vmul.f32 %v2283, 1.442695
        %v2364 = vpow.pop %v2363
        %v2365 = vmul.f32 %v2284, 1.442695
        %v2366 = vpow.pop %v2365
        %v2367 = vmul.f32 %v2285, 1.442695
        %v2368 = vpow.pop %v2367
        %v2369 = vmul.f32 %v2286, 1.442695
        %v2370 = vpow.pop %v2369
        %v2371 = vmul.f32 %v2287, 1.442695
        %v2372 = vpow.pop %v2371
        %v2373 = vmul.f32 %v2288, 1.442695
        %v2374 = vpow.pop %v2373
        %v2375 = vmul.f32 %v2289, 1.442695
        %v2376 = vpow.pop %v2375
        %v2377 = vmul.f32 %v2290, 1.442695
        %v2378 = vpow.pop %v2377
        %v2379 = vmul.f32 %v2291, 1.442695
        %v2380 = vpow.pop %v2379
        %v2381 = vmul.f32 %v2292, 1.442695
        %v2382 = vpow.pop %v2381
        %v2383 = vmul.f32 %v2293, 1.442695
        %v2384 = vpow.pop %v2383
        %v2385 = vmul.f32 %v2294, 1.442695
        %v2386 = vpow.pop %v2385
        %v2387 = vmul.f32 %v2295, 1.442695
        %v2388 = vpow.pop %v2387
        %v2389 = vmul.f32 %v2296, 1.442695
        %v2390 = vpow.pop %v2389
        %v2391 = vmul.f32 %v2297, 1.442695
        %v2392 = vpow.pop %v2391
        %v2393 = vmul.f32 %v2298, 1.442695
        %v2394 = vpow.pop %v2393
        %v2395 = vmul.f32 %v2299, 1.442695
        %v2396 = vpow.pop %v2395
        %v2397 = vmul.f32 %v2300, 1.442695
        %v2398 = vpow.pop %v2397
        %v2399 = vmul.f32 %v2301, 1.442695
        %v2400 = vpow.pop %v2399
        %v2401 = vmul.f32 %v2302, 1.442695
        %v2402 = vpow.pop %v2401
        %v2403 = vmul.f32 %v2303, 1.442695
        %v2404 = vpow.pop %v2403
        %v2405 = vmul.f32 %v2304, 1.442695
        %v2406 = vpow.pop %v2405
        %v2407 = vmul.f32 %v2305, 1.442695
        %v2408 = vpow.pop %v2407
        %v2409 = vmul.f32 %v2306, 1.442695
        %v2410 = vpow.pop %v2409
        %v2411 = vmul.f32 %v2307, 1.442695
        %v2412 = vpow.pop %v2411
        %v2413 = vmul.f32 %v2308, 1.442695
        %v2414 = vpow.pop %v2413
        %v2415 = vmul.f32 %v2309, 1.442695
        %v2416 = vpow.pop %v2415
        %v2417 = vmul.f32 %v2310, 1.442695
        %v2418 = vpow.pop %v2417
        %v2419 = vmul.f32 %v2311, 1.442695
        %v2420 = vpow.pop %v2419
        %v2421 = vmul.f32 %v2312, 1.442695
        %v2422 = vpow.pop %v2421
        %v2423 = vmul.f32 %v2313, 1.442695
        %v2424 = vpow.pop %v2423
        %v2425 = vmul.f32 %v2314, 1.442695
        %v2426 = vpow.pop %v2425
        %v2427 = vmul.f32 %v2315, 1.442695
        %v2428 = vpow.pop %v2427
        %v2429 = vmul.f32 %v2316, 1.442695
        %v2430 = vpow.pop %v2429
        %v2431 = vmul.f32 %v2317, 1.442695
        %v2432 = vpow.pop %v2431
        %v2433 = vmul.f32 %v2318, 1.442695
        %v2434 = vpow.pop %v2433
        %v2435 = vmul.f32 %v2319, 1.442695
        %v2436 = vpow.pop %v2435
        %v2437 = vmul.f32 %v2320, 1.442695
        %v2438 = vpow.pop %v2437
        %v2439 = vmul.f32 %v2321, 1.442695
        %v2440 = vpow.pop %v2439
        %v2441 = vmul.f32 %v2322, 1.442695
        %v2442 = vpow.pop %v2441
        %v2443 = vmul.f32 %v2323, 1.442695
        %v2444 = vpow.pop %v2443
        %v2445 = vmul.f32 %v2324, 1.442695
        %v2446 = vpow.pop %v2445
        %v2447 = vmul.f32 %v2325, 1.442695
        %v2448 = vpow.pop %v2447
        %v2449 = vmul.f32 %v2326, 1.442695
        %v2450 = vpow.pop %v2449
        %v2451 = vmul.f32 %v2327, 1.442695
        %v2452 = vpow.pop %v2451
        %v2453 = vmul.f32 %v2328, 1.442695
        %v2454 = vpow.pop %v2453
        %v2455 = vmul.f32 %v2329, 1.442695
        %v2456 = vpow.pop %v2455
        %v2457 = vmul.f32 %v2330, 1.442695
        %v2458 = vpow.pop %v2457
        %v2459 = vsel %vm2074, %v2332, 0.0
        %2460 = vadd.xlane.f32.xlu0 %v2459
        %v2461 = vpop.xlane.xlu0 %2460
        %v2462 = vsel %vm2074, %v2334, 0.0
        %2463 = vadd.xlane.f32.xlu0 %v2462
        %v2464 = vpop.xlane.xlu0 %2463
        %v2465 = vsel %vm2074, %v2336, 0.0
        %2466 = vadd.xlane.f32.xlu0 %v2465
        %v2467 = vpop.xlane.xlu0 %2466
        %v2468 = vsel %vm2074, %v2338, 0.0
        %2469 = vadd.xlane.f32.xlu0 %v2468
        %v2470 = vpop.xlane.xlu0 %2469
        %v2471 = vsel %vm2074, %v2340, 0.0
        %2472 = vadd.xlane.f32.xlu0 %v2471
        %v2473 = vpop.xlane.xlu0 %2472
        %v2474 = vsel %vm2074, %v2342, 0.0
        %2475 = vadd.xlane.f32.xlu0 %v2474
        %v2476 = vpop.xlane.xlu0 %2475
        %v2477 = vsel %vm2074, %v2344, 0.0
        %2478 = vadd.xlane.f32.xlu0 %v2477
        %v2479 = vpop.xlane.xlu0 %2478
        %v2480 = vsel %vm2074, %v2346, 0.0
        %2481 = vadd.xlane.f32.xlu0 %v2480
        %v2482 = vpop.xlane.xlu0 %2481
        %v2483 = vsel %vm2074, %v2348, 0.0
        %2484 = vadd.xlane.f32.xlu0 %v2483
        %v2485 = vpop.xlane.xlu0 %2484
        %v2486 = vsel %vm2074, %v2350, 0.0
        %2487 = vadd.xlane.f32.xlu0 %v2486
        %v2488 = vpop.xlane.xlu0 %2487
        %v2489 = vsel %vm2074, %v2352, 0.0
        %2490 = vadd.xlane.f32.xlu0 %v2489
        %v2491 = vpop.xlane.xlu0 %2490
        %v2492 = vsel %vm2074, %v2354, 0.0
        %2493 = vadd.xlane.f32.xlu0 %v2492
        %v2494 = vpop.xlane.xlu0 %2493
        %v2495 = vsel %vm2074, %v2356, 0.0
        %2496 = vadd.xlane.f32.xlu0 %v2495
        %v2497 = vpop.xlane.xlu0 %2496
        %v2498 = vsel %vm2074, %v2358, 0.0
        %2499 = vadd.xlane.f32.xlu0 %v2498
        %v2500 = vpop.xlane.xlu0 %2499
        %v2501 = vsel %vm2074, %v2360, 0.0
        %2502 = vadd.xlane.f32.xlu0 %v2501
        %v2503 = vpop.xlane.xlu0 %2502
        %v2504 = vsel %vm2074, %v2362, 0.0
        %2505 = vadd.xlane.f32.xlu0 %v2504
        %v2506 = vpop.xlane.xlu0 %2505
        %v2507 = vsel %vm2074, %v2364, 0.0
        %2508 = vadd.xlane.f32.xlu0 %v2507
        %v2509 = vpop.xlane.xlu0 %2508
        %v2510 = vsel %vm2074, %v2366, 0.0
        %2511 = vadd.xlane.f32.xlu0 %v2510
        %v2512 = vpop.xlane.xlu0 %2511
        %v2513 = vsel %vm2074, %v2368, 0.0
        %2514 = vadd.xlane.f32.xlu0 %v2513
        %v2515 = vpop.xlane.xlu0 %2514
        %v2516 = vsel %vm2074, %v2370, 0.0
        %2517 = vadd.xlane.f32.xlu0 %v2516
        %v2518 = vpop.xlane.xlu0 %2517
        %v2519 = vsel %vm2074, %v2372, 0.0
        %2520 = vadd.xlane.f32.xlu0 %v2519
        %v2521 = vpop.xlane.xlu0 %2520
        %v2522 = vsel %vm2074, %v2374, 0.0
        %2523 = vadd.xlane.f32.xlu0 %v2522
        %v2524 = vpop.xlane.xlu0 %2523
        %v2525 = vsel %vm2074, %v2376, 0.0
        %2526 = vadd.xlane.f32.xlu0 %v2525
        %v2527 = vpop.xlane.xlu0 %2526
        %v2528 = vsel %vm2074, %v2378, 0.0
        %2529 = vadd.xlane.f32.xlu0 %v2528
        %v2530 = vpop.xlane.xlu0 %2529
        %v2531 = vsel %vm2074, %v2380, 0.0
        %2532 = vadd.xlane.f32.xlu0 %v2531
        %v2533 = vpop.xlane.xlu0 %2532
        %v2534 = vsel %vm2074, %v2382, 0.0
        %2535 = vadd.xlane.f32.xlu0 %v2534
        %v2536 = vpop.xlane.xlu0 %2535
        %v2537 = vsel %vm2074, %v2384, 0.0
        %2538 = vadd.xlane.f32.xlu0 %v2537
        %v2539 = vpop.xlane.xlu0 %2538
        %v2540 = vsel %vm2074, %v2386, 0.0
        %2541 = vadd.xlane.f32.xlu0 %v2540
        %v2542 = vpop.xlane.xlu0 %2541
        %v2543 = vsel %vm2074, %v2388, 0.0
        %2544 = vadd.xlane.f32.xlu0 %v2543
        %v2545 = vpop.xlane.xlu0 %2544
        %v2546 = vsel %vm2074, %v2390, 0.0
        %2547 = vadd.xlane.f32.xlu0 %v2546
        %v2548 = vpop.xlane.xlu0 %2547
        %v2549 = vsel %vm2074, %v2392, 0.0
        %2550 = vadd.xlane.f32.xlu0 %v2549
        %v2551 = vpop.xlane.xlu0 %2550
        %v2552 = vsel %vm2074, %v2394, 0.0
        %2553 = vadd.xlane.f32.xlu0 %v2552
        %v2554 = vpop.xlane.xlu0 %2553
        %v2555 = vsel %vm2074, %v2396, 0.0
        %2556 = vadd.xlane.f32.xlu0 %v2555
        %v2557 = vpop.xlane.xlu0 %2556
        %v2558 = vsel %vm2074, %v2398, 0.0
        %2559 = vadd.xlane.f32.xlu0 %v2558
        %v2560 = vpop.xlane.xlu0 %2559
        %v2561 = vsel %vm2074, %v2400, 0.0
        %2562 = vadd.xlane.f32.xlu0 %v2561
        %v2563 = vpop.xlane.xlu0 %2562
        %v2564 = vsel %vm2074, %v2402, 0.0
        %2565 = vadd.xlane.f32.xlu0 %v2564
        %v2566 = vpop.xlane.xlu0 %2565
        %v2567 = vsel %vm2074, %v2404, 0.0
        %2568 = vadd.xlane.f32.xlu0 %v2567
        %v2569 = vpop.xlane.xlu0 %2568
        %v2570 = vsel %vm2074, %v2406, 0.0
        %2571 = vadd.xlane.f32.xlu0 %v2570
        %v2572 = vpop.xlane.xlu0 %2571
        %v2573 = vsel %vm2074, %v2408, 0.0
        %2574 = vadd.xlane.f32.xlu0 %v2573
        %v2575 = vpop.xlane.xlu0 %2574
        %v2576 = vsel %vm2074, %v2410, 0.0
        %2577 = vadd.xlane.f32.xlu0 %v2576
        %v2578 = vpop.xlane.xlu0 %2577
        %v2579 = vsel %vm2074, %v2412, 0.0
        %2580 = vadd.xlane.f32.xlu0 %v2579
        %v2581 = vpop.xlane.xlu0 %2580
        %v2582 = vsel %vm2074, %v2414, 0.0
        %2583 = vadd.xlane.f32.xlu0 %v2582
        %v2584 = vpop.xlane.xlu0 %2583
        %v2585 = vsel %vm2074, %v2416, 0.0
        %2586 = vadd.xlane.f32.xlu0 %v2585
        %v2587 = vpop.xlane.xlu0 %2586
        %v2588 = vsel %vm2074, %v2418, 0.0
        %2589 = vadd.xlane.f32.xlu0 %v2588
        %v2590 = vpop.xlane.xlu0 %2589
        %v2591 = vsel %vm2074, %v2420, 0.0
        %2592 = vadd.xlane.f32.xlu0 %v2591
        %v2593 = vpop.xlane.xlu0 %2592
        %v2594 = vsel %vm2074, %v2422, 0.0
        %2595 = vadd.xlane.f32.xlu0 %v2594
        %v2596 = vpop.xlane.xlu0 %2595
        %v2597 = vsel %vm2074, %v2424, 0.0
        %2598 = vadd.xlane.f32.xlu0 %v2597
        %v2599 = vpop.xlane.xlu0 %2598
        %v2600 = vsel %vm2074, %v2426, 0.0
        %2601 = vadd.xlane.f32.xlu0 %v2600
        %v2602 = vpop.xlane.xlu0 %2601
        %v2603 = vsel %vm2074, %v2428, 0.0
        %2604 = vadd.xlane.f32.xlu0 %v2603
        %v2605 = vpop.xlane.xlu0 %2604
        %v2606 = vsel %vm2074, %v2430, 0.0
        %2607 = vadd.xlane.f32.xlu0 %v2606
        %v2608 = vpop.xlane.xlu0 %2607
        %v2609 = vsel %vm2074, %v2432, 0.0
        %2610 = vadd.xlane.f32.xlu0 %v2609
        %v2611 = vpop.xlane.xlu0 %2610
        %v2612 = vsel %vm2074, %v2434, 0.0
        %2613 = vadd.xlane.f32.xlu0 %v2612
        %v2614 = vpop.xlane.xlu0 %2613
        %v2615 = vsel %vm2074, %v2436, 0.0
        %2616 = vadd.xlane.f32.xlu0 %v2615
        %v2617 = vpop.xlane.xlu0 %2616
        %v2618 = vsel %vm2074, %v2438, 0.0
        %2619 = vadd.xlane.f32.xlu0 %v2618
        %v2620 = vpop.xlane.xlu0 %2619
        %v2621 = vsel %vm2074, %v2440, 0.0
        %2622 = vadd.xlane.f32.xlu0 %v2621
        %v2623 = vpop.xlane.xlu0 %2622
        %v2624 = vsel %vm2074, %v2442, 0.0
        %2625 = vadd.xlane.f32.xlu0 %v2624
        %v2626 = vpop.xlane.xlu0 %2625
        %v2627 = vsel %vm2074, %v2444, 0.0
        %2628 = vadd.xlane.f32.xlu0 %v2627
        %v2629 = vpop.xlane.xlu0 %2628
        %v2630 = vsel %vm2074, %v2446, 0.0
        %2631 = vadd.xlane.f32.xlu0 %v2630
        %v2632 = vpop.xlane.xlu0 %2631
        %v2633 = vsel %vm2074, %v2448, 0.0
        %2634 = vadd.xlane.f32.xlu0 %v2633
        %v2635 = vpop.xlane.xlu0 %2634
        %v2636 = vsel %vm2074, %v2450, 0.0
        %2637 = vadd.xlane.f32.xlu0 %v2636
        %v2638 = vpop.xlane.xlu0 %2637
        %v2639 = vsel %vm2074, %v2452, 0.0
        %2640 = vadd.xlane.f32.xlu0 %v2639
        %v2641 = vpop.xlane.xlu0 %2640
        %v2642 = vsel %vm2074, %v2454, 0.0
        %2643 = vadd.xlane.f32.xlu0 %v2642
        %v2644 = vpop.xlane.xlu0 %2643
        %v2645 = vsel %vm2074, %v2456, 0.0
        %2646 = vadd.xlane.f32.xlu0 %v2645
        %v2647 = vpop.xlane.xlu0 %2646
        %v2648 = vsel %vm2074, %v2458, 0.0
        %2649 = vadd.xlane.f32.xlu0 %v2648
        %v2650 = vpop.xlane.xlu0 %2649
        %v2651 = vrcp.pop %v2461
        %v2652 = vrcp.pop %v2464
        %v2653 = vrcp.pop %v2467
        %v2654 = vrcp.pop %v2470
        %v2655 = vrcp.pop %v2473
        %v2656 = vrcp.pop %v2476
        %v2657 = vrcp.pop %v2479
        %v2658 = vrcp.pop %v2482
        %v2659 = vrcp.pop %v2485
        %v2660 = vrcp.pop %v2488
        %v2661 = vrcp.pop %v2491
        %v2662 = vrcp.pop %v2494
        %v2663 = vrcp.pop %v2497
        %v2664 = vrcp.pop %v2500
        %v2665 = vrcp.pop %v2503
        %v2666 = vrcp.pop %v2506
        %v2667 = vrcp.pop %v2509
        %v2668 = vrcp.pop %v2512
        %v2669 = vrcp.pop %v2515
        %v2670 = vrcp.pop %v2518
        %v2671 = vrcp.pop %v2521
        %v2672 = vrcp.pop %v2524
        %v2673 = vrcp.pop %v2527
        %v2674 = vrcp.pop %v2530
        %v2675 = vrcp.pop %v2533
        %v2676 = vrcp.pop %v2536
        %v2677 = vrcp.pop %v2539
        %v2678 = vrcp.pop %v2542
        %v2679 = vrcp.pop %v2545
        %v2680 = vrcp.pop %v2548
        %v2681 = vrcp.pop %v2551
        %v2682 = vrcp.pop %v2554
        %v2683 = vrcp.pop %v2557
        %v2684 = vrcp.pop %v2560
        %v2685 = vrcp.pop %v2563
        %v2686 = vrcp.pop %v2566
        %v2687 = vrcp.pop %v2569
        %v2688 = vrcp.pop %v2572
        %v2689 = vrcp.pop %v2575
        %v2690 = vrcp.pop %v2578
        %v2691 = vrcp.pop %v2581
        %v2692 = vrcp.pop %v2584
        %v2693 = vrcp.pop %v2587
        %v2694 = vrcp.pop %v2590
        %v2695 = vrcp.pop %v2593
        %v2696 = vrcp.pop %v2596
        %v2697 = vrcp.pop %v2599
        %v2698 = vrcp.pop %v2602
        %v2699 = vrcp.pop %v2605
        %v2700 = vrcp.pop %v2608
        %v2701 = vrcp.pop %v2611
        %v2702 = vrcp.pop %v2614
        %v2703 = vrcp.pop %v2617
        %v2704 = vrcp.pop %v2620
        %v2705 = vrcp.pop %v2623
        %v2706 = vrcp.pop %v2626
        %v2707 = vrcp.pop %v2629
        %v2708 = vrcp.pop %v2632
        %v2709 = vrcp.pop %v2635
        %v2710 = vrcp.pop %v2638
        %v2711 = vrcp.pop %v2641
        %v2712 = vrcp.pop %v2644
        %v2713 = vrcp.pop %v2647
        %v2714 = vrcp.pop %v2650
        %v2715 = vmul.f32 %v2332, %v2651
        %v2716 = vmul.f32 %v2334, %v2652
        %v2717 = vmul.f32 %v2336, %v2653
        %v2718 = vmul.f32 %v2338, %v2654
        %v2719 = vmul.f32 %v2340, %v2655
        %v2720 = vmul.f32 %v2342, %v2656
        %v2721 = vmul.f32 %v2344, %v2657
        %v2722 = vmul.f32 %v2346, %v2658
        %v2723 = vmul.f32 %v2348, %v2659
        %v2724 = vmul.f32 %v2350, %v2660
        %v2725 = vmul.f32 %v2352, %v2661
        %v2726 = vmul.f32 %v2354, %v2662
        %v2727 = vmul.f32 %v2356, %v2663
        %v2728 = vmul.f32 %v2358, %v2664
        %v2729 = vmul.f32 %v2360, %v2665
        %v2730 = vmul.f32 %v2362, %v2666
        %v2731 = vmul.f32 %v2364, %v2667
        %v2732 = vmul.f32 %v2366, %v2668
        %v2733 = vmul.f32 %v2368, %v2669
        %v2734 = vmul.f32 %v2370, %v2670
        %v2735 = vmul.f32 %v2372, %v2671
        %v2736 = vmul.f32 %v2374, %v2672
        %v2737 = vmul.f32 %v2376, %v2673
        %v2738 = vmul.f32 %v2378, %v2674
        %v2739 = vmul.f32 %v2380, %v2675
        %v2740 = vmul.f32 %v2382, %v2676
        %v2741 = vmul.f32 %v2384, %v2677
        %v2742 = vmul.f32 %v2386, %v2678
        %v2743 = vmul.f32 %v2388, %v2679
        %v2744 = vmul.f32 %v2390, %v2680
        %v2745 = vmul.f32 %v2392, %v2681
        %v2746 = vmul.f32 %v2394, %v2682
        %v2747 = vmul.f32 %v2396, %v2683
        %v2748 = vmul.f32 %v2398, %v2684
        %v2749 = vmul.f32 %v2400, %v2685
        %v2750 = vmul.f32 %v2402, %v2686
        %v2751 = vmul.f32 %v2404, %v2687
        %v2752 = vmul.f32 %v2406, %v2688
        %v2753 = vmul.f32 %v2408, %v2689
        %v2754 = vmul.f32 %v2410, %v2690
        %v2755 = vmul.f32 %v2412, %v2691
        %v2756 = vmul.f32 %v2414, %v2692
        %v2757 = vmul.f32 %v2416, %v2693
        %v2758 = vmul.f32 %v2418, %v2694
        %v2759 = vmul.f32 %v2420, %v2695
        %v2760 = vmul.f32 %v2422, %v2696
        %v2761 = vmul.f32 %v2424, %v2697
        %v2762 = vmul.f32 %v2426, %v2698
        %v2763 = vmul.f32 %v2428, %v2699
        %v2764 = vmul.f32 %v2430, %v2700
        %v2765 = vmul.f32 %v2432, %v2701
        %v2766 = vmul.f32 %v2434, %v2702
        %v2767 = vmul.f32 %v2436, %v2703
        %v2768 = vmul.f32 %v2438, %v2704
        %v2769 = vmul.f32 %v2440, %v2705
        %v2770 = vmul.f32 %v2442, %v2706
        %v2771 = vmul.f32 %v2444, %v2707
        %v2772 = vmul.f32 %v2446, %v2708
        %v2773 = vmul.f32 %v2448, %v2709
        %v2774 = vmul.f32 %v2450, %v2710
        %v2775 = vmul.f32 %v2452, %v2711
        %v2776 = vmul.f32 %v2454, %v2712
        %v2777 = vmul.f32 %v2456, %v2713
        %v2778 = vmul.f32 %v2458, %v2714
        %2779 = vrot.lane.b32.xlu0 %v625, 64
        %v2780 = vpop.permute.xlu0 %2779
        %2781 = vrot.lane.b32.xlu0 %v626, 64
        %v2782 = vpop.permute.xlu0 %2781
        %2783 = vrot.lane.b32.xlu0 %v627, 64
        %v2784 = vpop.permute.xlu0 %2783
        %2785 = vrot.lane.b32.xlu0 %v628, 64
        %v2786 = vpop.permute.xlu0 %2785
        %2787 = vrot.lane.b32.xlu0 %v629, 64
        %v2788 = vpop.permute.xlu0 %2787
        %2789 = vrot.lane.b32.xlu0 %v630, 64
        %v2790 = vpop.permute.xlu0 %2789
        %2791 = vrot.lane.b32.xlu0 %v631, 64
        %v2792 = vpop.permute.xlu0 %2791
        %2793 = vrot.lane.b32.xlu0 %v632, 64
        %v2794 = vpop.permute.xlu0 %2793
        %v2804 = vsel %vm2074, %v2715, 0
        %v2807 = vsel %vm2074, %v2716, 0
        %v2810 = vsel %vm2074, %v2717, 0
        %v2813 = vsel %vm2074, %v2718, 0
        %v2816 = vsel %vm2074, %v2719, 0
        %v2819 = vsel %vm2074, %v2720, 0
        %v2822 = vsel %vm2074, %v2721, 0
        %v2825 = vsel %vm2074, %v2722, 0
        %2827 = vmatprep.subr.mxu0 0.0
        %2828 = vmatpush1.msra.mxu0 %v2780
        %2829 = vmatprep.subr.mxu0 0.0
        %2830 = vmatpush1.msra.mxu0 %v2782
        %2831 = vmatprep.subr.mxu0 0.0
        %2832 = vmatpush1.msra.mxu0 %v2784
        %2833 = vmatprep.subr.mxu0 0.0
        %2834 = vmatpush1.msra.mxu0 %v2786
        %2835 = vmatprep.subr.mxu0 0.0
        %2836 = vmatpush1.msra.mxu0 %v2788
        %2837 = vmatprep.subr.mxu0 0.0
        %2838 = vmatpush1.msra.mxu0 %v2790
        %2839 = vmatprep.subr.mxu0 0.0
        %2840 = vmatpush1.msra.mxu0 %v2792
        %2841 = vmatprep.subr.mxu0 0.0
        %2842 = vmatpush1.msra.mxu0 %v2794
        %2843 = vmatprep.subr.mxu0 0.0
        %2844 = vmatpush1.msra.mxu0 0.0
        %2845 = vmatprep.subr.mxu0 0.0
        %2846 = vmatpush1.msra.mxu0 0.0
        %2847 = vmatprep.subr.mxu0 0.0
        %2848 = vmatpush1.msra.mxu0 0.0
        %2849 = vmatprep.subr.mxu0 0.0
        %2850 = vmatpush1.msra.mxu0 0.0
        %2851 = vmatprep.subr.mxu0 0.0
        %2852 = vmatpush1.msra.mxu0 0.0
        %2853 = vmatprep.subr.mxu0 0.0
        %2854 = vmatpush1.msra.mxu0 0.0
        %2855 = vmatprep.subr.mxu0 0.0
        %2856 = vmatpush1.msra.mxu0 0.0
        %2857 = vmatprep.subr.mxu0 0.0
        %2858 = vmatpush1.msra.mxu0 0.0
        %2859 = vmatprep.subr.mxu0 0.0
        %2860 = vmatpush1.msra.mxu0 0.0
        %2861 = vmatprep.subr.mxu0 0.0
        %2862 = vmatpush1.msra.mxu0 0.0
        %2863 = vmatprep.subr.mxu0 0.0
        %2864 = vmatpush1.msra.mxu0 0.0
        %2865 = vmatprep.subr.mxu0 0.0
        %2866 = vmatpush1.msra.mxu0 0.0
        %2867 = vmatprep.subr.mxu0 0.0
        %2868 = vmatpush1.msra.mxu0 0.0
        %2869 = vmatprep.subr.mxu0 0.0
        %2870 = vmatpush1.msra.mxu0 0.0
        %2871 = vmatprep.subr.mxu0 0.0
        %2872 = vmatpush1.msra.mxu0 0.0
        %2873 = vmatprep.subr.mxu0 0.0
        %2874 = vmatpush1.msra.mxu0 0.0
        %2875 = vmatprep.subr.mxu0 0.0
        %2876 = vmatpush1.msra.mxu0 0.0
        %2877 = vmatprep.subr.mxu0 0.0
        %2878 = vmatpush1.msra.mxu0 0.0
        %2879 = vmatprep.subr.mxu0 0.0
        %2880 = vmatpush1.msra.mxu0 0.0
        %2881 = vmatprep.subr.mxu0 0.0
        %2882 = vmatpush1.msra.mxu0 0.0
        %2883 = vmatprep.subr.mxu0 0.0
        %2884 = vmatpush1.msra.mxu0 0.0
        %2885 = vmatprep.subr.mxu0 0.0
        %2886 = vmatpush1.msra.mxu0 0.0
        %2887 = vmatprep.subr.mxu0 0.0
        %2888 = vmatpush1.msra.mxu0 0.0
        %2889 = vmatprep.subr.mxu0 0.0
        %2890 = vmatpush1.msra.mxu0 0.0
        %2891 = vmatprep.mubr.f32.mxu0 0.0
        %2892 = vmatmul.mubr.f32.gmra.mrb[0].mxu0 %v2804
        %v2893 = vpop.f32.mrb[0].mxu0
        %v2894 = vadd.f32 0.0, %v2893
        %v2895 = vpop.f32.mrb[0].mxu0
        %2896 = vmatprep.mubr.f32.mxu0 0.0
        %2897 = vmatmul.mubr.f32.gmra.mrb[0].mxu0 %v2807
        %v2898 = vpop.f32.mrb[0].mxu0
        %v2899 = vadd.f32 0.0, %v2898
        %v2900 = vpop.f32.mrb[0].mxu0
        %2901 = vmatprep.mubr.f32.mxu0 0.0
        %2902 = vmatmul.mubr.f32.gmra.mrb[0].mxu0 %v2810
        %v2903 = vpop.f32.mrb[0].mxu0
        %v2904 = vadd.f32 0.0, %v2903
        %v2905 = vpop.f32.mrb[0].mxu0
        %2906 = vmatprep.mubr.f32.mxu0 0.0
        %2907 = vmatmul.mubr.f32.gmra.mrb[0].mxu0 %v2813
        %v2908 = vpop.f32.mrb[0].mxu0
        %v2909 = vadd.f32 0.0, %v2908
        %v2910 = vpop.f32.mrb[0].mxu0
        %2911 = vmatprep.mubr.f32.mxu0 0.0
        %2912 = vmatmul.mubr.f32.gmra.mrb[0].mxu0 %v2816
        %v2913 = vpop.f32.mrb[0].mxu0
        %v2914 = vadd.f32 0.0, %v2913
        %v2915 = vpop.f32.mrb[0].mxu0
        %2916 = vmatprep.mubr.f32.mxu0 0.0
        %2917 = vmatmul.mubr.f32.gmra.mrb[0].mxu0 %v2819
        %v2918 = vpop.f32.mrb[0].mxu0
        %v2919 = vadd.f32 0.0, %v2918
        %v2920 = vpop.f32.mrb[0].mxu0
        %2921 = vmatprep.mubr.f32.mxu0 0.0
        %2922 = vmatmul.mubr.f32.gmra.mrb[0].mxu0 %v2822
        %v2923 = vpop.f32.mrb[0].mxu0
        %v2924 = vadd.f32 0.0, %v2923
        %v2925 = vpop.f32.mrb[0].mxu0
        %2926 = vmatprep.mubr.f32.mxu0 0.0
        %2927 = vmatmul.mubr.f32.gmra.mrb[0].mxu0 %v2825
        %v2928 = vpop.f32.mrb[0].mxu0
        %v2929 = vadd.f32 0.0, %v2928
        %v2930 = vpop.f32.mrb[0].mxu0
        %2931 = vdwg.mxu0
        %2932 = vrot.lane.b32.xlu0 %v633, 64
        %v2933 = vpop.permute.xlu0 %2932
        %2934 = vrot.lane.b32.xlu0 %v634, 64
        %v2935 = vpop.permute.xlu0 %2934
        %2936 = vrot.lane.b32.xlu0 %v635, 64
        %v2937 = vpop.permute.xlu0 %2936
        %2938 = vrot.lane.b32.xlu0 %v636, 64
        %v2939 = vpop.permute.xlu0 %2938
        %2940 = vrot.lane.b32.xlu0 %v637, 64
        %v2941 = vpop.permute.xlu0 %2940
        %2942 = vrot.lane.b32.xlu0 %v638, 64
        %v2943 = vpop.permute.xlu0 %2942
        %2944 = vrot.lane.b32.xlu0 %v639, 64
        %v2945 = vpop.permute.xlu0 %2944
        %2946 = vrot.lane.b32.xlu0 %v640, 64
        %v2947 = vpop.permute.xlu0 %2946
        %v2957 = vsel %vm2074, %v2723, 0
        %v2960 = vsel %vm2074, %v2724, 0
        %v2963 = vsel %vm2074, %v2725, 0
        %v2966 = vsel %vm2074, %v2726, 0
        %v2969 = vsel %vm2074, %v2727, 0
        %v2972 = vsel %vm2074, %v2728, 0
        %v2975 = vsel %vm2074, %v2729, 0
        %v2978 = vsel %vm2074, %v2730, 0
        %2980 = vmatprep.subr.mxu0 0.0
        %2981 = vmatpush1.msra.mxu0 %v2933
        %2982 = vmatprep.subr.mxu0 0.0
        %2983 = vmatpush1.msra.mxu0 %v2935
        %2984 = vmatprep.subr.mxu0 0.0
        %2985 = vmatpush1.msra.mxu0 %v2937
        %2986 = vmatprep.subr.mxu0 0.0
        %2987 = vmatpush1.msra.mxu0 %v2939
        %2988 = vmatprep.subr.mxu0 0.0
        %2989 = vmatpush1.msra.mxu0 %v2941
        %2990 = vmatprep.subr.mxu0 0.0
        %2991 = vmatpush1.msra.mxu0 %v2943
        %2992 = vmatprep.subr.mxu0 0.0
        %2993 = vmatpush1.msra.mxu0 %v2945
        %2994 = vmatprep.subr.mxu0 0.0
        %2995 = vmatpush1.msra.mxu0 %v2947
        %2996 = vmatprep.subr.mxu0 0.0
        %2997 = vmatpush1.msra.mxu0 0.0
        %2998 = vmatprep.subr.mxu0 0.0
        %2999 = vmatpush1.msra.mxu0 0.0
        %3000 = vmatprep.subr.mxu0 0.0
        %3001 = vmatpush1.msra.mxu0 0.0
        %3002 = vmatprep.subr.mxu0 0.0
        %3003 = vmatpush1.msra.mxu0 0.0
        %3004 = vmatprep.subr.mxu0 0.0
        %3005 = vmatpush1.msra.mxu0 0.0
        %3006 = vmatprep.subr.mxu0 0.0
        %3007 = vmatpush1.msra.mxu0 0.0
        %3008 = vmatprep.subr.mxu0 0.0
        %3009 = vmatpush1.msra.mxu0 0.0
        %3010 = vmatprep.subr.mxu0 0.0
        %3011 = vmatpush1.msra.mxu0 0.0
        %3012 = vmatprep.subr.mxu0 0.0
        %3013 = vmatpush1.msra.mxu0 0.0
        %3014 = vmatprep.subr.mxu0 0.0
        %3015 = vmatpush1.msra.mxu0 0.0
        %3016 = vmatprep.subr.mxu0 0.0
        %3017 = vmatpush1.msra.mxu0 0.0
        %3018 = vmatprep.subr.mxu0 0.0
        %3019 = vmatpush1.msra.mxu0 0.0
        %3020 = vmatprep.subr.mxu0 0.0
        %3021 = vmatpush1.msra.mxu0 0.0
        %3022 = vmatprep.subr.mxu0 0.0
        %3023 = vmatpush1.msra.mxu0 0.0
        %3024 = vmatprep.subr.mxu0 0.0
        %3025 = vmatpush1.msra.mxu0 0.0
        %3026 = vmatprep.subr.mxu0 0.0
        %3027 = vmatpush1.msra.mxu0 0.0
        %3028 = vmatprep.subr.mxu0 0.0
        %3029 = vmatpush1.msra.mxu0 0.0
        %3030 = vmatprep.subr.mxu0 0.0
        %3031 = vmatpush1.msra.mxu0 0.0
        %3032 = vmatprep.subr.mxu0 0.0
        %3033 = vmatpush1.msra.mxu0 0.0
        %3034 = vmatprep.subr.mxu0 0.0
        %3035 = vmatpush1.msra.mxu0 0.0
        %3036 = vmatprep.subr.mxu0 0.0
        %3037 = vmatpush1.msra.mxu0 0.0
        %3038 = vmatprep.subr.mxu0 0.0
        %3039 = vmatpush1.msra.mxu0 0.0
        %3040 = vmatprep.subr.mxu0 0.0
        %3041 = vmatpush1.msra.mxu0 0.0
        %3042 = vmatprep.subr.mxu0 0.0
        %3043 = vmatpush1.msra.mxu0 0.0
        %3044 = vmatprep.mubr.f32.mxu0 0.0
        %3045 = vmatmul.mubr.f32.gmra.mrb[0].mxu0 %v2957
        %v3046 = vpop.f32.mrb[0].mxu0
        %v3047 = vadd.f32 0.0, %v3046
        %v3048 = vpop.f32.mrb[0].mxu0
        %3049 = vmatprep.mubr.f32.mxu0 0.0
        %3050 = vmatmul.mubr.f32.gmra.mrb[0].mxu0 %v2960
        %v3051 = vpop.f32.mrb[0].mxu0
        %v3052 = vadd.f32 0.0, %v3051
        %v3053 = vpop.f32.mrb[0].mxu0
        %3054 = vmatprep.mubr.f32.mxu0 0.0
        %3055 = vmatmul.mubr.f32.gmra.mrb[0].mxu0 %v2963
        %v3056 = vpop.f32.mrb[0].mxu0
        %v3057 = vadd.f32 0.0, %v3056
        %v3058 = vpop.f32.mrb[0].mxu0
        %3059 = vmatprep.mubr.f32.mxu0 0.0
        %3060 = vmatmul.mubr.f32.gmra.mrb[0].mxu0 %v2966
        %v3061 = vpop.f32.mrb[0].mxu0
        %v3062 = vadd.f32 0.0, %v3061
        %v3063 = vpop.f32.mrb[0].mxu0
        %3064 = vmatprep.mubr.f32.mxu0 0.0
        %3065 = vmatmul.mubr.f32.gmra.mrb[0].mxu0 %v2969
        %v3066 = vpop.f32.mrb[0].mxu0
        %v3067 = vadd.f32 0.0, %v3066
        %v3068 = vpop.f32.mrb[0].mxu0
        %3069 = vmatprep.mubr.f32.mxu0 0.0
        %3070 = vmatmul.mubr.f32.gmra.mrb[0].mxu0 %v2972
        %v3071 = vpop.f32.mrb[0].mxu0
        %v3072 = vadd.f32 0.0, %v3071
        %v3073 = vpop.f32.mrb[0].mxu0
        %3074 = vmatprep.mubr.f32.mxu0 0.0
        %3075 = vmatmul.mubr.f32.gmra.mrb[0].mxu0 %v2975
        %v3076 = vpop.f32.mrb[0].mxu0
        %v3077 = vadd.f32 0.0, %v3076
        %v3078 = vpop.f32.mrb[0].mxu0
        %3079 = vmatprep.mubr.f32.mxu0 0.0
        %3080 = vmatmul.mubr.f32.gmra.mrb[0].mxu0 %v2978
        %v3081 = vpop.f32.mrb[0].mxu0
        %v3082 = vadd.f32 0.0, %v3081
        %v3083 = vpop.f32.mrb[0].mxu0
        %3084 = vdwg.mxu0
        %3085 = vrot.lane.b32.xlu0 %v658, 64
        %v3086 = vpop.permute.xlu0 %3085
        %3087 = vrot.lane.b32.xlu0 %v660, 64
        %v3088 = vpop.permute.xlu0 %3087
        %3089 = vrot.lane.b32.xlu0 %v662, 64
        %v3090 = vpop.permute.xlu0 %3089
        %3091 = vrot.lane.b32.xlu0 %v664, 64
        %v3092 = vpop.permute.xlu0 %3091
        %3093 = vrot.lane.b32.xlu0 %v666, 64
        %v3094 = vpop.permute.xlu0 %3093
        %3095 = vrot.lane.b32.xlu0 %v668, 64
        %v3096 = vpop.permute.xlu0 %3095
        %3097 = vrot.lane.b32.xlu0 %v670, 64
        %v3098 = vpop.permute.xlu0 %3097
        %3099 = vrot.lane.b32.xlu0 %v672, 64
        %v3100 = vpop.permute.xlu0 %3099
        %v3110 = vsel %vm2074, %v2731, 0
        %v3113 = vsel %vm2074, %v2732, 0
        %v3116 = vsel %vm2074, %v2733, 0
        %v3119 = vsel %vm2074, %v2734, 0
        %v3122 = vsel %vm2074, %v2735, 0
        %v3125 = vsel %vm2074, %v2736, 0
        %v3128 = vsel %vm2074, %v2737, 0
        %v3131 = vsel %vm2074, %v2738, 0
        %3133 = vmatprep.subr.mxu0 0.0
        %3134 = vmatpush1.msra.mxu0 %v3086
        %3135 = vmatprep.subr.mxu0 0.0
        %3136 = vmatpush1.msra.mxu0 %v3088
        %3137 = vmatprep.subr.mxu0 0.0
        %3138 = vmatpush1.msra.mxu0 %v3090
        %3139 = vmatprep.subr.mxu0 0.0
        %3140 = vmatpush1.msra.mxu0 %v3092
        %3141 = vmatprep.subr.mxu0 0.0
        %3142 = vmatpush1.msra.mxu0 %v3094
        %3143 = vmatprep.subr.mxu0 0.0
        %3144 = vmatpush1.msra.mxu0 %v3096
        %3145 = vmatprep.subr.mxu0 0.0
        %3146 = vmatpush1.msra.mxu0 %v3098
        %3147 = vmatprep.subr.mxu0 0.0
        %3148 = vmatpush1.msra.mxu0 %v3100
        %3149 = vmatprep.subr.mxu0 0.0
        %3150 = vmatpush1.msra.mxu0 0.0
        %3151 = vmatprep.subr.mxu0 0.0
        %3152 = vmatpush1.msra.mxu0 0.0
        %3153 = vmatprep.subr.mxu0 0.0
        %3154 = vmatpush1.msra.mxu0 0.0
        %3155 = vmatprep.subr.mxu0 0.0
        %3156 = vmatpush1.msra.mxu0 0.0
        %3157 = vmatprep.subr.mxu0 0.0
        %3158 = vmatpush1.msra.mxu0 0.0
        %3159 = vmatprep.subr.mxu0 0.0
        %3160 = vmatpush1.msra.mxu0 0.0
        %3161 = vmatprep.subr.mxu0 0.0
        %3162 = vmatpush1.msra.mxu0 0.0
        %3163 = vmatprep.subr.mxu0 0.0
        %3164 = vmatpush1.msra.mxu0 0.0
        %3165 = vmatprep.subr.mxu0 0.0
        %3166 = vmatpush1.msra.mxu0 0.0
        %3167 = vmatprep.subr.mxu0 0.0
        %3168 = vmatpush1.msra.mxu0 0.0
        %3169 = vmatprep.subr.mxu0 0.0
        %3170 = vmatpush1.msra.mxu0 0.0
        %3171 = vmatprep.subr.mxu0 0.0
        %3172 = vmatpush1.msra.mxu0 0.0
        %3173 = vmatprep.subr.mxu0 0.0
        %3174 = vmatpush1.msra.mxu0 0.0
        %3175 = vmatprep.subr.mxu0 0.0
        %3176 = vmatpush1.msra.mxu0 0.0
        %3177 = vmatprep.subr.mxu0 0.0
        %3178 = vmatpush1.msra.mxu0 0.0
        %3179 = vmatprep.subr.mxu0 0.0
        %3180 = vmatpush1.msra.mxu0 0.0
        %3181 = vmatprep.subr.mxu0 0.0
        %3182 = vmatpush1.msra.mxu0 0.0
        %3183 = vmatprep.subr.mxu0 0.0
        %3184 = vmatpush1.msra.mxu0 0.0
        %3185 = vmatprep.subr.mxu0 0.0
        %3186 = vmatpush1.msra.mxu0 0.0
        %3187 = vmatprep.subr.mxu0 0.0
        %3188 = vmatpush1.msra.mxu0 0.0
        %3189 = vmatprep.subr.mxu0 0.0
        %3190 = vmatpush1.msra.mxu0 0.0
        %3191 = vmatprep.subr.mxu0 0.0
        %3192 = vmatpush1.msra.mxu0 0.0
        %3193 = vmatprep.subr.mxu0 0.0
        %3194 = vmatpush1.msra.mxu0 0.0
        %3195 = vmatprep.subr.mxu0 0.0
        %3196 = vmatpush1.msra.mxu0 0.0
        %3197 = vmatprep.mubr.f32.mxu0 0.0
        %3198 = vmatmul.mubr.f32.gmra.mrb[0].mxu0 %v3110
        %v3199 = vpop.f32.mrb[0].mxu0
        %v3200 = vadd.f32 0.0, %v3199
        %v3201 = vpop.f32.mrb[0].mxu0
        %3202 = vmatprep.mubr.f32.mxu0 0.0
        %3203 = vmatmul.mubr.f32.gmra.mrb[0].mxu0 %v3113
        %v3204 = vpop.f32.mrb[0].mxu0
        %v3205 = vadd.f32 0.0, %v3204
        %v3206 = vpop.f32.mrb[0].mxu0
        %3207 = vmatprep.mubr.f32.mxu0 0.0
        %3208 = vmatmul.mubr.f32.gmra.mrb[0].mxu0 %v3116
        %v3209 = vpop.f32.mrb[0].mxu0
        %v3210 = vadd.f32 0.0, %v3209
        %v3211 = vpop.f32.mrb[0].mxu0
        %3212 = vmatprep.mubr.f32.mxu0 0.0
        %3213 = vmatmul.mubr.f32.gmra.mrb[0].mxu0 %v3119
        %v3214 = vpop.f32.mrb[0].mxu0
        %v3215 = vadd.f32 0.0, %v3214
        %v3216 = vpop.f32.mrb[0].mxu0
        %3217 = vmatprep.mubr.f32.mxu0 0.0
        %3218 = vmatmul.mubr.f32.gmra.mrb[0].mxu0 %v3122
        %v3219 = vpop.f32.mrb[0].mxu0
        %v3220 = vadd.f32 0.0, %v3219
        %v3221 = vpop.f32.mrb[0].mxu0
        %3222 = vmatprep.mubr.f32.mxu0 0.0
        %3223 = vmatmul.mubr.f32.gmra.mrb[0].mxu0 %v3125
        %v3224 = vpop.f32.mrb[0].mxu0
        %v3225 = vadd.f32 0.0, %v3224
        %v3226 = vpop.f32.mrb[0].mxu0
        %3227 = vmatprep.mubr.f32.mxu0 0.0
        %3228 = vmatmul.mubr.f32.gmra.mrb[0].mxu0 %v3128
        %v3229 = vpop.f32.mrb[0].mxu0
        %v3230 = vadd.f32 0.0, %v3229
        %v3231 = vpop.f32.mrb[0].mxu0
        %3232 = vmatprep.mubr.f32.mxu0 0.0
        %3233 = vmatmul.mubr.f32.gmra.mrb[0].mxu0 %v3131
        %v3234 = vpop.f32.mrb[0].mxu0
        %v3235 = vadd.f32 0.0, %v3234
        %v3236 = vpop.f32.mrb[0].mxu0
        %3237 = vdwg.mxu0
        %3238 = vrot.lane.b32.xlu0 %v674, 64
        %v3239 = vpop.permute.xlu0 %3238
        %3240 = vrot.lane.b32.xlu0 %v676, 64
        %v3241 = vpop.permute.xlu0 %3240
        %3242 = vrot.lane.b32.xlu0 %v678, 64
        %v3243 = vpop.permute.xlu0 %3242
        %3244 = vrot.lane.b32.xlu0 %v680, 64
        %v3245 = vpop.permute.xlu0 %3244
        %3246 = vrot.lane.b32.xlu0 %v682, 64
        %v3247 = vpop.permute.xlu0 %3246
        %3248 = vrot.lane.b32.xlu0 %v684, 64
        %v3249 = vpop.permute.xlu0 %3248
        %3250 = vrot.lane.b32.xlu0 %v686, 64
        %v3251 = vpop.permute.xlu0 %3250
        %3252 = vrot.lane.b32.xlu0 %v688, 64
        %v3253 = vpop.permute.xlu0 %3252
        %v3263 = vsel %vm2074, %v2739, 0
        %v3266 = vsel %vm2074, %v2740, 0
        %v3269 = vsel %vm2074, %v2741, 0
        %v3272 = vsel %vm2074, %v2742, 0
        %v3275 = vsel %vm2074, %v2743, 0
        %v3278 = vsel %vm2074, %v2744, 0
        %v3281 = vsel %vm2074, %v2745, 0
        %v3284 = vsel %vm2074, %v2746, 0
        %3286 = vmatprep.subr.mxu0 0.0
        %3287 = vmatpush1.msra.mxu0 %v3239
        %3288 = vmatprep.subr.mxu0 0.0
        %3289 = vmatpush1.msra.mxu0 %v3241
        %3290 = vmatprep.subr.mxu0 0.0
        %3291 = vmatpush1.msra.mxu0 %v3243
        %3292 = vmatprep.subr.mxu0 0.0
        %3293 = vmatpush1.msra.mxu0 %v3245
        %3294 = vmatprep.subr.mxu0 0.0
        %3295 = vmatpush1.msra.mxu0 %v3247
        %3296 = vmatprep.subr.mxu0 0.0
        %3297 = vmatpush1.msra.mxu0 %v3249
        %3298 = vmatprep.subr.mxu0 0.0
        %3299 = vmatpush1.msra.mxu0 %v3251
        %3300 = vmatprep.subr.mxu0 0.0
        %3301 = vmatpush1.msra.mxu0 %v3253
        %3302 = vmatprep.subr.mxu0 0.0
        %3303 = vmatpush1.msra.mxu0 0.0
        %3304 = vmatprep.subr.mxu0 0.0
        %3305 = vmatpush1.msra.mxu0 0.0
        %3306 = vmatprep.subr.mxu0 0.0
        %3307 = vmatpush1.msra.mxu0 0.0
        %3308 = vmatprep.subr.mxu0 0.0
        %3309 = vmatpush1.msra.mxu0 0.0
        %3310 = vmatprep.subr.mxu0 0.0
        %3311 = vmatpush1.msra.mxu0 0.0
        %3312 = vmatprep.subr.mxu0 0.0
        %3313 = vmatpush1.msra.mxu0 0.0
        %3314 = vmatprep.subr.mxu0 0.0
        %3315 = vmatpush1.msra.mxu0 0.0
        %3316 = vmatprep.subr.mxu0 0.0
        %3317 = vmatpush1.msra.mxu0 0.0
        %3318 = vmatprep.subr.mxu0 0.0
        %3319 = vmatpush1.msra.mxu0 0.0
        %3320 = vmatprep.subr.mxu0 0.0
        %3321 = vmatpush1.msra.mxu0 0.0
        %3322 = vmatprep.subr.mxu0 0.0
        %3323 = vmatpush1.msra.mxu0 0.0
        %3324 = vmatprep.subr.mxu0 0.0
        %3325 = vmatpush1.msra.mxu0 0.0
        %3326 = vmatprep.subr.mxu0 0.0
        %3327 = vmatpush1.msra.mxu0 0.0
        %3328 = vmatprep.subr.mxu0 0.0
        %3329 = vmatpush1.msra.mxu0 0.0
        %3330 = vmatprep.subr.mxu0 0.0
        %3331 = vmatpush1.msra.mxu0 0.0
        %3332 = vmatprep.subr.mxu0 0.0
        %3333 = vmatpush1.msra.mxu0 0.0
        %3334 = vmatprep.subr.mxu0 0.0
        %3335 = vmatpush1.msra.mxu0 0.0
        %3336 = vmatprep.subr.mxu0 0.0
        %3337 = vmatpush1.msra.mxu0 0.0
        %3338 = vmatprep.subr.mxu0 0.0
        %3339 = vmatpush1.msra.mxu0 0.0
        %3340 = vmatprep.subr.mxu0 0.0
        %3341 = vmatpush1.msra.mxu0 0.0
        %3342 = vmatprep.subr.mxu0 0.0
        %3343 = vmatpush1.msra.mxu0 0.0
        %3344 = vmatprep.subr.mxu0 0.0
        %3345 = vmatpush1.msra.mxu0 0.0
        %3346 = vmatprep.subr.mxu0 0.0
        %3347 = vmatpush1.msra.mxu0 0.0
        %3348 = vmatprep.subr.mxu0 0.0
        %3349 = vmatpush1.msra.mxu0 0.0
        %3350 = vmatprep.mubr.f32.mxu0 0.0
        %3351 = vmatmul.mubr.f32.gmra.mrb[0].mxu0 %v3263
        %v3352 = vpop.f32.mrb[0].mxu0
        %v3353 = vadd.f32 0.0, %v3352
        %v3354 = vpop.f32.mrb[0].mxu0
        %3355 = vmatprep.mubr.f32.mxu0 0.0
        %3356 = vmatmul.mubr.f32.gmra.mrb[0].mxu0 %v3266
        %v3357 = vpop.f32.mrb[0].mxu0
        %v3358 = vadd.f32 0.0, %v3357
        %v3359 = vpop.f32.mrb[0].mxu0
        %3360 = vmatprep.mubr.f32.mxu0 0.0
        %3361 = vmatmul.mubr.f32.gmra.mrb[0].mxu0 %v3269
        %v3362 = vpop.f32.mrb[0].mxu0
        %v3363 = vadd.f32 0.0, %v3362
        %v3364 = vpop.f32.mrb[0].mxu0
        %3365 = vmatprep.mubr.f32.mxu0 0.0
        %3366 = vmatmul.mubr.f32.gmra.mrb[0].mxu0 %v3272
        %v3367 = vpop.f32.mrb[0].mxu0
        %v3368 = vadd.f32 0.0, %v3367
        %v3369 = vpop.f32.mrb[0].mxu0
        %3370 = vmatprep.mubr.f32.mxu0 0.0
        %3371 = vmatmul.mubr.f32.gmra.mrb[0].mxu0 %v3275
        %v3372 = vpop.f32.mrb[0].mxu0
        %v3373 = vadd.f32 0.0, %v3372
        %v3374 = vpop.f32.mrb[0].mxu0
        %3375 = vmatprep.mubr.f32.mxu0 0.0
        %3376 = vmatmul.mubr.f32.gmra.mrb[0].mxu0 %v3278
        %v3377 = vpop.f32.mrb[0].mxu0
        %v3378 = vadd.f32 0.0, %v3377
        %v3379 = vpop.f32.mrb[0].mxu0
        %3380 = vmatprep.mubr.f32.mxu0 0.0
        %3381 = vmatmul.mubr.f32.gmra.mrb[0].mxu0 %v3281
        %v3382 = vpop.f32.mrb[0].mxu0
        %v3383 = vadd.f32 0.0, %v3382
        %v3384 = vpop.f32.mrb[0].mxu0
        %3385 = vmatprep.mubr.f32.mxu0 0.0
        %3386 = vmatmul.mubr.f32.gmra.mrb[0].mxu0 %v3284
        %v3387 = vpop.f32.mrb[0].mxu0
        %v3388 = vadd.f32 0.0, %v3387
        %v3389 = vpop.f32.mrb[0].mxu0
        %3390 = vdwg.mxu0
        %3391 = vrot.lane.b32.xlu0 %v690, 64
        %v3392 = vpop.permute.xlu0 %3391
        %3393 = vrot.lane.b32.xlu0 %v692, 64
        %v3394 = vpop.permute.xlu0 %3393
        %3395 = vrot.lane.b32.xlu0 %v694, 64
        %v3396 = vpop.permute.xlu0 %3395
        %3397 = vrot.lane.b32.xlu0 %v696, 64
        %v3398 = vpop.permute.xlu0 %3397
        %3399 = vrot.lane.b32.xlu0 %v698, 64
        %v3400 = vpop.permute.xlu0 %3399
        %3401 = vrot.lane.b32.xlu0 %v700, 64
        %v3402 = vpop.permute.xlu0 %3401
        %3403 = vrot.lane.b32.xlu0 %v702, 64
        %v3404 = vpop.permute.xlu0 %3403
        %3405 = vrot.lane.b32.xlu0 %v704, 64
        %v3406 = vpop.permute.xlu0 %3405
        %v3416 = vsel %vm2074, %v2747, 0
        %v3419 = vsel %vm2074, %v2748, 0
        %v3422 = vsel %vm2074, %v2749, 0
        %v3425 = vsel %vm2074, %v2750, 0
        %v3428 = vsel %vm2074, %v2751, 0
        %v3431 = vsel %vm2074, %v2752, 0
        %v3434 = vsel %vm2074, %v2753, 0
        %v3437 = vsel %vm2074, %v2754, 0
        %3439 = vmatprep.subr.mxu0 0.0
        %3440 = vmatpush1.msra.mxu0 %v3392
        %3441 = vmatprep.subr.mxu0 0.0
        %3442 = vmatpush1.msra.mxu0 %v3394
        %3443 = vmatprep.subr.mxu0 0.0
        %3444 = vmatpush1.msra.mxu0 %v3396
        %3445 = vmatprep.subr.mxu0 0.0
        %3446 = vmatpush1.msra.mxu0 %v3398
        %3447 = vmatprep.subr.mxu0 0.0
        %3448 = vmatpush1.msra.mxu0 %v3400
        %3449 = vmatprep.subr.mxu0 0.0
        %3450 = vmatpush1.msra.mxu0 %v3402
        %3451 = vmatprep.subr.mxu0 0.0
        %3452 = vmatpush1.msra.mxu0 %v3404
        %3453 = vmatprep.subr.mxu0 0.0
        %3454 = vmatpush1.msra.mxu0 %v3406
        %3455 = vmatprep.subr.mxu0 0.0
        %3456 = vmatpush1.msra.mxu0 0.0
        %3457 = vmatprep.subr.mxu0 0.0
        %3458 = vmatpush1.msra.mxu0 0.0
        %3459 = vmatprep.subr.mxu0 0.0
        %3460 = vmatpush1.msra.mxu0 0.0
        %3461 = vmatprep.subr.mxu0 0.0
        %3462 = vmatpush1.msra.mxu0 0.0
        %3463 = vmatprep.subr.mxu0 0.0
        %3464 = vmatpush1.msra.mxu0 0.0
        %3465 = vmatprep.subr.mxu0 0.0
        %3466 = vmatpush1.msra.mxu0 0.0
        %3467 = vmatprep.subr.mxu0 0.0
        %3468 = vmatpush1.msra.mxu0 0.0
        %3469 = vmatprep.subr.mxu0 0.0
        %3470 = vmatpush1.msra.mxu0 0.0
        %3471 = vmatprep.subr.mxu0 0.0
        %3472 = vmatpush1.msra.mxu0 0.0
        %3473 = vmatprep.subr.mxu0 0.0
        %3474 = vmatpush1.msra.mxu0 0.0
        %3475 = vmatprep.subr.mxu0 0.0
        %3476 = vmatpush1.msra.mxu0 0.0
        %3477 = vmatprep.subr.mxu0 0.0
        %3478 = vmatpush1.msra.mxu0 0.0
        %3479 = vmatprep.subr.mxu0 0.0
        %3480 = vmatpush1.msra.mxu0 0.0
        %3481 = vmatprep.subr.mxu0 0.0
        %3482 = vmatpush1.msra.mxu0 0.0
        %3483 = vmatprep.subr.mxu0 0.0
        %3484 = vmatpush1.msra.mxu0 0.0
        %3485 = vmatprep.subr.mxu0 0.0
        %3486 = vmatpush1.msra.mxu0 0.0
        %3487 = vmatprep.subr.mxu0 0.0
        %3488 = vmatpush1.msra.mxu0 0.0
        %3489 = vmatprep.subr.mxu0 0.0
        %3490 = vmatpush1.msra.mxu0 0.0
        %3491 = vmatprep.subr.mxu0 0.0
        %3492 = vmatpush1.msra.mxu0 0.0
        %3493 = vmatprep.subr.mxu0 0.0
        %3494 = vmatpush1.msra.mxu0 0.0
        %3495 = vmatprep.subr.mxu0 0.0
        %3496 = vmatpush1.msra.mxu0 0.0
        %3497 = vmatprep.subr.mxu0 0.0
        %3498 = vmatpush1.msra.mxu0 0.0
        %3499 = vmatprep.subr.mxu0 0.0
        %3500 = vmatpush1.msra.mxu0 0.0
        %3501 = vmatprep.subr.mxu0 0.0
        %3502 = vmatpush1.msra.mxu0 0.0
        %3503 = vmatprep.mubr.f32.mxu0 0.0
        %3504 = vmatmul.mubr.f32.gmra.mrb[0].mxu0 %v3416
        %v3505 = vpop.f32.mrb[0].mxu0
        %v3506 = vadd.f32 0.0, %v3505
        %v3507 = vpop.f32.mrb[0].mxu0
        %3508 = vmatprep.mubr.f32.mxu0 0.0
        %3509 = vmatmul.mubr.f32.gmra.mrb[0].mxu0 %v3419
        %v3510 = vpop.f32.mrb[0].mxu0
        %v3511 = vadd.f32 0.0, %v3510
        %v3512 = vpop.f32.mrb[0].mxu0
        %3513 = vmatprep.mubr.f32.mxu0 0.0
        %3514 = vmatmul.mubr.f32.gmra.mrb[0].mxu0 %v3422
        %v3515 = vpop.f32.mrb[0].mxu0
        %v3516 = vadd.f32 0.0, %v3515
        %v3517 = vpop.f32.mrb[0].mxu0
        %3518 = vmatprep.mubr.f32.mxu0 0.0
        %3519 = vmatmul.mubr.f32.gmra.mrb[0].mxu0 %v3425
        %v3520 = vpop.f32.mrb[0].mxu0
        %v3521 = vadd.f32 0.0, %v3520
        %v3522 = vpop.f32.mrb[0].mxu0
        %3523 = vmatprep.mubr.f32.mxu0 0.0
        %3524 = vmatmul.mubr.f32.gmra.mrb[0].mxu0 %v3428
        %v3525 = vpop.f32.mrb[0].mxu0
        %v3526 = vadd.f32 0.0, %v3525
        %v3527 = vpop.f32.mrb[0].mxu0
        %3528 = vmatprep.mubr.f32.mxu0 0.0
        %3529 = vmatmul.mubr.f32.gmra.mrb[0].mxu0 %v3431
        %v3530 = vpop.f32.mrb[0].mxu0
        %v3531 = vadd.f32 0.0, %v3530
        %v3532 = vpop.f32.mrb[0].mxu0
        %3533 = vmatprep.mubr.f32.mxu0 0.0
        %3534 = vmatmul.mubr.f32.gmra.mrb[0].mxu0 %v3434
        %v3535 = vpop.f32.mrb[0].mxu0
        %v3536 = vadd.f32 0.0, %v3535
        %v3537 = vpop.f32.mrb[0].mxu0
        %3538 = vmatprep.mubr.f32.mxu0 0.0
        %3539 = vmatmul.mubr.f32.gmra.mrb[0].mxu0 %v3437
        %v3540 = vpop.f32.mrb[0].mxu0
        %v3541 = vadd.f32 0.0, %v3540
        %v3542 = vpop.f32.mrb[0].mxu0
        %3543 = vdwg.mxu0
        %3544 = vrot.lane.b32.xlu0 %v706, 64
        %v3545 = vpop.permute.xlu0 %3544
        %3546 = vrot.lane.b32.xlu0 %v708, 64
        %v3547 = vpop.permute.xlu0 %3546
        %3548 = vrot.lane.b32.xlu0 %v710, 64
        %v3549 = vpop.permute.xlu0 %3548
        %3550 = vrot.lane.b32.xlu0 %v712, 64
        %v3551 = vpop.permute.xlu0 %3550
        %3552 = vrot.lane.b32.xlu0 %v714, 64
        %v3553 = vpop.permute.xlu0 %3552
        %3554 = vrot.lane.b32.xlu0 %v716, 64
        %v3555 = vpop.permute.xlu0 %3554
        %3556 = vrot.lane.b32.xlu0 %v718, 64
        %v3557 = vpop.permute.xlu0 %3556
        %3558 = vrot.lane.b32.xlu0 %v720, 64
        %v3559 = vpop.permute.xlu0 %3558
        %v3569 = vsel %vm2074, %v2755, 0
        %v3572 = vsel %vm2074, %v2756, 0
        %v3575 = vsel %vm2074, %v2757, 0
        %v3578 = vsel %vm2074, %v2758, 0
        %v3581 = vsel %vm2074, %v2759, 0
        %v3584 = vsel %vm2074, %v2760, 0
        %v3587 = vsel %vm2074, %v2761, 0
        %v3590 = vsel %vm2074, %v2762, 0
        %3592 = vmatprep.subr.mxu0 0.0
        %3593 = vmatpush1.msra.mxu0 %v3545
        %3594 = vmatprep.subr.mxu0 0.0
        %3595 = vmatpush1.msra.mxu0 %v3547
        %3596 = vmatprep.subr.mxu0 0.0
        %3597 = vmatpush1.msra.mxu0 %v3549
        %3598 = vmatprep.subr.mxu0 0.0
        %3599 = vmatpush1.msra.mxu0 %v3551
        %3600 = vmatprep.subr.mxu0 0.0
        %3601 = vmatpush1.msra.mxu0 %v3553
        %3602 = vmatprep.subr.mxu0 0.0
        %3603 = vmatpush1.msra.mxu0 %v3555
        %3604 = vmatprep.subr.mxu0 0.0
        %3605 = vmatpush1.msra.mxu0 %v3557
        %3606 = vmatprep.subr.mxu0 0.0
        %3607 = vmatpush1.msra.mxu0 %v3559
        %3608 = vmatprep.subr.mxu0 0.0
        %3609 = vmatpush1.msra.mxu0 0.0
        %3610 = vmatprep.subr.mxu0 0.0
        %3611 = vmatpush1.msra.mxu0 0.0
        %3612 = vmatprep.subr.mxu0 0.0
        %3613 = vmatpush1.msra.mxu0 0.0
        %3614 = vmatprep.subr.mxu0 0.0
        %3615 = vmatpush1.msra.mxu0 0.0
        %3616 = vmatprep.subr.mxu0 0.0
        %3617 = vmatpush1.msra.mxu0 0.0
        %3618 = vmatprep.subr.mxu0 0.0
        %3619 = vmatpush1.msra.mxu0 0.0
        %3620 = vmatprep.subr.mxu0 0.0
        %3621 = vmatpush1.msra.mxu0 0.0
        %3622 = vmatprep.subr.mxu0 0.0
        %3623 = vmatpush1.msra.mxu0 0.0
        %3624 = vmatprep.subr.mxu0 0.0
        %3625 = vmatpush1.msra.mxu0 0.0
        %3626 = vmatprep.subr.mxu0 0.0
        %3627 = vmatpush1.msra.mxu0 0.0
        %3628 = vmatprep.subr.mxu0 0.0
        %3629 = vmatpush1.msra.mxu0 0.0
        %3630 = vmatprep.subr.mxu0 0.0
        %3631 = vmatpush1.msra.mxu0 0.0
        %3632 = vmatprep.subr.mxu0 0.0
        %3633 = vmatpush1.msra.mxu0 0.0
        %3634 = vmatprep.subr.mxu0 0.0
        %3635 = vmatpush1.msra.mxu0 0.0
        %3636 = vmatprep.subr.mxu0 0.0
        %3637 = vmatpush1.msra.mxu0 0.0
        %3638 = vmatprep.subr.mxu0 0.0
        %3639 = vmatpush1.msra.mxu0 0.0
        %3640 = vmatprep.subr.mxu0 0.0
        %3641 = vmatpush1.msra.mxu0 0.0
        %3642 = vmatprep.subr.mxu0 0.0
        %3643 = vmatpush1.msra.mxu0 0.0
        %3644 = vmatprep.subr.mxu0 0.0
        %3645 = vmatpush1.msra.mxu0 0.0
        %3646 = vmatprep.subr.mxu0 0.0
        %3647 = vmatpush1.msra.mxu0 0.0
        %3648 = vmatprep.subr.mxu0 0.0
        %3649 = vmatpush1.msra.mxu0 0.0
        %3650 = vmatprep.subr.mxu0 0.0
        %3651 = vmatpush1.msra.mxu0 0.0
        %3652 = vmatprep.subr.mxu0 0.0
        %3653 = vmatpush1.msra.mxu0 0.0
        %3654 = vmatprep.subr.mxu0 0.0
        %3655 = vmatpush1.msra.mxu0 0.0
        %3656 = vmatprep.mubr.f32.mxu0 0.0
        %3657 = vmatmul.mubr.f32.gmra.mrb[0].mxu0 %v3569
        %v3658 = vpop.f32.mrb[0].mxu0
        %v3659 = vadd.f32 0.0, %v3658
        %v3660 = vpop.f32.mrb[0].mxu0
        %3661 = vmatprep.mubr.f32.mxu0 0.0
        %3662 = vmatmul.mubr.f32.gmra.mrb[0].mxu0 %v3572
        %v3663 = vpop.f32.mrb[0].mxu0
        %v3664 = vadd.f32 0.0, %v3663
        %v3665 = vpop.f32.mrb[0].mxu0
        %3666 = vmatprep.mubr.f32.mxu0 0.0
        %3667 = vmatmul.mubr.f32.gmra.mrb[0].mxu0 %v3575
        %v3668 = vpop.f32.mrb[0].mxu0
        %v3669 = vadd.f32 0.0, %v3668
        %v3670 = vpop.f32.mrb[0].mxu0
        %3671 = vmatprep.mubr.f32.mxu0 0.0
        %3672 = vmatmul.mubr.f32.gmra.mrb[0].mxu0 %v3578
        %v3673 = vpop.f32.mrb[0].mxu0
        %v3674 = vadd.f32 0.0, %v3673
        %v3675 = vpop.f32.mrb[0].mxu0
        %3676 = vmatprep.mubr.f32.mxu0 0.0
        %3677 = vmatmul.mubr.f32.gmra.mrb[0].mxu0 %v3581
        %v3678 = vpop.f32.mrb[0].mxu0
        %v3679 = vadd.f32 0.0, %v3678
        %v3680 = vpop.f32.mrb[0].mxu0
        %3681 = vmatprep.mubr.f32.mxu0 0.0
        %3682 = vmatmul.mubr.f32.gmra.mrb[0].mxu0 %v3584
        %v3683 = vpop.f32.mrb[0].mxu0
        %v3684 = vadd.f32 0.0, %v3683
        %v3685 = vpop.f32.mrb[0].mxu0
        %3686 = vmatprep.mubr.f32.mxu0 0.0
        %3687 = vmatmul.mubr.f32.gmra.mrb[0].mxu0 %v3587
        %v3688 = vpop.f32.mrb[0].mxu0
        %v3689 = vadd.f32 0.0, %v3688
        %v3690 = vpop.f32.mrb[0].mxu0
        %3691 = vmatprep.mubr.f32.mxu0 0.0
        %3692 = vmatmul.mubr.f32.gmra.mrb[0].mxu0 %v3590
        %v3693 = vpop.f32.mrb[0].mxu0
        %v3694 = vadd.f32 0.0, %v3693
        %v3695 = vpop.f32.mrb[0].mxu0
        %3696 = vdwg.mxu0
        %3697 = vrot.lane.b32.xlu0 %v722, 64
        %v3698 = vpop.permute.xlu0 %3697
        %3699 = vrot.lane.b32.xlu0 %v724, 64
        %v3700 = vpop.permute.xlu0 %3699
        %3701 = vrot.lane.b32.xlu0 %v726, 64
        %v3702 = vpop.permute.xlu0 %3701
        %3703 = vrot.lane.b32.xlu0 %v728, 64
        %v3704 = vpop.permute.xlu0 %3703
        %3705 = vrot.lane.b32.xlu0 %v730, 64
        %v3706 = vpop.permute.xlu0 %3705
        %3707 = vrot.lane.b32.xlu0 %v732, 64
        %v3708 = vpop.permute.xlu0 %3707
        %3709 = vrot.lane.b32.xlu0 %v734, 64
        %v3710 = vpop.permute.xlu0 %3709
        %3711 = vrot.lane.b32.xlu0 %v736, 64
        %v3712 = vpop.permute.xlu0 %3711
        %v3722 = vsel %vm2074, %v2763, 0
        %v3725 = vsel %vm2074, %v2764, 0
        %v3728 = vsel %vm2074, %v2765, 0
        %v3731 = vsel %vm2074, %v2766, 0
        %v3734 = vsel %vm2074, %v2767, 0
        %v3737 = vsel %vm2074, %v2768, 0
        %v3740 = vsel %vm2074, %v2769, 0
        %v3743 = vsel %vm2074, %v2770, 0
        %3745 = vmatprep.subr.mxu0 0.0
        %3746 = vmatpush1.msra.mxu0 %v3698
        %3747 = vmatprep.subr.mxu0 0.0
        %3748 = vmatpush1.msra.mxu0 %v3700
        %3749 = vmatprep.subr.mxu0 0.0
        %3750 = vmatpush1.msra.mxu0 %v3702
        %3751 = vmatprep.subr.mxu0 0.0
        %3752 = vmatpush1.msra.mxu0 %v3704
        %3753 = vmatprep.subr.mxu0 0.0
        %3754 = vmatpush1.msra.mxu0 %v3706
        %3755 = vmatprep.subr.mxu0 0.0
        %3756 = vmatpush1.msra.mxu0 %v3708
        %3757 = vmatprep.subr.mxu0 0.0
        %3758 = vmatpush1.msra.mxu0 %v3710
        %3759 = vmatprep.subr.mxu0 0.0
        %3760 = vmatpush1.msra.mxu0 %v3712
        %3761 = vmatprep.subr.mxu0 0.0
        %3762 = vmatpush1.msra.mxu0 0.0
        %3763 = vmatprep.subr.mxu0 0.0
        %3764 = vmatpush1.msra.mxu0 0.0
        %3765 = vmatprep.subr.mxu0 0.0
        %3766 = vmatpush1.msra.mxu0 0.0
        %3767 = vmatprep.subr.mxu0 0.0
        %3768 = vmatpush1.msra.mxu0 0.0
        %3769 = vmatprep.subr.mxu0 0.0
        %3770 = vmatpush1.msra.mxu0 0.0
        %3771 = vmatprep.subr.mxu0 0.0
        %3772 = vmatpush1.msra.mxu0 0.0
        %3773 = vmatprep.subr.mxu0 0.0
        %3774 = vmatpush1.msra.mxu0 0.0
        %3775 = vmatprep.subr.mxu0 0.0
        %3776 = vmatpush1.msra.mxu0 0.0
        %3777 = vmatprep.subr.mxu0 0.0
        %3778 = vmatpush1.msra.mxu0 0.0
        %3779 = vmatprep.subr.mxu0 0.0
        %3780 = vmatpush1.msra.mxu0 0.0
        %3781 = vmatprep.subr.mxu0 0.0
        %3782 = vmatpush1.msra.mxu0 0.0
        %3783 = vmatprep.subr.mxu0 0.0
        %3784 = vmatpush1.msra.mxu0 0.0
        %3785 = vmatprep.subr.mxu0 0.0
        %3786 = vmatpush1.msra.mxu0 0.0
        %3787 = vmatprep.subr.mxu0 0.0
        %3788 = vmatpush1.msra.mxu0 0.0
        %3789 = vmatprep.subr.mxu0 0.0
        %3790 = vmatpush1.msra.mxu0 0.0
        %3791 = vmatprep.subr.mxu0 0.0
        %3792 = vmatpush1.msra.mxu0 0.0
        %3793 = vmatprep.subr.mxu0 0.0
        %3794 = vmatpush1.msra.mxu0 0.0
        %3795 = vmatprep.subr.mxu0 0.0
        %3796 = vmatpush1.msra.mxu0 0.0
        %3797 = vmatprep.subr.mxu0 0.0
        %3798 = vmatpush1.msra.mxu0 0.0
        %3799 = vmatprep.subr.mxu0 0.0
        %3800 = vmatpush1.msra.mxu0 0.0
        %3801 = vmatprep.subr.mxu0 0.0
        %3802 = vmatpush1.msra.mxu0 0.0
        %3803 = vmatprep.subr.mxu0 0.0
        %3804 = vmatpush1.msra.mxu0 0.0
        %3805 = vmatprep.subr.mxu0 0.0
        %3806 = vmatpush1.msra.mxu0 0.0
        %3807 = vmatprep.subr.mxu0 0.0
        %3808 = vmatpush1.msra.mxu0 0.0
        %3809 = vmatprep.mubr.f32.mxu0 0.0
        %3810 = vmatmul.mubr.f32.gmra.mrb[0].mxu0 %v3722
        %v3811 = vpop.f32.mrb[0].mxu0
        %v3812 = vadd.f32 0.0, %v3811
        %v3813 = vpop.f32.mrb[0].mxu0
        %3814 = vmatprep.mubr.f32.mxu0 0.0
        %3815 = vmatmul.mubr.f32.gmra.mrb[0].mxu0 %v3725
        %v3816 = vpop.f32.mrb[0].mxu0
        %v3817 = vadd.f32 0.0, %v3816
        %v3818 = vpop.f32.mrb[0].mxu0
        %3819 = vmatprep.mubr.f32.mxu0 0.0
        %3820 = vmatmul.mubr.f32.gmra.mrb[0].mxu0 %v3728
        %v3821 = vpop.f32.mrb[0].mxu0
        %v3822 = vadd.f32 0.0, %v3821
        %v3823 = vpop.f32.mrb[0].mxu0
        %3824 = vmatprep.mubr.f32.mxu0 0.0
        %3825 = vmatmul.mubr.f32.gmra.mrb[0].mxu0 %v3731
        %v3826 = vpop.f32.mrb[0].mxu0
        %v3827 = vadd.f32 0.0, %v3826
        %v3828 = vpop.f32.mrb[0].mxu0
        %3829 = vmatprep.mubr.f32.mxu0 0.0
        %3830 = vmatmul.mubr.f32.gmra.mrb[0].mxu0 %v3734
        %v3831 = vpop.f32.mrb[0].mxu0
        %v3832 = vadd.f32 0.0, %v3831
        %v3833 = vpop.f32.mrb[0].mxu0
        %3834 = vmatprep.mubr.f32.mxu0 0.0
        %3835 = vmatmul.mubr.f32.gmra.mrb[0].mxu0 %v3737
        %v3836 = vpop.f32.mrb[0].mxu0
        %v3837 = vadd.f32 0.0, %v3836
        %v3838 = vpop.f32.mrb[0].mxu0
        %3839 = vmatprep.mubr.f32.mxu0 0.0
        %3840 = vmatmul.mubr.f32.gmra.mrb[0].mxu0 %v3740
        %v3841 = vpop.f32.mrb[0].mxu0
        %v3842 = vadd.f32 0.0, %v3841
        %v3843 = vpop.f32.mrb[0].mxu0
        %3844 = vmatprep.mubr.f32.mxu0 0.0
        %3845 = vmatmul.mubr.f32.gmra.mrb[0].mxu0 %v3743
        %v3846 = vpop.f32.mrb[0].mxu0
        %v3847 = vadd.f32 0.0, %v3846
        %v3848 = vpop.f32.mrb[0].mxu0
        %3849 = vdwg.mxu0
        %3850 = vrot.lane.b32.xlu0 %v738, 64
        %v3851 = vpop.permute.xlu0 %3850
        %3852 = vrot.lane.b32.xlu0 %v740, 64
        %v3853 = vpop.permute.xlu0 %3852
        %3854 = vrot.lane.b32.xlu0 %v742, 64
        %v3855 = vpop.permute.xlu0 %3854
        %3856 = vrot.lane.b32.xlu0 %v744, 64
        %v3857 = vpop.permute.xlu0 %3856
        %3858 = vrot.lane.b32.xlu0 %v746, 64
        %v3859 = vpop.permute.xlu0 %3858
        %3860 = vrot.lane.b32.xlu0 %v748, 64
        %v3861 = vpop.permute.xlu0 %3860
        %3862 = vrot.lane.b32.xlu0 %v750, 64
        %v3863 = vpop.permute.xlu0 %3862
        %3864 = vrot.lane.b32.xlu0 %v752, 64
        %v3865 = vpop.permute.xlu0 %3864
        %v3875 = vsel %vm2074, %v2771, 0
        %v3878 = vsel %vm2074, %v2772, 0
        %v3881 = vsel %vm2074, %v2773, 0
        %v3884 = vsel %vm2074, %v2774, 0
        %v3887 = vsel %vm2074, %v2775, 0
        %v3890 = vsel %vm2074, %v2776, 0
        %v3893 = vsel %vm2074, %v2777, 0
        %v3896 = vsel %vm2074, %v2778, 0
        %3898 = vmatprep.subr.mxu0 0.0
        %3899 = vmatpush1.msra.mxu0 %v3851
        %3900 = vmatprep.subr.mxu0 0.0
        %3901 = vmatpush1.msra.mxu0 %v3853
        %3902 = vmatprep.subr.mxu0 0.0
        %3903 = vmatpush1.msra.mxu0 %v3855
        %3904 = vmatprep.subr.mxu0 0.0
        %3905 = vmatpush1.msra.mxu0 %v3857
        %3906 = vmatprep.subr.mxu0 0.0
        %3907 = vmatpush1.msra.mxu0 %v3859
        %3908 = vmatprep.subr.mxu0 0.0
        %3909 = vmatpush1.msra.mxu0 %v3861
        %3910 = vmatprep.subr.mxu0 0.0
        %3911 = vmatpush1.msra.mxu0 %v3863
        %3912 = vmatprep.subr.mxu0 0.0
        %3913 = vmatpush1.msra.mxu0 %v3865
        %3914 = vmatprep.subr.mxu0 0.0
        %3915 = vmatpush1.msra.mxu0 0.0
        %3916 = vmatprep.subr.mxu0 0.0
        %3917 = vmatpush1.msra.mxu0 0.0
        %3918 = vmatprep.subr.mxu0 0.0
        %3919 = vmatpush1.msra.mxu0 0.0
        %3920 = vmatprep.subr.mxu0 0.0
        %3921 = vmatpush1.msra.mxu0 0.0
        %3922 = vmatprep.subr.mxu0 0.0
        %3923 = vmatpush1.msra.mxu0 0.0
        %3924 = vmatprep.subr.mxu0 0.0
        %3925 = vmatpush1.msra.mxu0 0.0
        %3926 = vmatprep.subr.mxu0 0.0
        %3927 = vmatpush1.msra.mxu0 0.0
        %3928 = vmatprep.subr.mxu0 0.0
        %3929 = vmatpush1.msra.mxu0 0.0
        %3930 = vmatprep.subr.mxu0 0.0
        %3931 = vmatpush1.msra.mxu0 0.0
        %3932 = vmatprep.subr.mxu0 0.0
        %3933 = vmatpush1.msra.mxu0 0.0
        %3934 = vmatprep.subr.mxu0 0.0
        %3935 = vmatpush1.msra.mxu0 0.0
        %3936 = vmatprep.subr.mxu0 0.0
        %3937 = vmatpush1.msra.mxu0 0.0
        %3938 = vmatprep.subr.mxu0 0.0
        %3939 = vmatpush1.msra.mxu0 0.0
        %3940 = vmatprep.subr.mxu0 0.0
        %3941 = vmatpush1.msra.mxu0 0.0
        %3942 = vmatprep.subr.mxu0 0.0
        %3943 = vmatpush1.msra.mxu0 0.0
        %3944 = vmatprep.subr.mxu0 0.0
        %3945 = vmatpush1.msra.mxu0 0.0
        %3946 = vmatprep.subr.mxu0 0.0
        %3947 = vmatpush1.msra.mxu0 0.0
        %3948 = vmatprep.subr.mxu0 0.0
        %3949 = vmatpush1.msra.mxu0 0.0
        %3950 = vmatprep.subr.mxu0 0.0
        %3951 = vmatpush1.msra.mxu0 0.0
        %3952 = vmatprep.subr.mxu0 0.0
        %3953 = vmatpush1.msra.mxu0 0.0
        %3954 = vmatprep.subr.mxu0 0.0
        %3955 = vmatpush1.msra.mxu0 0.0
        %3956 = vmatprep.subr.mxu0 0.0
        %3957 = vmatpush1.msra.mxu0 0.0
        %3958 = vmatprep.subr.mxu0 0.0
        %3959 = vmatpush1.msra.mxu0 0.0
        %3960 = vmatprep.subr.mxu0 0.0
        %3961 = vmatpush1.msra.mxu0 0.0
        %3962 = vmatprep.mubr.f32.mxu0 0.0
        %3963 = vmatmul.mubr.f32.gmra.mrb[0].mxu0 %v3875
        %v3964 = vpop.f32.mrb[0].mxu0
        %v3965 = vadd.f32 0.0, %v3964
        %v3966 = vpop.f32.mrb[0].mxu0
        %3967 = vmatprep.mubr.f32.mxu0 0.0
        %3968 = vmatmul.mubr.f32.gmra.mrb[0].mxu0 %v3878
        %v3969 = vpop.f32.mrb[0].mxu0
        %v3970 = vadd.f32 0.0, %v3969
        %v3971 = vpop.f32.mrb[0].mxu0
        %3972 = vmatprep.mubr.f32.mxu0 0.0
        %3973 = vmatmul.mubr.f32.gmra.mrb[0].mxu0 %v3881
        %v3974 = vpop.f32.mrb[0].mxu0
        %v3975 = vadd.f32 0.0, %v3974
        %v3976 = vpop.f32.mrb[0].mxu0
        %3977 = vmatprep.mubr.f32.mxu0 0.0
        %3978 = vmatmul.mubr.f32.gmra.mrb[0].mxu0 %v3884
        %v3979 = vpop.f32.mrb[0].mxu0
        %v3980 = vadd.f32 0.0, %v3979
        %v3981 = vpop.f32.mrb[0].mxu0
        %3982 = vmatprep.mubr.f32.mxu0 0.0
        %3983 = vmatmul.mubr.f32.gmra.mrb[0].mxu0 %v3887
        %v3984 = vpop.f32.mrb[0].mxu0
        %v3985 = vadd.f32 0.0, %v3984
        %v3986 = vpop.f32.mrb[0].mxu0
        %3987 = vmatprep.mubr.f32.mxu0 0.0
        %3988 = vmatmul.mubr.f32.gmra.mrb[0].mxu0 %v3890
        %v3989 = vpop.f32.mrb[0].mxu0
        %v3990 = vadd.f32 0.0, %v3989
        %v3991 = vpop.f32.mrb[0].mxu0
        %3992 = vmatprep.mubr.f32.mxu0 0.0
        %3993 = vmatmul.mubr.f32.gmra.mrb[0].mxu0 %v3893
        %v3994 = vpop.f32.mrb[0].mxu0
        %v3995 = vadd.f32 0.0, %v3994
        %v3996 = vpop.f32.mrb[0].mxu0
        %3997 = vmatprep.mubr.f32.mxu0 0.0
        %3998 = vmatmul.mubr.f32.gmra.mrb[0].mxu0 %v3896
        %v3999 = vpop.f32.mrb[0].mxu0
        %v4000 = vadd.f32 0.0, %v3999
        %v4001 = vpop.f32.mrb[0].mxu0
        %4002 = vdwg.mxu0
        %4019 = vrot.lane.b32.xlu0 %v3200, 8
        %v4020 = vpop.permute.xlu0 %4019
        %4021 = vrot.lane.b32.xlu0 %v3205, 8
        %v4022 = vpop.permute.xlu0 %4021
        %4023 = vrot.lane.b32.xlu0 %v3210, 8
        %v4024 = vpop.permute.xlu0 %4023
        %4025 = vrot.lane.b32.xlu0 %v3215, 8
        %v4026 = vpop.permute.xlu0 %4025
        %4027 = vrot.lane.b32.xlu0 %v3220, 8
        %v4028 = vpop.permute.xlu0 %4027
        %4029 = vrot.lane.b32.xlu0 %v3225, 8
        %v4030 = vpop.permute.xlu0 %4029
        %4031 = vrot.lane.b32.xlu0 %v3230, 8
        %v4032 = vpop.permute.xlu0 %4031
        %4033 = vrot.lane.b32.xlu0 %v3235, 8
        %v4034 = vpop.permute.xlu0 %4033
        %4035 = vrot.lane.b32.xlu0 %v3353, 8
        %v4036 = vpop.permute.xlu0 %4035
        %4037 = vrot.lane.b32.xlu0 %v3358, 8
        %v4038 = vpop.permute.xlu0 %4037
        %4039 = vrot.lane.b32.xlu0 %v3363, 8
        %v4040 = vpop.permute.xlu0 %4039
        %4041 = vrot.lane.b32.xlu0 %v3368, 8
        %v4042 = vpop.permute.xlu0 %4041
        %4043 = vrot.lane.b32.xlu0 %v3373, 8
        %v4044 = vpop.permute.xlu0 %4043
        %4045 = vrot.lane.b32.xlu0 %v3378, 8
        %v4046 = vpop.permute.xlu0 %4045
        %4047 = vrot.lane.b32.xlu0 %v3383, 8
        %v4048 = vpop.permute.xlu0 %4047
        %4049 = vrot.lane.b32.xlu0 %v3388, 8
        %v4050 = vpop.permute.xlu0 %4049
        %4083 = vrot.lane.b32.xlu0 %v3506, 16
        %v4084 = vpop.permute.xlu0 %4083
        %4085 = vrot.lane.b32.xlu0 %v3511, 16
        %v4086 = vpop.permute.xlu0 %4085
        %4087 = vrot.lane.b32.xlu0 %v3516, 16
        %v4088 = vpop.permute.xlu0 %4087
        %4089 = vrot.lane.b32.xlu0 %v3521, 16
        %v4090 = vpop.permute.xlu0 %4089
        %4091 = vrot.lane.b32.xlu0 %v3526, 16
        %v4092 = vpop.permute.xlu0 %4091
        %4093 = vrot.lane.b32.xlu0 %v3531, 16
        %v4094 = vpop.permute.xlu0 %4093
        %4095 = vrot.lane.b32.xlu0 %v3536, 16
        %v4096 = vpop.permute.xlu0 %4095
        %4097 = vrot.lane.b32.xlu0 %v3541, 16
        %v4098 = vpop.permute.xlu0 %4097
        %4099 = vrot.lane.b32.xlu0 %v3659, 16
        %v4100 = vpop.permute.xlu0 %4099
        %4101 = vrot.lane.b32.xlu0 %v3664, 16
        %v4102 = vpop.permute.xlu0 %4101
        %4103 = vrot.lane.b32.xlu0 %v3669, 16
        %v4104 = vpop.permute.xlu0 %4103
        %4105 = vrot.lane.b32.xlu0 %v3674, 16
        %v4106 = vpop.permute.xlu0 %4105
        %4107 = vrot.lane.b32.xlu0 %v3679, 16
        %v4108 = vpop.permute.xlu0 %4107
        %4109 = vrot.lane.b32.xlu0 %v3684, 16
        %v4110 = vpop.permute.xlu0 %4109
        %4111 = vrot.lane.b32.xlu0 %v3689, 16
        %v4112 = vpop.permute.xlu0 %4111
        %4113 = vrot.lane.b32.xlu0 %v3694, 16
        %v4114 = vpop.permute.xlu0 %4113
        %4147 = vrot.lane.b32.xlu0 %v3812, 24
        %v4148 = vpop.permute.xlu0 %4147
        %4149 = vrot.lane.b32.xlu0 %v3817, 24
        %v4150 = vpop.permute.xlu0 %4149
        %4151 = vrot.lane.b32.xlu0 %v3822, 24
        %v4152 = vpop.permute.xlu0 %4151
        %4153 = vrot.lane.b32.xlu0 %v3827, 24
        %v4154 = vpop.permute.xlu0 %4153
        %4155 = vrot.lane.b32.xlu0 %v3832, 24
        %v4156 = vpop.permute.xlu0 %4155
        %4157 = vrot.lane.b32.xlu0 %v3837, 24
        %v4158 = vpop.permute.xlu0 %4157
        %4159 = vrot.lane.b32.xlu0 %v3842, 24
        %v4160 = vpop.permute.xlu0 %4159
        %4161 = vrot.lane.b32.xlu0 %v3847, 24
        %v4162 = vpop.permute.xlu0 %4161
        %4163 = vrot.lane.b32.xlu0 %v3965, 24
        %v4164 = vpop.permute.xlu0 %4163
        %4165 = vrot.lane.b32.xlu0 %v3970, 24
        %v4166 = vpop.permute.xlu0 %4165
        %4167 = vrot.lane.b32.xlu0 %v3975, 24
        %v4168 = vpop.permute.xlu0 %4167
        %4169 = vrot.lane.b32.xlu0 %v3980, 24
        %v4170 = vpop.permute.xlu0 %4169
        %4171 = vrot.lane.b32.xlu0 %v3985, 24
        %v4172 = vpop.permute.xlu0 %4171
        %4173 = vrot.lane.b32.xlu0 %v3990, 24
        %v4174 = vpop.permute.xlu0 %4173
        %4175 = vrot.lane.b32.xlu0 %v3995, 24
        %v4176 = vpop.permute.xlu0 %4175
        %4177 = vrot.lane.b32.xlu0 %v4000, 24
        %v4178 = vpop.permute.xlu0 %4177
        %v4195 = vsel %vm769, %v2894, %v4020
        %v4196 = vsel %vm769, %v2899, %v4022
        %v4197 = vsel %vm769, %v2904, %v4024
        %v4198 = vsel %vm769, %v2909, %v4026
        %v4199 = vsel %vm769, %v2914, %v4028
        %v4200 = vsel %vm769, %v2919, %v4030
        %v4201 = vsel %vm769, %v2924, %v4032
        %v4202 = vsel %vm769, %v2929, %v4034
        %v4203 = vsel %vm769, %v3047, %v4036
        %v4204 = vsel %vm769, %v3052, %v4038
        %v4205 = vsel %vm769, %v3057, %v4040
        %v4206 = vsel %vm769, %v3062, %v4042
        %v4207 = vsel %vm769, %v3067, %v4044
        %v4208 = vsel %vm769, %v3072, %v4046
        %v4209 = vsel %vm769, %v3077, %v4048
        %v4210 = vsel %vm769, %v3082, %v4050
        %vm4211 = vcmask 130048
        %v4212 = vsel %vm4211, %v4195, %v4084
        %v4213 = vsel %vm4211, %v4196, %v4086
        %v4214 = vsel %vm4211, %v4197, %v4088
        %v4215 = vsel %vm4211, %v4198, %v4090
        %v4216 = vsel %vm4211, %v4199, %v4092
        %v4217 = vsel %vm4211, %v4200, %v4094
        %v4218 = vsel %vm4211, %v4201, %v4096
        %v4219 = vsel %vm4211, %v4202, %v4098
        %v4220 = vsel %vm4211, %v4203, %v4100
        %v4221 = vsel %vm4211, %v4204, %v4102
        %v4222 = vsel %vm4211, %v4205, %v4104
        %v4223 = vsel %vm4211, %v4206, %v4106
        %v4224 = vsel %vm4211, %v4207, %v4108
        %v4225 = vsel %vm4211, %v4208, %v4110
        %v4226 = vsel %vm4211, %v4209, %v4112
        %v4227 = vsel %vm4211, %v4210, %v4114
        %vm4228 = vcmask 195584
        %v4229 = vsel %vm4228, %v4212, %v4148
        %v4230 = vsel %vm4228, %v4213, %v4150
        %v4231 = vsel %vm4228, %v4214, %v4152
        %v4232 = vsel %vm4228, %v4215, %v4154
        %v4233 = vsel %vm4228, %v4216, %v4156
        %v4234 = vsel %vm4228, %v4217, %v4158
        %v4235 = vsel %vm4228, %v4218, %v4160
        %v4236 = vsel %vm4228, %v4219, %v4162
        %v4237 = vsel %vm4228, %v4220, %v4164
        %v4238 = vsel %vm4228, %v4221, %v4166
        %v4239 = vsel %vm4228, %v4222, %v4168
        %v4240 = vsel %vm4228, %v4223, %v4170
        %v4241 = vsel %vm4228, %v4224, %v4172
        %v4242 = vsel %vm4228, %v4225, %v4174
        %v4243 = vsel %vm4228, %v4226, %v4176
        %v4244 = vsel %vm4228, %v4227, %v4178
        %v4245 = vld [vmem:[#allocation10] sm:$0xff]
        %v4246 = vld [vmem:[#allocation10 + $0x8] sm:$0xff]
        %v4247 = vld [vmem:[#allocation10 + $0x10] sm:$0xff]
        %v4248 = vld [vmem:[#allocation10 + $0x18] sm:$0xff]
        %v4249 = vld [vmem:[#allocation11] sm:$0xff]
        %v4250 = vld [vmem:[#allocation11 + $0x8] sm:$0xff]
        %v4251 = vld [vmem:[#allocation11 + $0x10] sm:$0xff]
        %v4252 = vld [vmem:[#allocation11 + $0x18] sm:$0xff]
        %4253 = vmatprep.subr.mxu0 0.0
        %4254 = vmatpush1.msra.mxu0 %v4249
        %4255 = vmatprep.subr.mxu0 0.0
        %4256 = vmatpush1.msra.mxu0 %v4250
        %4257 = vmatprep.subr.mxu0 0.0
        %4258 = vmatpush1.msra.mxu0 %v4251
        %4259 = vmatprep.subr.mxu0 0.0
        %4260 = vmatpush1.msra.mxu0 %v4252
        %4261 = vmatprep.subr.mxu0 0.0
        %4262 = vmatpush1.msra.mxu0 0.0
        %4263 = vmatprep.subr.mxu0 0.0
        %4264 = vmatpush1.msra.mxu0 0.0
        %4265 = vmatprep.subr.mxu0 0.0
        %4266 = vmatpush1.msra.mxu0 0.0
        %4267 = vmatprep.subr.mxu0 0.0
        %4268 = vmatpush1.msra.mxu0 0.0
        %4269 = vmatprep.subr.mxu0 0.0
        %4270 = vmatpush1.msra.mxu0 0.0
        %4271 = vmatprep.subr.mxu0 0.0
        %4272 = vmatpush1.msra.mxu0 0.0
        %4273 = vmatprep.subr.mxu0 0.0
        %4274 = vmatpush1.msra.mxu0 0.0
        %4275 = vmatprep.subr.mxu0 0.0
        %4276 = vmatpush1.msra.mxu0 0.0
        %4277 = vmatprep.subr.mxu0 0.0
        %4278 = vmatpush1.msra.mxu0 0.0
        %4279 = vmatprep.subr.mxu0 0.0
        %4280 = vmatpush1.msra.mxu0 0.0
        %4281 = vmatprep.subr.mxu0 0.0
        %4282 = vmatpush1.msra.mxu0 0.0
        %4283 = vmatprep.subr.mxu0 0.0
        %4284 = vmatpush1.msra.mxu0 0.0
        %4285 = vmatprep.subr.mxu0 0.0
        %4286 = vmatpush1.msra.mxu0 0.0
        %4287 = vmatprep.subr.mxu0 0.0
        %4288 = vmatpush1.msra.mxu0 0.0
        %4289 = vmatprep.subr.mxu0 0.0
        %4290 = vmatpush1.msra.mxu0 0.0
        %4291 = vmatprep.subr.mxu0 0.0
        %4292 = vmatpush1.msra.mxu0 0.0
        %4293 = vmatprep.subr.mxu0 0.0
        %4294 = vmatpush1.msra.mxu0 0.0
        %4295 = vmatprep.subr.mxu0 0.0
        %4296 = vmatpush1.msra.mxu0 0.0
        %4297 = vmatprep.subr.mxu0 0.0
        %4298 = vmatpush1.msra.mxu0 0.0
        %4299 = vmatprep.subr.mxu0 0.0
        %4300 = vmatpush1.msra.mxu0 0.0
        %4301 = vmatprep.subr.mxu0 0.0
        %4302 = vmatpush1.msra.mxu0 0.0
        %4303 = vmatprep.subr.mxu0 0.0
        %4304 = vmatpush1.msra.mxu0 0.0
        %4305 = vmatprep.subr.mxu0 0.0
        %4306 = vmatpush1.msra.mxu0 0.0
        %4307 = vmatprep.subr.mxu0 0.0
        %4308 = vmatpush1.msra.mxu0 0.0
        %4309 = vmatprep.subr.mxu0 0.0
        %4310 = vmatpush1.msra.mxu0 0.0
        %4311 = vmatprep.subr.mxu0 0.0
        %4312 = vmatpush1.msra.mxu0 0.0
        %4313 = vmatprep.subr.mxu0 0.0
        %4314 = vmatpush1.msra.mxu0 0.0
        %4315 = vmatprep.subr.mxu0 0.0
        %4316 = vmatpush1.msra.mxu0 0.0
        %4317 = vmatprep.mubr.f32.mxu0 0.0
        %4318 = vmatmul.mubr.f32.gmra.mrb[0].mxu0 %v425
        %v4319 = vpop.f32.mrb[0].mxu0
        %v4320 = vadd.f32 0.0, %v4319
        %v4321 = vpop.f32.mrb[0].mxu0
        %4322 = vmatprep.mubr.f32.mxu0 0.0
        %4323 = vmatmul.mubr.f32.gmra.mrb[0].mxu0 %v428
        %v4324 = vpop.f32.mrb[0].mxu0
        %v4325 = vadd.f32 0.0, %v4324
        %v4326 = vpop.f32.mrb[0].mxu0
        %4327 = vmatprep.mubr.f32.mxu0 0.0
        %4328 = vmatmul.mubr.f32.gmra.mrb[0].mxu0 %v431
        %v4329 = vpop.f32.mrb[0].mxu0
        %v4330 = vadd.f32 0.0, %v4329
        %v4331 = vpop.f32.mrb[0].mxu0
        %4332 = vmatprep.mubr.f32.mxu0 0.0
        %4333 = vmatmul.mubr.f32.gmra.mrb[0].mxu0 %v434
        %v4334 = vpop.f32.mrb[0].mxu0
        %v4335 = vadd.f32 0.0, %v4334
        %v4336 = vpop.f32.mrb[0].mxu0
        %4337 = vmatprep.mubr.f32.mxu0 0.0
        %4338 = vmatmul.mubr.f32.gmra.mrb[0].mxu0 %v437
        %v4339 = vpop.f32.mrb[0].mxu0
        %v4340 = vadd.f32 0.0, %v4339
        %v4341 = vpop.f32.mrb[0].mxu0
        %4342 = vmatprep.mubr.f32.mxu0 0.0
        %4343 = vmatmul.mubr.f32.gmra.mrb[0].mxu0 %v440
        %v4344 = vpop.f32.mrb[0].mxu0
        %v4345 = vadd.f32 0.0, %v4344
        %v4346 = vpop.f32.mrb[0].mxu0
        %4347 = vmatprep.mubr.f32.mxu0 0.0
        %4348 = vmatmul.mubr.f32.gmra.mrb[0].mxu0 %v443
        %v4349 = vpop.f32.mrb[0].mxu0
        %v4350 = vadd.f32 0.0, %v4349
        %v4351 = vpop.f32.mrb[0].mxu0
        %4352 = vmatprep.mubr.f32.mxu0 0.0
        %4353 = vmatmul.mubr.f32.gmra.mrb[0].mxu0 %v446
        %v4354 = vpop.f32.mrb[0].mxu0
        %v4355 = vadd.f32 0.0, %v4354
        %v4356 = vpop.f32.mrb[0].mxu0
        %4357 = vmatprep.mubr.f32.mxu0 0.0
        %4358 = vmatmul.mubr.f32.gmra.mrb[0].mxu0 %v449
        %v4359 = vpop.f32.mrb[0].mxu0
        %v4360 = vadd.f32 0.0, %v4359
        %v4361 = vpop.f32.mrb[0].mxu0
        %4362 = vmatprep.mubr.f32.mxu0 0.0
        %4363 = vmatmul.mubr.f32.gmra.mrb[0].mxu0 %v452
        %v4364 = vpop.f32.mrb[0].mxu0
        %v4365 = vadd.f32 0.0, %v4364
        %v4366 = vpop.f32.mrb[0].mxu0
        %4367 = vmatprep.mubr.f32.mxu0 0.0
        %4368 = vmatmul.mubr.f32.gmra.mrb[0].mxu0 %v455
        %v4369 = vpop.f32.mrb[0].mxu0
        %v4370 = vadd.f32 0.0, %v4369
        %v4371 = vpop.f32.mrb[0].mxu0
        %4372 = vmatprep.mubr.f32.mxu0 0.0
        %4373 = vmatmul.mubr.f32.gmra.mrb[0].mxu0 %v458
        %v4374 = vpop.f32.mrb[0].mxu0
        %v4375 = vadd.f32 0.0, %v4374
        %v4376 = vpop.f32.mrb[0].mxu0
        %4377 = vmatprep.mubr.f32.mxu0 0.0
        %4378 = vmatmul.mubr.f32.gmra.mrb[0].mxu0 %v461
        %v4379 = vpop.f32.mrb[0].mxu0
        %v4380 = vadd.f32 0.0, %v4379
        %v4381 = vpop.f32.mrb[0].mxu0
        %4382 = vmatprep.mubr.f32.mxu0 0.0
        %4383 = vmatmul.mubr.f32.gmra.mrb[0].mxu0 %v464
        %v4384 = vpop.f32.mrb[0].mxu0
        %v4385 = vadd.f32 0.0, %v4384
        %v4386 = vpop.f32.mrb[0].mxu0
        %4387 = vmatprep.mubr.f32.mxu0 0.0
        %4388 = vmatmul.mubr.f32.gmra.mrb[0].mxu0 %v467
        %v4389 = vpop.f32.mrb[0].mxu0
        %v4390 = vadd.f32 0.0, %v4389
        %v4391 = vpop.f32.mrb[0].mxu0
        %4392 = vmatprep.mubr.f32.mxu0 0.0
        %4393 = vmatmul.mubr.f32.gmra.mrb[0].mxu0 %v470
        %v4394 = vpop.f32.mrb[0].mxu0
        %v4395 = vadd.f32 0.0, %v4394
        %v4396 = vpop.f32.mrb[0].mxu0
        %4397 = vdwg.mxu0
        %v4399 = vsel %vm423, %v4229, 0
        %v4402 = vsel %vm423, %v4230, 0
        %v4405 = vsel %vm423, %v4231, 0
        %v4408 = vsel %vm423, %v4232, 0
        %v4411 = vsel %vm423, %v4233, 0
        %v4414 = vsel %vm423, %v4234, 0
        %v4417 = vsel %vm423, %v4235, 0
        %v4420 = vsel %vm423, %v4236, 0
        %v4423 = vsel %vm423, %v4237, 0
        %v4426 = vsel %vm423, %v4238, 0
        %v4429 = vsel %vm423, %v4239, 0
        %v4432 = vsel %vm423, %v4240, 0
        %v4435 = vsel %vm423, %v4241, 0
        %v4438 = vsel %vm423, %v4242, 0
        %v4441 = vsel %vm423, %v4243, 0
        %v4444 = vsel %vm423, %v4244, 0
        %4446 = vmatprep.subr.mxu0 0.0
        %4447 = vmatpush1.msra.mxu0 %v4245
        %4448 = vmatprep.subr.mxu0 0.0
        %4449 = vmatpush1.msra.mxu0 %v4246
        %4450 = vmatprep.subr.mxu0 0.0
        %4451 = vmatpush1.msra.mxu0 %v4247
        %4452 = vmatprep.subr.mxu0 0.0
        %4453 = vmatpush1.msra.mxu0 %v4248
        %4454 = vmatprep.subr.mxu0 0.0
        %4455 = vmatpush1.msra.mxu0 0.0
        %4456 = vmatprep.subr.mxu0 0.0
        %4457 = vmatpush1.msra.mxu0 0.0
        %4458 = vmatprep.subr.mxu0 0.0
        %4459 = vmatpush1.msra.mxu0 0.0
        %4460 = vmatprep.subr.mxu0 0.0
        %4461 = vmatpush1.msra.mxu0 0.0
        %4462 = vmatprep.subr.mxu0 0.0
        %4463 = vmatpush1.msra.mxu0 0.0
        %4464 = vmatprep.subr.mxu0 0.0
        %4465 = vmatpush1.msra.mxu0 0.0
        %4466 = vmatprep.subr.mxu0 0.0
        %4467 = vmatpush1.msra.mxu0 0.0
        %4468 = vmatprep.subr.mxu0 0.0
        %4469 = vmatpush1.msra.mxu0 0.0
        %4470 = vmatprep.subr.mxu0 0.0
        %4471 = vmatpush1.msra.mxu0 0.0
        %4472 = vmatprep.subr.mxu0 0.0
        %4473 = vmatpush1.msra.mxu0 0.0
        %4474 = vmatprep.subr.mxu0 0.0
        %4475 = vmatpush1.msra.mxu0 0.0
        %4476 = vmatprep.subr.mxu0 0.0
        %4477 = vmatpush1.msra.mxu0 0.0
        %4478 = vmatprep.subr.mxu0 0.0
        %4479 = vmatpush1.msra.mxu0 0.0
        %4480 = vmatprep.subr.mxu0 0.0
        %4481 = vmatpush1.msra.mxu0 0.0
        %4482 = vmatprep.subr.mxu0 0.0
        %4483 = vmatpush1.msra.mxu0 0.0
        %4484 = vmatprep.subr.mxu0 0.0
        %4485 = vmatpush1.msra.mxu0 0.0
        %4486 = vmatprep.subr.mxu0 0.0
        %4487 = vmatpush1.msra.mxu0 0.0
        %4488 = vmatprep.subr.mxu0 0.0
        %4489 = vmatpush1.msra.mxu0 0.0
        %4490 = vmatprep.subr.mxu0 0.0
        %4491 = vmatpush1.msra.mxu0 0.0
        %4492 = vmatprep.subr.mxu0 0.0
        %4493 = vmatpush1.msra.mxu0 0.0
        %4494 = vmatprep.subr.mxu0 0.0
        %4495 = vmatpush1.msra.mxu0 0.0
        %4496 = vmatprep.subr.mxu0 0.0
        %4497 = vmatpush1.msra.mxu0 0.0
        %4498 = vmatprep.subr.mxu0 0.0
        %4499 = vmatpush1.msra.mxu0 0.0
        %4500 = vmatprep.subr.mxu0 0.0
        %4501 = vmatpush1.msra.mxu0 0.0
        %4502 = vmatprep.subr.mxu0 0.0
        %4503 = vmatpush1.msra.mxu0 0.0
        %4504 = vmatprep.subr.mxu0 0.0
        %4505 = vmatpush1.msra.mxu0 0.0
        %4506 = vmatprep.subr.mxu0 0.0
        %4507 = vmatpush1.msra.mxu0 0.0
        %4508 = vmatprep.subr.mxu0 0.0
        %4509 = vmatpush1.msra.mxu0 0.0
        %4510 = vmatprep.mubr.f32.mxu0 0.0
        %4511 = vmatmul.mubr.f32.gmra.mrb[0].mxu0 %v4399
        %v4512 = vpop.f32.mrb[0].mxu0
        %v4513 = vadd.f32 %v4320, %v4512
        %v4514 = vpop.f32.mrb[0].mxu0
        %4515 = vmatprep.mubr.f32.mxu0 0.0
        %4516 = vmatmul.mubr.f32.gmra.mrb[0].mxu0 %v4402
        %v4517 = vpop.f32.mrb[0].mxu0
        %v4518 = vadd.f32 %v4325, %v4517
        %v4519 = vpop.f32.mrb[0].mxu0
        %4520 = vmatprep.mubr.f32.mxu0 0.0
        %4521 = vmatmul.mubr.f32.gmra.mrb[0].mxu0 %v4405
        %v4522 = vpop.f32.mrb[0].mxu0
        %v4523 = vadd.f32 %v4330, %v4522
        %v4524 = vpop.f32.mrb[0].mxu0
        %4525 = vmatprep.mubr.f32.mxu0 0.0
        %4526 = vmatmul.mubr.f32.gmra.mrb[0].mxu0 %v4408
        %v4527 = vpop.f32.mrb[0].mxu0
        %v4528 = vadd.f32 %v4335, %v4527
        %v4529 = vpop.f32.mrb[0].mxu0
        %4530 = vmatprep.mubr.f32.mxu0 0.0
        %4531 = vmatmul.mubr.f32.gmra.mrb[0].mxu0 %v4411
        %v4532 = vpop.f32.mrb[0].mxu0
        %v4533 = vadd.f32 %v4340, %v4532
        %v4534 = vpop.f32.mrb[0].mxu0
        %4535 = vmatprep.mubr.f32.mxu0 0.0
        %4536 = vmatmul.mubr.f32.gmra.mrb[0].mxu0 %v4414
        %v4537 = vpop.f32.mrb[0].mxu0
        %v4538 = vadd.f32 %v4345, %v4537
        %v4539 = vpop.f32.mrb[0].mxu0
        %4540 = vmatprep.mubr.f32.mxu0 0.0
        %4541 = vmatmul.mubr.f32.gmra.mrb[0].mxu0 %v4417
        %v4542 = vpop.f32.mrb[0].mxu0
        %v4543 = vadd.f32 %v4350, %v4542
        %v4544 = vpop.f32.mrb[0].mxu0
        %4545 = vmatprep.mubr.f32.mxu0 0.0
        %4546 = vmatmul.mubr.f32.gmra.mrb[0].mxu0 %v4420
        %v4547 = vpop.f32.mrb[0].mxu0
        %v4548 = vadd.f32 %v4355, %v4547
        %v4549 = vpop.f32.mrb[0].mxu0
        %4550 = vmatprep.mubr.f32.mxu0 0.0
        %4551 = vmatmul.mubr.f32.gmra.mrb[0].mxu0 %v4423
        %v4552 = vpop.f32.mrb[0].mxu0
        %v4553 = vadd.f32 %v4360, %v4552
        %v4554 = vpop.f32.mrb[0].mxu0
        %4555 = vmatprep.mubr.f32.mxu0 0.0
        %4556 = vmatmul.mubr.f32.gmra.mrb[0].mxu0 %v4426
        %v4557 = vpop.f32.mrb[0].mxu0
        %v4558 = vadd.f32 %v4365, %v4557
        %v4559 = vpop.f32.mrb[0].mxu0
        %4560 = vmatprep.mubr.f32.mxu0 0.0
        %4561 = vmatmul.mubr.f32.gmra.mrb[0].mxu0 %v4429
        %v4562 = vpop.f32.mrb[0].mxu0
        %v4563 = vadd.f32 %v4370, %v4562
        %v4564 = vpop.f32.mrb[0].mxu0
        %4565 = vmatprep.mubr.f32.mxu0 0.0
        %4566 = vmatmul.mubr.f32.gmra.mrb[0].mxu0 %v4432
        %v4567 = vpop.f32.mrb[0].mxu0
        %v4568 = vadd.f32 %v4375, %v4567
        %v4569 = vpop.f32.mrb[0].mxu0
        %4570 = vmatprep.mubr.f32.mxu0 0.0
        %4571 = vmatmul.mubr.f32.gmra.mrb[0].mxu0 %v4435
        %v4572 = vpop.f32.mrb[0].mxu0
        %v4573 = vadd.f32 %v4380, %v4572
        %v4574 = vpop.f32.mrb[0].mxu0
        %4575 = vmatprep.mubr.f32.mxu0 0.0
        %4576 = vmatmul.mubr.f32.gmra.mrb[0].mxu0 %v4438
        %v4577 = vpop.f32.mrb[0].mxu0
        %v4578 = vadd.f32 %v4385, %v4577
        %v4579 = vpop.f32.mrb[0].mxu0
        %4580 = vmatprep.mubr.f32.mxu0 0.0
        %4581 = vmatmul.mubr.f32.gmra.mrb[0].mxu0 %v4441
        %v4582 = vpop.f32.mrb[0].mxu0
        %v4583 = vadd.f32 %v4390, %v4582
        %v4584 = vpop.f32.mrb[0].mxu0
        %4585 = vmatprep.mubr.f32.mxu0 0.0
        %4586 = vmatmul.mubr.f32.gmra.mrb[0].mxu0 %v4444
        %v4587 = vpop.f32.mrb[0].mxu0
        %v4588 = vadd.f32 %v4395, %v4587
        %v4589 = vpop.f32.mrb[0].mxu0
        %4590 = vdwg.mxu0
        %v4591 = vld [vmem:[%s6] sm:$0x1]
        %v4593 = vlaneseq
        %v4594 = vshrl.u32 %v4593, 7
        %v4595 = vsub.s32 0, %v4594
        %v4596 = vrot.slane %v4591, %v4595
        %v4598 = vadd.f32 %v4513, %v4596
        %v4599 = vadd.f32 %v4518, %v4596
        %v4600 = vadd.f32 %v4523, %v4596
        %v4601 = vadd.f32 %v4528, %v4596
        %v4602 = vadd.f32 %v4533, %v4596
        %v4603 = vadd.f32 %v4538, %v4596
        %v4604 = vadd.f32 %v4543, %v4596
        %v4605 = vadd.f32 %v4548, %v4596
        %v4606 = vadd.f32 %v4553, %v4596
        %v4607 = vadd.f32 %v4558, %v4596
        %v4608 = vadd.f32 %v4563, %v4596
        %v4609 = vadd.f32 %v4568, %v4596
        %v4610 = vadd.f32 %v4573, %v4596
        %v4611 = vadd.f32 %v4578, %v4596
        %v4612 = vadd.f32 %v4583, %v4596
        %v4613 = vadd.f32 %v4588, %v4596
        %4614 = vst.msk [vmem:[%s400] sm:$0xff] %vm423, %v4598
        %4615 = vst.msk [vmem:[%s400 + $0x8] sm:$0xff] %vm423, %v4599
        %4616 = vst.msk [vmem:[%s400 + $0x10] sm:$0xff] %vm423, %v4600
        %4617 = vst.msk [vmem:[%s400 + $0x18] sm:$0xff] %vm423, %v4601
        %4618 = vst.msk [vmem:[%s400 + $0x20] sm:$0xff] %vm423, %v4602
        %4619 = vst.msk [vmem:[%s400 + $0x28] sm:$0xff] %vm423, %v4603
        %4620 = vst.msk [vmem:[%s400 + $0x30] sm:$0xff] %vm423, %v4604
        %4621 = vst.msk [vmem:[%s400 + $0x38] sm:$0xff] %vm423, %v4605
        %4622 = vst.msk [vmem:[%s400 + $0x40] sm:$0xff] %vm423, %v4606
        %4623 = vst.msk [vmem:[%s400 + $0x48] sm:$0xff] %vm423, %v4607
        %4624 = vst.msk [vmem:[%s400 + $0x50] sm:$0xff] %vm423, %v4608
        %4625 = vst.msk [vmem:[%s400 + $0x58] sm:$0xff] %vm423, %v4609
        %4626 = vst.msk [vmem:[%s400 + $0x60] sm:$0xff] %vm423, %v4610
        %4627 = vst.msk [vmem:[%s400 + $0x68] sm:$0xff] %vm423, %v4611
        %4628 = vst.msk [vmem:[%s400 + $0x70] sm:$0xff] %vm423, %v4612
        %4629 = vst.msk [vmem:[%s400 + $0x78] sm:$0xff] %vm423, %v4613
        %s4630 = sand.u32 %s214, 1
        %s4631 = scalar_lea.sflag [#allocation4], %s4630
        %s4632 = sand.u32 %s214, 1
        %s4633 = smul.addr %s4632, 128
        %s4634 = scalar_lea.vmem [#allocation13], %s4633
        // Predicated region
        $region73: #{tpu_custom_call.1} parent=47 // pred_check
          %p4635 = pneg %p224
        $region74: #{tpu_custom_call.1} parent=47 // pred_check_branch
          %4637 = sbr.rel (%p4635) target = $region76
        $region75: #{tpu_custom_call.1} parent=47 // pred_region
          %s4638 = smul.u32 16, %s33
          %s4640 = ssub.s32 2048, 2048
          %4641 = vsyncadd %s4631, %s4640
          %s4642 = smul.addr %s4638, 2
          %s4643 = sadd.s32 %s34, %s4642
          %s4644 = smul.addr %s32, 32
          %s4645 = sadd.s32 %s4643, %s4644
          %s4646 = smul.addr %s4645, 128
          %s4647 = scalar_lea.hbm %s7, %s4646
          %s4648 = sshll.u32 %s4634, 4
          %s4649 = int_to_ptr.vmem [resolvable:$true] %s4648
          %4654 = dma.vmem_to_hbm [thread:$0]  %s4649, 2048, %s4647, %s4631, 128, 256, 8
        $region76: #{tpu_custom_call.1} parent=47 // pred_fallthru
          _
      $region48: #{tpu_custom_call.1} parent=5 // pred_fallthru
        _
      %p4655 = scmp.le.s32.totalorder 2, %s22
      // Predicated region
      $region77: #{tpu_custom_call.1} parent=5 // pred_check
        %p4656 = pneg %p4655
      $region78: #{tpu_custom_call.1} parent=5 // pred_check_branch
        %4658 = sbr.rel (%p4656) target = $region80
      $region79: #{tpu_custom_call.1} parent=5 // pred_region
        %s4659 = ssub.s32 %s22, 2
        // Predicated region
        $region81: #{tpu_custom_call.1} parent=79 // pred_check
          %p4660 = pneg %p230
        $region82: #{tpu_custom_call.1} parent=79 // pred_check_branch
          %4662 = sbr.rel (%p4660) target = $region84
        $region83: #{tpu_custom_call.1} parent=79 // pred_region
          %s4663 = sand.u32 %s215, 1
          %s4664 = scalar_lea.sflag [#allocation4], %s4663
          %s4665 = sand.u32 %s215, 1
          %s4666 = smul.addr %s4665, 128
          %s4667 = scalar_lea.vmem [#allocation13], %s4666
          %4668 = dma.done %s4664, 2048
        $region84: #{tpu_custom_call.1} parent=79 // pred_fallthru
          _
      $region80: #{tpu_custom_call.1} parent=5 // pred_fallthru
        _
    $region6: #{tpu_custom_call.1} parent=1 // loop_footer
      %s26 = sadd.s32 1, %s22
    $region7: #{tpu_custom_call.1} parent=1 // loop_footer_branch
      %21 = sbr.rel target = $region3
    $region8: #{tpu_custom_call.1} parent=1 // loop_exit
      _
    %4669 = vsyncpa [#allocation3], 1
    %s4670 = scalar_lea.sflag [#allocation3], 1
    %4671 = vsyncpa %s4670, 1
    %4672 = vsyncpa [#allocation6], 1
    %4673 = vsyncpa [#allocation9], 1
    %4674 = vsyncpa [#allocation12], 1
    %4675 = vsyncpa [#allocation4], 1
    %s4676 = scalar_lea.sflag [#allocation4], 1
    %4677 = vsyncpa %s4676, 1

</llo_original>
